<compile_context>
chip_gen: v6e
topology: v6e:2x2x1
jax: 0.10.0
libtpu: 0.0.40
codegen_flags: <defaults>
</compile_context>

<pallas_src>
import jax
import jax.numpy as jnp
from jax.experimental import pallas as pl
from jax.experimental.pallas import tpu as pltpu

# ----------------------------------------------------------------------------
# Problem sizes
# ----------------------------------------------------------------------------
FEAT = 1000                       # backbone output features
H1 = 256                          # first hidden
H2 = 128                          # second hidden
HEAD_CLASSES = (2, 7, 6, 17, 20)  # classifier1..5 output sizes
NUM_HEADS = len(HEAD_CLASSES)

# Per-head column offsets inside the packed 128-wide output slab (sum = 52).
CLASS_OFFSETS = (0, 2, 9, 15, 32)

FEAT_PAD = 1024                   # 1000 -> 1024 (zero-padded rows in W1 too)
H1_CAT = NUM_HEADS * H1           # 1280: concatenated first-layer outputs
H2_CAT = NUM_HEADS * H2           # 640 : concatenated second-layer outputs
OUT_PAD = 128                     # all 52 classes packed into one lane-width

TILE_B = 256                      # batch tile (grid axis, "parallel")


# ----------------------------------------------------------------------------
# Pallas kernel: one batch tile, all five heads.
#   h1     = relu(x @ W1cat + b1cat)                (TB, 1280)  one MXU matmul
#   h2_cat = relu(concat_h(h1[:,h*256:] @ W2[h]) + b2cat)   (TB, 640)
#   out    = h2_cat @ W3flat + b3                   (TB, 128)   one MXU matmul
# ----------------------------------------------------------------------------
def _fused_heads_kernel(x_ref, w1_ref, b1_ref, w2_ref, b2_ref, w3_ref, b3_ref,
                        o_ref):
    x = x_ref[...]                                            # (TB, 1024) bf16

    # Layer 1: single wide matmul across all heads.
    h1 = jnp.dot(x, w1_ref[...], preferred_element_type=jnp.float32)
    h1 = jnp.maximum(h1 + b1_ref[...], 0.0)                   # (TB, 1280) f32

    # Layer 2: five static (TB,256)x(256,128) dots, lane-concatenated.
    h2_parts = []
    for h in range(NUM_HEADS):                                # unrolled
        h1_h = h1[:, h * H1:(h + 1) * H1].astype(jnp.bfloat16)
        h2_parts.append(
            jnp.dot(h1_h, w2_ref[h], preferred_element_type=jnp.float32))
    h2 = jnp.concatenate(h2_parts, axis=1)                    # (TB, 640) f32
    h2 = jnp.maximum(h2 + b2_ref[...], 0.0).astype(jnp.bfloat16)

    # Layer 3 (tail): single fused (TB,640)x(640,128) matmul -> lane-dense slab.
    out = jnp.dot(h2, w3_ref[...], preferred_element_type=jnp.float32)
    o_ref[...] = out + b3_ref[...]                            # (TB, 128) f32


@jax.jit
def run_heads(x_pad, w1, b1, w2, b2, w3, b3):
    """x_pad: (B_PAD, FEAT_PAD) bf16, B_PAD a multiple of the batch tile."""
    b_pad = x_pad.shape[0]
    tile_b = min(TILE_B, b_pad)
    grid = (b_pad // tile_b,)
    return pl.pallas_call(
        _fused_heads_kernel,
        out_shape=jax.ShapeDtypeStruct((b_pad, OUT_PAD), jnp.float32),
        grid_spec=pltpu.PrefetchScalarGridSpec(
            num_scalar_prefetch=0,
            grid=grid,                                       # batch-tiled
            in_specs=[
                # batch-tiled activations (double-buffered across the grid)
                pl.BlockSpec((tile_b, FEAT_PAD), lambda i: (i, 0)),
                # weights/biases: constant block index -> DMA'd once, resident
                pl.BlockSpec((FEAT_PAD, H1_CAT), lambda i: (0, 0)),
                pl.BlockSpec((1, H1_CAT), lambda i: (0, 0)),
                pl.BlockSpec((NUM_HEADS, H1, H2), lambda i: (0, 0, 0)),
                pl.BlockSpec((1, H2_CAT), lambda i: (0, 0)),
                pl.BlockSpec((H2_CAT, OUT_PAD), lambda i: (0, 0)),
                pl.BlockSpec((1, OUT_PAD), lambda i: (0, 0)),
            ],
            out_specs=pl.BlockSpec((tile_b, OUT_PAD), lambda i: (i, 0)),
        ),
        compiler_params=pltpu.CompilerParams(
            dimension_semantics=("parallel",),               # v7x: 2 TCs
        ),
    )(x_pad, w1, b1, w2, b2, w3, b3)


# ----------------------------------------------------------------------------
# Deterministic parameter init (synthetic — no checkpoint loading)
# ----------------------------------------------------------------------------
def init_params(key):
    """Returns packed parameters: bf16 weights, f32 biases.

    w1: (1024, 1280)  heads concatenated along output dim
    b1: (1, 1280)
    w2: (5, 256, 128) stacked per head
    b2: (1, 640)      heads concatenated
    w3: (640, 128)    heads stacked along K, classes packed at CLASS_OFFSETS
    b3: (1, 128)
    """
    w1 = jnp.zeros((FEAT_PAD, H1_CAT), jnp.float32)
    b1 = jnp.zeros((1, H1_CAT), jnp.float32)
    w2 = jnp.zeros((NUM_HEADS, H1, H2), jnp.float32)
    b2 = jnp.zeros((1, H2_CAT), jnp.float32)
    w3 = jnp.zeros((H2_CAT, OUT_PAD), jnp.float32)
    b3 = jnp.zeros((1, OUT_PAD), jnp.float32)

    for h in range(NUM_HEADS):
        c = HEAD_CLASSES[h]
        off = CLASS_OFFSETS[h]
        kh = jax.random.fold_in(key, h)
        k1, k2, k3, k4, k5, k6 = jax.random.split(kh, 6)

        w1_h = jax.random.normal(k1, (FEAT, H1), jnp.float32) / jnp.sqrt(FEAT)
        b1_h = jax.random.normal(k2, (H1,), jnp.float32) * 0.01
        w2_h = jax.random.normal(k3, (H1, H2), jnp.float32) / jnp.sqrt(H1)
        b2_h = jax.random.normal(k4, (H2,), jnp.float32) * 0.01
        w3_h = jax.random.normal(k5, (H2, c), jnp.float32) / jnp.sqrt(H2)
        b3_h = jax.random.normal(k6, (c,), jnp.float32) * 0.01

        # W1 concatenated along the output dim; rows FEAT..FEAT_PAD stay zero.
        w1 = w1.at[:FEAT, h * H1:(h + 1) * H1].set(w1_h)
        b1 = b1.at[0, h * H1:(h + 1) * H1].set(b1_h)
        w2 = w2.at[h].set(w2_h)
        b2 = b2.at[0, h * H2:(h + 1) * H2].set(b2_h)
        # W3/b3: head h lives in K-rows [h*128, (h+1)*128) and packed columns
        # [off, off+c) of the shared 128-wide slab.
        w3 = w3.at[h * H2:(h + 1) * H2, off:off + c].set(w3_h)
        b3 = b3.at[0, off:off + c].set(b3_h)

    return (w1.astype(jnp.bfloat16), b1,
            w2.astype(jnp.bfloat16), b2,
            w3.astype(jnp.bfloat16), b3)


def _round_up(x, m):
    return ((x + m - 1) // m) * m


def resnet18_heads_forward(features, params):
    """features: (B, 1000) backbone output.  Returns tuple of 5 logits."""
    B = features.shape[0]
    b_pad = max(16, _round_up(B, 16))             # sublane-friendly bf16 pad
    tile_b = min(TILE_B, b_pad)
    b_pad = _round_up(b_pad, tile_b)              # multiple of the batch tile
    x_pad = jnp.zeros((b_pad, FEAT_PAD), jnp.bfloat16)
    x_pad = x_pad.at[:B, :FEAT].set(features.astype(jnp.bfloat16))
    out = run_heads(x_pad, *params)               # (b_pad, 128) f32
    return tuple(
        out[:B, CLASS_OFFSETS[h]:CLASS_OFFSETS[h] + HEAD_CLASSES[h]]
        for h in range(NUM_HEADS)
    )


# ----------------------------------------------------------------------------
# Reference (pure JAX, same bf16 weights / f32 accumulation) for sanity check
# ----------------------------------------------------------------------------
def reference_forward(features, params):
    w1, b1, w2, b2, w3, b3 = params
    B = features.shape[0]
    x = jnp.zeros((B, FEAT_PAD), jnp.bfloat16)
    x = x.at[:, :FEAT].set(features.astype(jnp.bfloat16))
    h1 = jnp.dot(x, w1, preferred_element_type=jnp.float32)
    h1 = jnp.maximum(h1 + b1, 0.0)
    h2 = jnp.concatenate(
        [jnp.dot(h1[:, h * H1:(h + 1) * H1].astype(jnp.bfloat16), w2[h],
                 preferred_element_type=jnp.float32)
         for h in range(NUM_HEADS)], axis=1)
    h2 = jnp.maximum(h2 + b2, 0.0).astype(jnp.bfloat16)
    out = jnp.dot(h2, w3, preferred_element_type=jnp.float32) + b3
    return tuple(
        out[:, CLASS_OFFSETS[h]:CLASS_OFFSETS[h] + HEAD_CLASSES[h]]
        for h in range(NUM_HEADS)
    )


if __name__ == "__main__":
    key = jax.random.PRNGKey(0)
    k_feat, k_params = jax.random.split(key)
    params = init_params(k_params)

    # Small deterministic input: backbone (self.modle) output features, B=2.
    features = jax.random.normal(k_feat, (2, FEAT), jnp.float32)
    logits = resnet18_heads_forward(features, params)
    logits = jax.block_until_ready(logits)

    ref = reference_forward(features, params)
    for h in range(NUM_HEADS):
        assert logits[h].shape == (2, HEAD_CLASSES[h]), logits[h].shape
        assert jnp.allclose(logits[h], ref[h], atol=2e-2, rtol=2e-2), h

    # Exercise the batch-tiled path (grid > 1) as well.
    k_feat2 = jax.random.fold_in(k_feat, 1)
    features2 = jax.random.normal(k_feat2, (260, FEAT), jnp.float32)
    logits2 = jax.block_until_ready(resnet18_heads_forward(features2, params))
    ref2 = reference_forward(features2, params)
    for h in range(NUM_HEADS):
        assert logits2[h].shape == (260, HEAD_CLASSES[h]), logits2[h].shape
        assert jnp.allclose(logits2[h], ref2[h], atol=2e-2, rtol=2e-2), h

    print("KERNEL_OK")
</pallas_src>

<mosaic_0001>
module attributes {stable_mosaic.version = 11 : i64} {
  func.func @_fused_heads_kernel(%arg0: i32, %arg1: memref<16x1024xbf16, #tpu.memory_space<vmem>>, %arg2: memref<1024x1280xbf16, #tpu.memory_space<vmem>>, %arg3: memref<1x1280xf32, #tpu.memory_space<vmem>>, %arg4: memref<5x256x128xbf16, #tpu.memory_space<vmem>>, %arg5: memref<1x640xf32, #tpu.memory_space<vmem>>, %arg6: memref<640x128xbf16, #tpu.memory_space<vmem>>, %arg7: memref<1x128xf32, #tpu.memory_space<vmem>>, %arg8: memref<16x128xf32, #tpu.memory_space<vmem>>) attributes {dimension_semantics = [#tpu.dimension_semantics<parallel>], iteration_bounds = array<i64: 1>, scalar_prefetch = 0 : i64, scratch_operands = 0 : i64, tpu.core_type = #tpu.core_type<tc>, window_params = [{transform_indices = @transform_0, window_bounds = array<i64: 16, 1024>}, {pipeline_mode = #tpu.pipeline_mode<synchronous>, transform_indices = @transform_1, window_bounds = array<i64: 1024, 1280>}, {pipeline_mode = #tpu.pipeline_mode<synchronous>, transform_indices = @transform_2, window_bounds = array<i64: 1, 1280>}, {pipeline_mode = #tpu.pipeline_mode<synchronous>, transform_indices = @transform_3, window_bounds = array<i64: 5, 256, 128>}, {pipeline_mode = #tpu.pipeline_mode<synchronous>, transform_indices = @transform_4, window_bounds = array<i64: 1, 640>}, {pipeline_mode = #tpu.pipeline_mode<synchronous>, transform_indices = @transform_5, window_bounds = array<i64: 640, 128>}, {pipeline_mode = #tpu.pipeline_mode<synchronous>, transform_indices = @transform_6, window_bounds = array<i64: 1, 128>}, {transform_indices = @transform_7, window_bounds = array<i64: 16, 128>}]} {
    %c0 = arith.constant 0 : index
    %c0_0 = arith.constant 0 : index
    %0 = vector.load %arg1[%c0, %c0_0] : memref<16x1024xbf16, #tpu.memory_space<vmem>>, vector<16x1024xbf16>
    %c0_1 = arith.constant 0 : index
    %c0_2 = arith.constant 0 : index
    %1 = vector.load %arg2[%c0_1, %c0_2] : memref<1024x1280xbf16, #tpu.memory_space<vmem>>, vector<1024x1280xbf16>
    %cst = arith.constant dense<0.000000e+00> : vector<16x1280xf32>
    %2 = tpu.matmul %0, %1, %cst {dimension_numbers = #tpu.dot_dimension_numbers<[1], [0], [0], [1], [0, 0, 1, 1], [], []>} : vector<16x1024xbf16>, vector<1024x1280xbf16>, vector<16x1280xf32> -> vector<16x1280xf32>
    %c0_3 = arith.constant 0 : index
    %c0_4 = arith.constant 0 : index
    %3 = vector.load %arg3[%c0_3, %c0_4] : memref<1x1280xf32, #tpu.memory_space<vmem>>, vector<1x1280xf32>
    %4 = vector.broadcast %3 : vector<1x1280xf32> to vector<16x1280xf32>
    %5 = arith.addf %2, %4 : vector<16x1280xf32>
    %cst_5 = arith.constant 0.000000e+00 : f32
    %6 = vector.broadcast %cst_5 : f32 to vector<16x1280xf32>
    %7 = arith.maximumf %5, %6 : vector<16x1280xf32>
    %8 = vector.extract_strided_slice %7 {offsets = [0, 0], sizes = [16, 256], strides = [1, 1]} : vector<16x1280xf32> to vector<16x256xf32>
    %9 = arith.truncf %8 : vector<16x256xf32> to vector<16x256xbf16>
    %c0_6 = arith.constant 0 : index
    %c0_7 = arith.constant 0 : index
    %c0_8 = arith.constant 0 : index
    %10 = vector.load %arg4[%c0_6, %c0_7, %c0_8] : memref<5x256x128xbf16, #tpu.memory_space<vmem>>, vector<1x256x128xbf16>
    %11 = vector.shape_cast %10 : vector<1x256x128xbf16> to vector<256x128xbf16>
    %cst_9 = arith.constant dense<0.000000e+00> : vector<16x128xf32>
    %12 = tpu.matmul %9, %11, %cst_9 {dimension_numbers = #tpu.dot_dimension_numbers<[1], [0], [0], [1], [0, 0, 1, 1], [], []>} : vector<16x256xbf16>, vector<256x128xbf16>, vector<16x128xf32> -> vector<16x128xf32>
    %13 = vector.extract_strided_slice %7 {offsets = [0, 256], sizes = [16, 256], strides = [1, 1]} : vector<16x1280xf32> to vector<16x256xf32>
    %14 = arith.truncf %13 : vector<16x256xf32> to vector<16x256xbf16>
    %c1 = arith.constant 1 : index
    %c0_10 = arith.constant 0 : index
    %c0_11 = arith.constant 0 : index
    %15 = vector.load %arg4[%c1, %c0_10, %c0_11] : memref<5x256x128xbf16, #tpu.memory_space<vmem>>, vector<1x256x128xbf16>
    %16 = vector.shape_cast %15 : vector<1x256x128xbf16> to vector<256x128xbf16>
    %cst_12 = arith.constant dense<0.000000e+00> : vector<16x128xf32>
    %17 = tpu.matmul %14, %16, %cst_12 {dimension_numbers = #tpu.dot_dimension_numbers<[1], [0], [0], [1], [0, 0, 1, 1], [], []>} : vector<16x256xbf16>, vector<256x128xbf16>, vector<16x128xf32> -> vector<16x128xf32>
    %18 = vector.extract_strided_slice %7 {offsets = [0, 512], sizes = [16, 256], strides = [1, 1]} : vector<16x1280xf32> to vector<16x256xf32>
    %19 = arith.truncf %18 : vector<16x256xf32> to vector<16x256xbf16>
    %c2 = arith.constant 2 : index
    %c0_13 = arith.constant 0 : index
    %c0_14 = arith.constant 0 : index
    %20 = vector.load %arg4[%c2, %c0_13, %c0_14] : memref<5x256x128xbf16, #tpu.memory_space<vmem>>, vector<1x256x128xbf16>
    %21 = vector.shape_cast %20 : vector<1x256x128xbf16> to vector<256x128xbf16>
    %cst_15 = arith.constant dense<0.000000e+00> : vector<16x128xf32>
    %22 = tpu.matmul %19, %21, %cst_15 {dimension_numbers = #tpu.dot_dimension_numbers<[1], [0], [0], [1], [0, 0, 1, 1], [], []>} : vector<16x256xbf16>, vector<256x128xbf16>, vector<16x128xf32> -> vector<16x128xf32>
    %23 = vector.extract_strided_slice %7 {offsets = [0, 768], sizes = [16, 256], strides = [1, 1]} : vector<16x1280xf32> to vector<16x256xf32>
    %24 = arith.truncf %23 : vector<16x256xf32> to vector<16x256xbf16>
    %c3 = arith.constant 3 : index
    %c0_16 = arith.constant 0 : index
    %c0_17 = arith.constant 0 : index
    %25 = vector.load %arg4[%c3, %c0_16, %c0_17] : memref<5x256x128xbf16, #tpu.memory_space<vmem>>, vector<1x256x128xbf16>
    %26 = vector.shape_cast %25 : vector<1x256x128xbf16> to vector<256x128xbf16>
    %cst_18 = arith.constant dense<0.000000e+00> : vector<16x128xf32>
    %27 = tpu.matmul %24, %26, %cst_18 {dimension_numbers = #tpu.dot_dimension_numbers<[1], [0], [0], [1], [0, 0, 1, 1], [], []>} : vector<16x256xbf16>, vector<256x128xbf16>, vector<16x128xf32> -> vector<16x128xf32>
    %28 = vector.extract_strided_slice %7 {offsets = [0, 1024], sizes = [16, 256], strides = [1, 1]} : vector<16x1280xf32> to vector<16x256xf32>
    %29 = arith.truncf %28 : vector<16x256xf32> to vector<16x256xbf16>
    %c4 = arith.constant 4 : index
    %c0_19 = arith.constant 0 : index
    %c0_20 = arith.constant 0 : index
    %30 = vector.load %arg4[%c4, %c0_19, %c0_20] : memref<5x256x128xbf16, #tpu.memory_space<vmem>>, vector<1x256x128xbf16>
    %31 = vector.shape_cast %30 : vector<1x256x128xbf16> to vector<256x128xbf16>
    %cst_21 = arith.constant dense<0.000000e+00> : vector<16x128xf32>
    %32 = tpu.matmul %29, %31, %cst_21 {dimension_numbers = #tpu.dot_dimension_numbers<[1], [0], [0], [1], [0, 0, 1, 1], [], []>} : vector<16x256xbf16>, vector<256x128xbf16>, vector<16x128xf32> -> vector<16x128xf32>
    %33 = tpu.concatenate %12, %17, %22, %27, %32 in 1 : vector<16x128xf32>, vector<16x128xf32>, vector<16x128xf32>, vector<16x128xf32>, vector<16x128xf32> -> vector<16x640xf32>
    %c0_22 = arith.constant 0 : index
    %c0_23 = arith.constant 0 : index
    %34 = vector.load %arg5[%c0_22, %c0_23] : memref<1x640xf32, #tpu.memory_space<vmem>>, vector<1x640xf32>
    %35 = vector.broadcast %34 : vector<1x640xf32> to vector<16x640xf32>
    %36 = arith.addf %33, %35 : vector<16x640xf32>
    %cst_24 = arith.constant 0.000000e+00 : f32
    %37 = vector.broadcast %cst_24 : f32 to vector<16x640xf32>
    %38 = arith.maximumf %36, %37 : vector<16x640xf32>
    %39 = arith.truncf %38 : vector<16x640xf32> to vector<16x640xbf16>
    %c0_25 = arith.constant 0 : index
    %c0_26 = arith.constant 0 : index
    %40 = vector.load %arg6[%c0_25, %c0_26] : memref<640x128xbf16, #tpu.memory_space<vmem>>, vector<640x128xbf16>
    %cst_27 = arith.constant dense<0.000000e+00> : vector<16x128xf32>
    %41 = tpu.matmul %39, %40, %cst_27 {dimension_numbers = #tpu.dot_dimension_numbers<[1], [0], [0], [1], [0, 0, 1, 1], [], []>} : vector<16x640xbf16>, vector<640x128xbf16>, vector<16x128xf32> -> vector<16x128xf32>
    %c0_28 = arith.constant 0 : index
    %c0_29 = arith.constant 0 : index
    %42 = vector.load %arg7[%c0_28, %c0_29] : memref<1x128xf32, #tpu.memory_space<vmem>>, vector<1x128xf32>
    %43 = vector.broadcast %42 : vector<1x128xf32> to vector<16x128xf32>
    %44 = arith.addf %41, %43 : vector<16x128xf32>
    %c0_30 = arith.constant 0 : index
    %c0_31 = arith.constant 0 : index
    %45 = vector.load %arg8[%c0_30, %c0_31] : memref<16x128xf32, #tpu.memory_space<vmem>>, vector<16x128xf32>
    tpu.vector_store %arg8[%c0_30, %c0_31], %44 {strides = array<i32>} : memref<16x128xf32, #tpu.memory_space<vmem>>, vector<16x128xf32>,
    return
  }
  func.func @transform_0(%arg0: i32) -> (i32, i32) {
    %c0_i32 = arith.constant 0 : i32
    %c0_i32_0 = arith.constant 0 : i32
    return %arg0, %c0_i32 : i32, i32
  }
  func.func @transform_1(%arg0: i32) -> (i32, i32) {
    %c0_i32 = arith.constant 0 : i32
    %c0_i32_0 = arith.constant 0 : i32
    %c0_i32_1 = arith.constant 0 : i32
    return %c0_i32, %c0_i32_0 : i32, i32
  }
  func.func @transform_2(%arg0: i32) -> (i32, i32) {
    %c0_i32 = arith.constant 0 : i32
    %c0_i32_0 = arith.constant 0 : i32
    %c0_i32_1 = arith.constant 0 : i32
    return %c0_i32, %c0_i32_0 : i32, i32
  }
  func.func @transform_3(%arg0: i32) -> (i32, i32, i32) {
    %c0_i32 = arith.constant 0 : i32
    %c0_i32_0 = arith.constant 0 : i32
    %c0_i32_1 = arith.constant 0 : i32
    %c0_i32_2 = arith.constant 0 : i32
    return %c0_i32, %c0_i32_0, %c0_i32_1 : i32, i32, i32
  }
  func.func @transform_4(%arg0: i32) -> (i32, i32) {
    %c0_i32 = arith.constant 0 : i32
    %c0_i32_0 = arith.constant 0 : i32
    %c0_i32_1 = arith.constant 0 : i32
    return %c0_i32, %c0_i32_0 : i32, i32
  }
  func.func @transform_5(%arg0: i32) -> (i32, i32) {
    %c0_i32 = arith.constant 0 : i32
    %c0_i32_0 = arith.constant 0 : i32
    %c0_i32_1 = arith.constant 0 : i32
    return %c0_i32, %c0_i32_0 : i32, i32
  }
  func.func @transform_6(%arg0: i32) -> (i32, i32) {
    %c0_i32 = arith.constant 0 : i32
    %c0_i32_0 = arith.constant 0 : i32
    %c0_i32_1 = arith.constant 0 : i32
    return %c0_i32, %c0_i32_0 : i32, i32
  }
  func.func @transform_7(%arg0: i32) -> (i32, i32) {
    %c0_i32 = arith.constant 0 : i32
    %c0_i32_0 = arith.constant 0 : i32
    return %arg0, %c0_i32 : i32, i32
  }
}

</mosaic_0001>

<llo_original>
// kernel: run_heads.1
$region0: #{run_heads.1}
  #allocation0 [shape = 'u32[]', space=smem, size = 0x4, offset = 0x4, fixed_abs, tag = 'smem constant byte address 0x4 - core index']
  #allocation1 [shape = 'u32[144,128]{1,0:T(1,128)}', space=vmem, size = 0x12000, scoped, tag = 'internal scratch']
  %s0 = inlined_call_operand.hbm [shape: bf16[16,1024], index: 0, kind: input, shape index: {}]
  %s1 = inlined_call_operand.hbm [shape: bf16[1024,1280], index: 1, kind: input, shape index: {}]
  %s2 = inlined_call_operand.hbm [shape: f32[1,1280], index: 2, kind: input, shape index: {}]
  %s3 = inlined_call_operand.hbm [shape: bf16[5,256,128], index: 3, kind: input, shape index: {}]
  %s4 = inlined_call_operand.hbm [shape: f32[1,640], index: 4, kind: input, shape index: {}]
  %s5 = inlined_call_operand.hbm [shape: bf16[640,128], index: 5, kind: input, shape index: {}]
  %s6 = inlined_call_operand.hbm [shape: f32[1,128], index: 6, kind: input, shape index: {}]
  %s7 = inlined_call_operand.hbm [shape: f32[16,128], index: 7, kind: output, shape index: {}]
  %s8 = sld [smem:[#allocation0]]
  $region66: #{run_heads.1} parent=0
    _
  %s10 = ssub.s32 1, %s8
  %s11 = scalar_select 0, %s10, %s8
  $region1: #{run_heads.1} parent=0
    #allocation2 [shape = 'u8[32768]{0}', space=vmem, size = 0x8000, scoped, tag = 'input window, operand 0, single buffered']
    #allocation3 [shape = 's32[1]{0}', space=sflag, size = 0x4, scoped, tag = 'scoped memory for run_heads.1']
    #allocation4 [shape = 's32[1]{0}', space=sflag, size = 0x4, scoped, tag = 'scoped memory for run_heads.1']
    #allocation5 [shape = 'u8[2621440]{0}', space=vmem, size = 0x280000, scoped, tag = 'input window, operand 1, single buffered']
    #allocation6 [shape = 's32[1]{0}', space=sflag, size = 0x4, scoped, tag = 'scoped memory for run_heads.1']
    #allocation7 [shape = 'u8[5120]{0}', space=vmem, size = 0x1400, scoped, tag = 'input window, operand 2, single buffered']
    #allocation8 [shape = 'u8[327680]{0}', space=vmem, size = 0x50000, scoped, tag = 'input window, operand 3, single buffered']
    #allocation9 [shape = 's32[1]{0}', space=sflag, size = 0x4, scoped, tag = 'scoped memory for run_heads.1']
    #allocation10 [shape = 'u8[2560]{0}', space=vmem, size = 0xc00, scoped, tag = 'input window, operand 4, single buffered']
    #allocation11 [shape = 'u8[163840]{0}', space=vmem, size = 0x28000, scoped, tag = 'input window, operand 5, single buffered']
    #allocation12 [shape = 's32[1]{0}', space=sflag, size = 0x4, scoped, tag = 'scoped memory for run_heads.1']
    #allocation13 [shape = 'u8[512]{0}', space=vmem, size = 0x400, scoped, tag = 'input window, operand 6, single buffered']
    #allocation14 [shape = 'u8[8192]{0}', space=vmem, size = 0x2000, scoped, tag = 'output window, operand 0, single buffered']
    %12 = vsyncpa [#allocation3], 0
    %13 = vsyncpa [#allocation6], 0
    %14 = vsyncpa [#allocation9], 0
    %15 = vsyncpa [#allocation12], 0
    %16 = vsyncpa [#allocation4], 0
    // Predicated region
    $region2: #{run_heads.1} parent=1 // pred_check
      _
    $region3: #{run_heads.1} parent=1 // pred_check_branch
      %18 = sbr.rel (0) target = $region5
    $region4: #{run_heads.1} parent=1 // pred_region
      %s20 = ssub.s32 1024, 1024
      %21 = vsyncadd [#allocation3], %s20
      %s22 = sshll.u32 [#allocation2], 4
      %s23 = int_to_ptr.vmem [resolvable:$true] %s22
      %28 = dma.hbm_to_vmem [thread:$0]  %s0, 1024, %s23, [#allocation3], 512, 512, 32
    $region5: #{run_heads.1} parent=1 // pred_fallthru
      _
    // Predicated region
    $region6: #{run_heads.1} parent=1 // pred_check
      _
    $region7: #{run_heads.1} parent=1 // pred_check_branch
      %30 = sbr.rel (0) target = $region9
    $region8: #{run_heads.1} parent=1 // pred_region
      %s32 = ssub.s32 81920, 81920
      %33 = vsyncadd [#allocation6], %s32
      %s34 = sshll.u32 [#allocation5], 4
      %s35 = int_to_ptr.vmem [resolvable:$true] %s34
      %40 = dma.hbm_to_vmem [thread:$0]  %s1, 81920, %s35, [#allocation6], 640, 640, 40
    $region9: #{run_heads.1} parent=1 // pred_fallthru
      _
    // Predicated region
    $region10: #{run_heads.1} parent=1 // pred_check
      _
    $region11: #{run_heads.1} parent=1 // pred_check_branch
      %42 = sbr.rel (0) target = $region13
    $region12: #{run_heads.1} parent=1 // pred_region
      %s44 = ssub.s32 160, 160
      %45 = vsyncadd [#allocation6], %s44
      %s47 = sshll.u32 [#allocation7], 4
      %s48 = int_to_ptr.vmem [resolvable:$true] %s47
      %50 = dma.hbm_to_vmem [thread:$0]  %s2, 160, %s48, [#allocation6]
    $region13: #{run_heads.1} parent=1 // pred_fallthru
      _
    // Predicated region
    $region14: #{run_heads.1} parent=1 // pred_check
      _
    $region15: #{run_heads.1} parent=1 // pred_check_branch
      %52 = sbr.rel (0) target = $region17
    $region16: #{run_heads.1} parent=1 // pred_region
      %s54 = ssub.s32 10240, 10240
      %55 = vsyncadd [#allocation9], %s54
      %s56 = sshll.u32 [#allocation8], 4
      %s57 = int_to_ptr.vmem [resolvable:$true] %s56
      %62 = dma.hbm_to_vmem [thread:$0]  %s3, 10240, %s57, [#allocation9], 64, 64, 4
    $region17: #{run_heads.1} parent=1 // pred_fallthru
      _
    // Predicated region
    $region18: #{run_heads.1} parent=1 // pred_check
      _
    $region19: #{run_heads.1} parent=1 // pred_check_branch
      %64 = sbr.rel (0) target = $region21
    $region20: #{run_heads.1} parent=1 // pred_region
      %s66 = ssub.s32 80, 80
      %67 = vsyncadd [#allocation9], %s66
      %s69 = sshll.u32 [#allocation10], 4
      %s70 = int_to_ptr.vmem [resolvable:$true] %s69
      %72 = dma.hbm_to_vmem [thread:$0]  %s4, 80, %s70, [#allocation9]
    $region21: #{run_heads.1} parent=1 // pred_fallthru
      _
    // Predicated region
    $region22: #{run_heads.1} parent=1 // pred_check
      _
    $region23: #{run_heads.1} parent=1 // pred_check_branch
      %74 = sbr.rel (0) target = $region25
    $region24: #{run_heads.1} parent=1 // pred_region
      %s76 = ssub.s32 5120, 5120
      %77 = vsyncadd [#allocation12], %s76
      %s78 = sshll.u32 [#allocation11], 4
      %s79 = int_to_ptr.vmem [resolvable:$true] %s78
      %84 = dma.hbm_to_vmem [thread:$0]  %s5, 5120, %s79, [#allocation12], 64, 64, 4
    $region25: #{run_heads.1} parent=1 // pred_fallthru
      _
    // Predicated region
    $region26: #{run_heads.1} parent=1 // pred_check
      _
    $region27: #{run_heads.1} parent=1 // pred_check_branch
      %86 = sbr.rel (0) target = $region29
    $region28: #{run_heads.1} parent=1 // pred_region
      %s88 = ssub.s32 16, 16
      %89 = vsyncadd [#allocation12], %s88
      %s91 = sshll.u32 [#allocation13], 4
      %s92 = int_to_ptr.vmem [resolvable:$true] %s91
      %94 = dma.hbm_to_vmem [thread:$0]  %s6, 16, %s92, [#allocation12]
    $region29: #{run_heads.1} parent=1 // pred_fallthru
      _
    // Predicated region
    $region30: #{run_heads.1} parent=1 // pred_check
      _
    $region31: #{run_heads.1} parent=1 // pred_check_branch
      %96 = sbr.rel (0) target = $region33
    $region32: #{run_heads.1} parent=1 // pred_region
      %97 = dma.done [#allocation3], 1024
    $region33: #{run_heads.1} parent=1 // pred_fallthru
      _
    // Predicated region
    $region34: #{run_heads.1} parent=1 // pred_check
      _
    $region35: #{run_heads.1} parent=1 // pred_check_branch
      %99 = sbr.rel (0) target = $region37
    $region36: #{run_heads.1} parent=1 // pred_region
      %100 = dma.done [#allocation6], 81920
    $region37: #{run_heads.1} parent=1 // pred_fallthru
      _
    // Predicated region
    $region38: #{run_heads.1} parent=1 // pred_check
      _
    $region39: #{run_heads.1} parent=1 // pred_check_branch
      %102 = sbr.rel (0) target = $region41
    $region40: #{run_heads.1} parent=1 // pred_region
      %103 = dma.done [#allocation6], 160
    $region41: #{run_heads.1} parent=1 // pred_fallthru
      _
    // Predicated region
    $region42: #{run_heads.1} parent=1 // pred_check
      _
    $region43: #{run_heads.1} parent=1 // pred_check_branch
      %105 = sbr.rel (0) target = $region45
    $region44: #{run_heads.1} parent=1 // pred_region
      %106 = dma.done [#allocation9], 10240
    $region45: #{run_heads.1} parent=1 // pred_fallthru
      _
    // Predicated region
    $region46: #{run_heads.1} parent=1 // pred_check
      _
    $region47: #{run_heads.1} parent=1 // pred_check_branch
      %108 = sbr.rel (0) target = $region49
    $region48: #{run_heads.1} parent=1 // pred_region
      %109 = dma.done [#allocation9], 80
    $region49: #{run_heads.1} parent=1 // pred_fallthru
      _
    // Predicated region
    $region50: #{run_heads.1} parent=1 // pred_check
      _
    $region51: #{run_heads.1} parent=1 // pred_check_branch
      %111 = sbr.rel (0) target = $region53
    $region52: #{run_heads.1} parent=1 // pred_region
      %112 = dma.done [#allocation12], 5120
    $region53: #{run_heads.1} parent=1 // pred_fallthru
      _
    // Predicated region
    $region54: #{run_heads.1} parent=1 // pred_check
      _
    $region55: #{run_heads.1} parent=1 // pred_check_branch
      %114 = sbr.rel (0) target = $region57
    $region56: #{run_heads.1} parent=1 // pred_region
      %115 = dma.done [#allocation12], 16
    $region57: #{run_heads.1} parent=1 // pred_fallthru
      _
    %v117 = vld [vmem:[#allocation2] sm:$0xff]
    %v118 = vld [vmem:[#allocation2 + $0x8] sm:$0xff]
    %v119 = vld [vmem:[#allocation2 + $0x10] sm:$0xff]
    %v120 = vld [vmem:[#allocation2 + $0x18] sm:$0xff]
    %v121 = vld [vmem:[#allocation2 + $0x20] sm:$0xff]
    %v122 = vld [vmem:[#allocation2 + $0x28] sm:$0xff]
    %v123 = vld [vmem:[#allocation2 + $0x30] sm:$0xff]
    %v124 = vld [vmem:[#allocation2 + $0x38] sm:$0xff]
    %v125 = vld [vmem:[#allocation5] sm:$0xff]
    %v126 = vld [vmem:[#allocation5 + $0x8] sm:$0xff]
    %v127 = vld [vmem:[#allocation5 + $0x10] sm:$0xff]
    %v128 = vld [vmem:[#allocation5 + $0x18] sm:$0xff]
    %v129 = vld [vmem:[#allocation5 + $0x20] sm:$0xff]
    %v130 = vld [vmem:[#allocation5 + $0x28] sm:$0xff]
    %v131 = vld [vmem:[#allocation5 + $0x30] sm:$0xff]
    %v132 = vld [vmem:[#allocation5 + $0x38] sm:$0xff]
    %v133 = vld [vmem:[#allocation5 + $0x40] sm:$0xff]
    %v134 = vld [vmem:[#allocation5 + $0x48] sm:$0xff]
    %v135 = vld [vmem:[#allocation5 + $0x50] sm:$0xff]
    %v136 = vld [vmem:[#allocation5 + $0x58] sm:$0xff]
    %v137 = vld [vmem:[#allocation5 + $0x60] sm:$0xff]
    %v138 = vld [vmem:[#allocation5 + $0x68] sm:$0xff]
    %v139 = vld [vmem:[#allocation5 + $0x70] sm:$0xff]
    %v140 = vld [vmem:[#allocation5 + $0x78] sm:$0xff]
    %v141 = vld [vmem:[#allocation5 + $0x80] sm:$0xff]
    %v142 = vld [vmem:[#allocation5 + $0x88] sm:$0xff]
    %v143 = vld [vmem:[#allocation5 + $0x90] sm:$0xff]
    %v144 = vld [vmem:[#allocation5 + $0x98] sm:$0xff]
    %v145 = vld [vmem:[#allocation5 + $0xa0] sm:$0xff]
    %v146 = vld [vmem:[#allocation5 + $0xa8] sm:$0xff]
    %v147 = vld [vmem:[#allocation5 + $0xb0] sm:$0xff]
    %v148 = vld [vmem:[#allocation5 + $0xb8] sm:$0xff]
    %v149 = vld [vmem:[#allocation5 + $0xc0] sm:$0xff]
    %v150 = vld [vmem:[#allocation5 + $0xc8] sm:$0xff]
    %v151 = vld [vmem:[#allocation5 + $0xd0] sm:$0xff]
    %v152 = vld [vmem:[#allocation5 + $0xd8] sm:$0xff]
    %v153 = vld [vmem:[#allocation5 + $0xe0] sm:$0xff]
    %v154 = vld [vmem:[#allocation5 + $0xe8] sm:$0xff]
    %v155 = vld [vmem:[#allocation5 + $0xf0] sm:$0xff]
    %v156 = vld [vmem:[#allocation5 + $0xf8] sm:$0xff]
    %v157 = vld [vmem:[#allocation5 + $0x100] sm:$0xff]
    %v158 = vld [vmem:[#allocation5 + $0x108] sm:$0xff]
    %v159 = vld [vmem:[#allocation5 + $0x110] sm:$0xff]
    %v160 = vld [vmem:[#allocation5 + $0x118] sm:$0xff]
    %v161 = vld [vmem:[#allocation5 + $0x120] sm:$0xff]
    %v162 = vld [vmem:[#allocation5 + $0x128] sm:$0xff]
    %v163 = vld [vmem:[#allocation5 + $0x130] sm:$0xff]
    %v164 = vld [vmem:[#allocation5 + $0x138] sm:$0xff]
    %v165 = vld [vmem:[#allocation5 + $0x140] sm:$0xff]
    %v166 = vld [vmem:[#allocation5 + $0x148] sm:$0xff]
    %v167 = vld [vmem:[#allocation5 + $0x150] sm:$0xff]
    %v168 = vld [vmem:[#allocation5 + $0x158] sm:$0xff]
    %v169 = vld [vmem:[#allocation5 + $0x160] sm:$0xff]
    %v170 = vld [vmem:[#allocation5 + $0x168] sm:$0xff]
    %v171 = vld [vmem:[#allocation5 + $0x170] sm:$0xff]
    %v172 = vld [vmem:[#allocation5 + $0x178] sm:$0xff]
    %v173 = vld [vmem:[#allocation5 + $0x180] sm:$0xff]
    %v174 = vld [vmem:[#allocation5 + $0x188] sm:$0xff]
    %v175 = vld [vmem:[#allocation5 + $0x190] sm:$0xff]
    %v176 = vld [vmem:[#allocation5 + $0x198] sm:$0xff]
    %v177 = vld [vmem:[#allocation5 + $0x1a0] sm:$0xff]
    %v178 = vld [vmem:[#allocation5 + $0x1a8] sm:$0xff]
    %v179 = vld [vmem:[#allocation5 + $0x1b0] sm:$0xff]
    %v180 = vld [vmem:[#allocation5 + $0x1b8] sm:$0xff]
    %v181 = vld [vmem:[#allocation5 + $0x1c0] sm:$0xff]
    %v182 = vld [vmem:[#allocation5 + $0x1c8] sm:$0xff]
    %v183 = vld [vmem:[#allocation5 + $0x1d0] sm:$0xff]
    %v184 = vld [vmem:[#allocation5 + $0x1d8] sm:$0xff]
    %v185 = vld [vmem:[#allocation5 + $0x1e0] sm:$0xff]
    %v186 = vld [vmem:[#allocation5 + $0x1e8] sm:$0xff]
    %v187 = vld [vmem:[#allocation5 + $0x1f0] sm:$0xff]
    %v188 = vld [vmem:[#allocation5 + $0x1f8] sm:$0xff]
    %v189 = vld [vmem:[#allocation5 + $0x200] sm:$0xff]
    %v190 = vld [vmem:[#allocation5 + $0x208] sm:$0xff]
    %v191 = vld [vmem:[#allocation5 + $0x210] sm:$0xff]
    %v192 = vld [vmem:[#allocation5 + $0x218] sm:$0xff]
    %v193 = vld [vmem:[#allocation5 + $0x220] sm:$0xff]
    %v194 = vld [vmem:[#allocation5 + $0x228] sm:$0xff]
    %v195 = vld [vmem:[#allocation5 + $0x230] sm:$0xff]
    %v196 = vld [vmem:[#allocation5 + $0x238] sm:$0xff]
    %v197 = vld [vmem:[#allocation5 + $0x240] sm:$0xff]
    %v198 = vld [vmem:[#allocation5 + $0x248] sm:$0xff]
    %v199 = vld [vmem:[#allocation5 + $0x250] sm:$0xff]
    %v200 = vld [vmem:[#allocation5 + $0x258] sm:$0xff]
    %v201 = vld [vmem:[#allocation5 + $0x260] sm:$0xff]
    %v202 = vld [vmem:[#allocation5 + $0x268] sm:$0xff]
    %v203 = vld [vmem:[#allocation5 + $0x270] sm:$0xff]
    %v204 = vld [vmem:[#allocation5 + $0x278] sm:$0xff]
    %v205 = vld [vmem:[#allocation5 + $0x280] sm:$0xff]
    %v206 = vld [vmem:[#allocation5 + $0x288] sm:$0xff]
    %v207 = vld [vmem:[#allocation5 + $0x290] sm:$0xff]
    %v208 = vld [vmem:[#allocation5 + $0x298] sm:$0xff]
    %v209 = vld [vmem:[#allocation5 + $0x2a0] sm:$0xff]
    %v210 = vld [vmem:[#allocation5 + $0x2a8] sm:$0xff]
    %v211 = vld [vmem:[#allocation5 + $0x2b0] sm:$0xff]
    %v212 = vld [vmem:[#allocation5 + $0x2b8] sm:$0xff]
    %v213 = vld [vmem:[#allocation5 + $0x2c0] sm:$0xff]
    %v214 = vld [vmem:[#allocation5 + $0x2c8] sm:$0xff]
    %v215 = vld [vmem:[#allocation5 + $0x2d0] sm:$0xff]
    %v216 = vld [vmem:[#allocation5 + $0x2d8] sm:$0xff]
    %v217 = vld [vmem:[#allocation5 + $0x2e0] sm:$0xff]
    %v218 = vld [vmem:[#allocation5 + $0x2e8] sm:$0xff]
    %v219 = vld [vmem:[#allocation5 + $0x2f0] sm:$0xff]
    %v220 = vld [vmem:[#allocation5 + $0x2f8] sm:$0xff]
    %v221 = vld [vmem:[#allocation5 + $0x300] sm:$0xff]
    %v222 = vld [vmem:[#allocation5 + $0x308] sm:$0xff]
    %v223 = vld [vmem:[#allocation5 + $0x310] sm:$0xff]
    %v224 = vld [vmem:[#allocation5 + $0x318] sm:$0xff]
    %v225 = vld [vmem:[#allocation5 + $0x320] sm:$0xff]
    %v226 = vld [vmem:[#allocation5 + $0x328] sm:$0xff]
    %v227 = vld [vmem:[#allocation5 + $0x330] sm:$0xff]
    %v228 = vld [vmem:[#allocation5 + $0x338] sm:$0xff]
    %v229 = vld [vmem:[#allocation5 + $0x340] sm:$0xff]
    %v230 = vld [vmem:[#allocation5 + $0x348] sm:$0xff]
    %v231 = vld [vmem:[#allocation5 + $0x350] sm:$0xff]
    %v232 = vld [vmem:[#allocation5 + $0x358] sm:$0xff]
    %v233 = vld [vmem:[#allocation5 + $0x360] sm:$0xff]
    %v234 = vld [vmem:[#allocation5 + $0x368] sm:$0xff]
    %v235 = vld [vmem:[#allocation5 + $0x370] sm:$0xff]
    %v236 = vld [vmem:[#allocation5 + $0x378] sm:$0xff]
    %v237 = vld [vmem:[#allocation5 + $0x380] sm:$0xff]
    %v238 = vld [vmem:[#allocation5 + $0x388] sm:$0xff]
    %v239 = vld [vmem:[#allocation5 + $0x390] sm:$0xff]
    %v240 = vld [vmem:[#allocation5 + $0x398] sm:$0xff]
    %v241 = vld [vmem:[#allocation5 + $0x3a0] sm:$0xff]
    %v242 = vld [vmem:[#allocation5 + $0x3a8] sm:$0xff]
    %v243 = vld [vmem:[#allocation5 + $0x3b0] sm:$0xff]
    %v244 = vld [vmem:[#allocation5 + $0x3b8] sm:$0xff]
    %v245 = vld [vmem:[#allocation5 + $0x3c0] sm:$0xff]
    %v246 = vld [vmem:[#allocation5 + $0x3c8] sm:$0xff]
    %v247 = vld [vmem:[#allocation5 + $0x3d0] sm:$0xff]
    %v248 = vld [vmem:[#allocation5 + $0x3d8] sm:$0xff]
    %v249 = vld [vmem:[#allocation5 + $0x3e0] sm:$0xff]
    %v250 = vld [vmem:[#allocation5 + $0x3e8] sm:$0xff]
    %v251 = vld [vmem:[#allocation5 + $0x3f0] sm:$0xff]
    %v252 = vld [vmem:[#allocation5 + $0x3f8] sm:$0xff]
    %v253 = vld [vmem:[#allocation5 + $0x400] sm:$0xff]
    %v254 = vld [vmem:[#allocation5 + $0x408] sm:$0xff]
    %v255 = vld [vmem:[#allocation5 + $0x410] sm:$0xff]
    %v256 = vld [vmem:[#allocation5 + $0x418] sm:$0xff]
    %v257 = vld [vmem:[#allocation5 + $0x420] sm:$0xff]
    %v258 = vld [vmem:[#allocation5 + $0x428] sm:$0xff]
    %v259 = vld [vmem:[#allocation5 + $0x430] sm:$0xff]
    %v260 = vld [vmem:[#allocation5 + $0x438] sm:$0xff]
    %v261 = vld [vmem:[#allocation5 + $0x440] sm:$0xff]
    %v262 = vld [vmem:[#allocation5 + $0x448] sm:$0xff]
    %v263 = vld [vmem:[#allocation5 + $0x450] sm:$0xff]
    %v264 = vld [vmem:[#allocation5 + $0x458] sm:$0xff]
    %v265 = vld [vmem:[#allocation5 + $0x460] sm:$0xff]
    %v266 = vld [vmem:[#allocation5 + $0x468] sm:$0xff]
    %v267 = vld [vmem:[#allocation5 + $0x470] sm:$0xff]
    %v268 = vld [vmem:[#allocation5 + $0x478] sm:$0xff]
    %v269 = vld [vmem:[#allocation5 + $0x480] sm:$0xff]
    %v270 = vld [vmem:[#allocation5 + $0x488] sm:$0xff]
    %v271 = vld [vmem:[#allocation5 + $0x490] sm:$0xff]
    %v272 = vld [vmem:[#allocation5 + $0x498] sm:$0xff]
    %v273 = vld [vmem:[#allocation5 + $0x4a0] sm:$0xff]
    %v274 = vld [vmem:[#allocation5 + $0x4a8] sm:$0xff]
    %v275 = vld [vmem:[#allocation5 + $0x4b0] sm:$0xff]
    %v276 = vld [vmem:[#allocation5 + $0x4b8] sm:$0xff]
    %v277 = vld [vmem:[#allocation5 + $0x4c0] sm:$0xff]
    %v278 = vld [vmem:[#allocation5 + $0x4c8] sm:$0xff]
    %v279 = vld [vmem:[#allocation5 + $0x4d0] sm:$0xff]
    %v280 = vld [vmem:[#allocation5 + $0x4d8] sm:$0xff]
    %v281 = vld [vmem:[#allocation5 + $0x4e0] sm:$0xff]
    %v282 = vld [vmem:[#allocation5 + $0x4e8] sm:$0xff]
    %v283 = vld [vmem:[#allocation5 + $0x4f0] sm:$0xff]
    %v284 = vld [vmem:[#allocation5 + $0x4f8] sm:$0xff]
    %v285 = vld [vmem:[#allocation5 + $0x500] sm:$0xff]
    %v286 = vld [vmem:[#allocation5 + $0x508] sm:$0xff]
    %v287 = vld [vmem:[#allocation5 + $0x510] sm:$0xff]
    %v288 = vld [vmem:[#allocation5 + $0x518] sm:$0xff]
    %v289 = vld [vmem:[#allocation5 + $0x520] sm:$0xff]
    %v290 = vld [vmem:[#allocation5 + $0x528] sm:$0xff]
    %v291 = vld [vmem:[#allocation5 + $0x530] sm:$0xff]
    %v292 = vld [vmem:[#allocation5 + $0x538] sm:$0xff]
    %v293 = vld [vmem:[#allocation5 + $0x540] sm:$0xff]
    %v294 = vld [vmem:[#allocation5 + $0x548] sm:$0xff]
    %v295 = vld [vmem:[#allocation5 + $0x550] sm:$0xff]
    %v296 = vld [vmem:[#allocation5 + $0x558] sm:$0xff]
    %v297 = vld [vmem:[#allocation5 + $0x560] sm:$0xff]
    %v298 = vld [vmem:[#allocation5 + $0x568] sm:$0xff]
    %v299 = vld [vmem:[#allocation5 + $0x570] sm:$0xff]
    %v300 = vld [vmem:[#allocation5 + $0x578] sm:$0xff]
    %v301 = vld [vmem:[#allocation5 + $0x580] sm:$0xff]
    %v302 = vld [vmem:[#allocation5 + $0x588] sm:$0xff]
    %v303 = vld [vmem:[#allocation5 + $0x590] sm:$0xff]
    %v304 = vld [vmem:[#allocation5 + $0x598] sm:$0xff]
    %v305 = vld [vmem:[#allocation5 + $0x5a0] sm:$0xff]
    %v306 = vld [vmem:[#allocation5 + $0x5a8] sm:$0xff]
    %v307 = vld [vmem:[#allocation5 + $0x5b0] sm:$0xff]
    %v308 = vld [vmem:[#allocation5 + $0x5b8] sm:$0xff]
    %v309 = vld [vmem:[#allocation5 + $0x5c0] sm:$0xff]
    %v310 = vld [vmem:[#allocation5 + $0x5c8] sm:$0xff]
    %v311 = vld [vmem:[#allocation5 + $0x5d0] sm:$0xff]
    %v312 = vld [vmem:[#allocation5 + $0x5d8] sm:$0xff]
    %v313 = vld [vmem:[#allocation5 + $0x5e0] sm:$0xff]
    %v314 = vld [vmem:[#allocation5 + $0x5e8] sm:$0xff]
    %v315 = vld [vmem:[#allocation5 + $0x5f0] sm:$0xff]
    %v316 = vld [vmem:[#allocation5 + $0x5f8] sm:$0xff]
    %v317 = vld [vmem:[#allocation5 + $0x600] sm:$0xff]
    %v318 = vld [vmem:[#allocation5 + $0x608] sm:$0xff]
    %v319 = vld [vmem:[#allocation5 + $0x610] sm:$0xff]
    %v320 = vld [vmem:[#allocation5 + $0x618] sm:$0xff]
    %v321 = vld [vmem:[#allocation5 + $0x620] sm:$0xff]
    %v322 = vld [vmem:[#allocation5 + $0x628] sm:$0xff]
    %v323 = vld [vmem:[#allocation5 + $0x630] sm:$0xff]
    %v324 = vld [vmem:[#allocation5 + $0x638] sm:$0xff]
    %v325 = vld [vmem:[#allocation5 + $0x640] sm:$0xff]
    %v326 = vld [vmem:[#allocation5 + $0x648] sm:$0xff]
    %v327 = vld [vmem:[#allocation5 + $0x650] sm:$0xff]
    %v328 = vld [vmem:[#allocation5 + $0x658] sm:$0xff]
    %v329 = vld [vmem:[#allocation5 + $0x660] sm:$0xff]
    %v330 = vld [vmem:[#allocation5 + $0x668] sm:$0xff]
    %v331 = vld [vmem:[#allocation5 + $0x670] sm:$0xff]
    %v332 = vld [vmem:[#allocation5 + $0x678] sm:$0xff]
    %v333 = vld [vmem:[#allocation5 + $0x680] sm:$0xff]
    %v334 = vld [vmem:[#allocation5 + $0x688] sm:$0xff]
    %v335 = vld [vmem:[#allocation5 + $0x690] sm:$0xff]
    %v336 = vld [vmem:[#allocation5 + $0x698] sm:$0xff]
    %v337 = vld [vmem:[#allocation5 + $0x6a0] sm:$0xff]
    %v338 = vld [vmem:[#allocation5 + $0x6a8] sm:$0xff]
    %v339 = vld [vmem:[#allocation5 + $0x6b0] sm:$0xff]
    %v340 = vld [vmem:[#allocation5 + $0x6b8] sm:$0xff]
    %v341 = vld [vmem:[#allocation5 + $0x6c0] sm:$0xff]
    %v342 = vld [vmem:[#allocation5 + $0x6c8] sm:$0xff]
    %v343 = vld [vmem:[#allocation5 + $0x6d0] sm:$0xff]
    %v344 = vld [vmem:[#allocation5 + $0x6d8] sm:$0xff]
    %v345 = vld [vmem:[#allocation5 + $0x6e0] sm:$0xff]
    %v346 = vld [vmem:[#allocation5 + $0x6e8] sm:$0xff]
    %v347 = vld [vmem:[#allocation5 + $0x6f0] sm:$0xff]
    %v348 = vld [vmem:[#allocation5 + $0x6f8] sm:$0xff]
    %v349 = vld [vmem:[#allocation5 + $0x700] sm:$0xff]
    %v350 = vld [vmem:[#allocation5 + $0x708] sm:$0xff]
    %v351 = vld [vmem:[#allocation5 + $0x710] sm:$0xff]
    %v352 = vld [vmem:[#allocation5 + $0x718] sm:$0xff]
    %v353 = vld [vmem:[#allocation5 + $0x720] sm:$0xff]
    %v354 = vld [vmem:[#allocation5 + $0x728] sm:$0xff]
    %v355 = vld [vmem:[#allocation5 + $0x730] sm:$0xff]
    %v356 = vld [vmem:[#allocation5 + $0x738] sm:$0xff]
    %v357 = vld [vmem:[#allocation5 + $0x740] sm:$0xff]
    %v358 = vld [vmem:[#allocation5 + $0x748] sm:$0xff]
    %v359 = vld [vmem:[#allocation5 + $0x750] sm:$0xff]
    %v360 = vld [vmem:[#allocation5 + $0x758] sm:$0xff]
    %v361 = vld [vmem:[#allocation5 + $0x760] sm:$0xff]
    %v362 = vld [vmem:[#allocation5 + $0x768] sm:$0xff]
    %v363 = vld [vmem:[#allocation5 + $0x770] sm:$0xff]
    %v364 = vld [vmem:[#allocation5 + $0x778] sm:$0xff]
    %v365 = vld [vmem:[#allocation5 + $0x780] sm:$0xff]
    %v366 = vld [vmem:[#allocation5 + $0x788] sm:$0xff]
    %v367 = vld [vmem:[#allocation5 + $0x790] sm:$0xff]
    %v368 = vld [vmem:[#allocation5 + $0x798] sm:$0xff]
    %v369 = vld [vmem:[#allocation5 + $0x7a0] sm:$0xff]
    %v370 = vld [vmem:[#allocation5 + $0x7a8] sm:$0xff]
    %v371 = vld [vmem:[#allocation5 + $0x7b0] sm:$0xff]
    %v372 = vld [vmem:[#allocation5 + $0x7b8] sm:$0xff]
    %v373 = vld [vmem:[#allocation5 + $0x7c0] sm:$0xff]
    %v374 = vld [vmem:[#allocation5 + $0x7c8] sm:$0xff]
    %v375 = vld [vmem:[#allocation5 + $0x7d0] sm:$0xff]
    %v376 = vld [vmem:[#allocation5 + $0x7d8] sm:$0xff]
    %v377 = vld [vmem:[#allocation5 + $0x7e0] sm:$0xff]
    %v378 = vld [vmem:[#allocation5 + $0x7e8] sm:$0xff]
    %v379 = vld [vmem:[#allocation5 + $0x7f0] sm:$0xff]
    %v380 = vld [vmem:[#allocation5 + $0x7f8] sm:$0xff]
    %v381 = vld [vmem:[#allocation5 + $0x800] sm:$0xff]
    %v382 = vld [vmem:[#allocation5 + $0x808] sm:$0xff]
    %v383 = vld [vmem:[#allocation5 + $0x810] sm:$0xff]
    %v384 = vld [vmem:[#allocation5 + $0x818] sm:$0xff]
    %v385 = vld [vmem:[#allocation5 + $0x820] sm:$0xff]
    %v386 = vld [vmem:[#allocation5 + $0x828] sm:$0xff]
    %v387 = vld [vmem:[#allocation5 + $0x830] sm:$0xff]
    %v388 = vld [vmem:[#allocation5 + $0x838] sm:$0xff]
    %v389 = vld [vmem:[#allocation5 + $0x840] sm:$0xff]
    %v390 = vld [vmem:[#allocation5 + $0x848] sm:$0xff]
    %v391 = vld [vmem:[#allocation5 + $0x850] sm:$0xff]
    %v392 = vld [vmem:[#allocation5 + $0x858] sm:$0xff]
    %v393 = vld [vmem:[#allocation5 + $0x860] sm:$0xff]
    %v394 = vld [vmem:[#allocation5 + $0x868] sm:$0xff]
    %v395 = vld [vmem:[#allocation5 + $0x870] sm:$0xff]
    %v396 = vld [vmem:[#allocation5 + $0x878] sm:$0xff]
    %v397 = vld [vmem:[#allocation5 + $0x880] sm:$0xff]
    %v398 = vld [vmem:[#allocation5 + $0x888] sm:$0xff]
    %v399 = vld [vmem:[#allocation5 + $0x890] sm:$0xff]
    %v400 = vld [vmem:[#allocation5 + $0x898] sm:$0xff]
    %v401 = vld [vmem:[#allocation5 + $0x8a0] sm:$0xff]
    %v402 = vld [vmem:[#allocation5 + $0x8a8] sm:$0xff]
    %v403 = vld [vmem:[#allocation5 + $0x8b0] sm:$0xff]
    %v404 = vld [vmem:[#allocation5 + $0x8b8] sm:$0xff]
    %v405 = vld [vmem:[#allocation5 + $0x8c0] sm:$0xff]
    %v406 = vld [vmem:[#allocation5 + $0x8c8] sm:$0xff]
    %v407 = vld [vmem:[#allocation5 + $0x8d0] sm:$0xff]
    %v408 = vld [vmem:[#allocation5 + $0x8d8] sm:$0xff]
    %v409 = vld [vmem:[#allocation5 + $0x8e0] sm:$0xff]
    %v410 = vld [vmem:[#allocation5 + $0x8e8] sm:$0xff]
    %v411 = vld [vmem:[#allocation5 + $0x8f0] sm:$0xff]
    %v412 = vld [vmem:[#allocation5 + $0x8f8] sm:$0xff]
    %v413 = vld [vmem:[#allocation5 + $0x900] sm:$0xff]
    %v414 = vld [vmem:[#allocation5 + $0x908] sm:$0xff]
    %v415 = vld [vmem:[#allocation5 + $0x910] sm:$0xff]
    %v416 = vld [vmem:[#allocation5 + $0x918] sm:$0xff]
    %v417 = vld [vmem:[#allocation5 + $0x920] sm:$0xff]
    %v418 = vld [vmem:[#allocation5 + $0x928] sm:$0xff]
    %v419 = vld [vmem:[#allocation5 + $0x930] sm:$0xff]
    %v420 = vld [vmem:[#allocation5 + $0x938] sm:$0xff]
    %v421 = vld [vmem:[#allocation5 + $0x940] sm:$0xff]
    %v422 = vld [vmem:[#allocation5 + $0x948] sm:$0xff]
    %v423 = vld [vmem:[#allocation5 + $0x950] sm:$0xff]
    %v424 = vld [vmem:[#allocation5 + $0x958] sm:$0xff]
    %v425 = vld [vmem:[#allocation5 + $0x960] sm:$0xff]
    %v426 = vld [vmem:[#allocation5 + $0x968] sm:$0xff]
    %v427 = vld [vmem:[#allocation5 + $0x970] sm:$0xff]
    %v428 = vld [vmem:[#allocation5 + $0x978] sm:$0xff]
    %v429 = vld [vmem:[#allocation5 + $0x980] sm:$0xff]
    %v430 = vld [vmem:[#allocation5 + $0x988] sm:$0xff]
    %v431 = vld [vmem:[#allocation5 + $0x990] sm:$0xff]
    %v432 = vld [vmem:[#allocation5 + $0x998] sm:$0xff]
    %v433 = vld [vmem:[#allocation5 + $0x9a0] sm:$0xff]
    %v434 = vld [vmem:[#allocation5 + $0x9a8] sm:$0xff]
    %v435 = vld [vmem:[#allocation5 + $0x9b0] sm:$0xff]
    %v436 = vld [vmem:[#allocation5 + $0x9b8] sm:$0xff]
    %v437 = vld [vmem:[#allocation5 + $0x9c0] sm:$0xff]
    %v438 = vld [vmem:[#allocation5 + $0x9c8] sm:$0xff]
    %v439 = vld [vmem:[#allocation5 + $0x9d0] sm:$0xff]
    %v440 = vld [vmem:[#allocation5 + $0x9d8] sm:$0xff]
    %v441 = vld [vmem:[#allocation5 + $0x9e0] sm:$0xff]
    %v442 = vld [vmem:[#allocation5 + $0x9e8] sm:$0xff]
    %v443 = vld [vmem:[#allocation5 + $0x9f0] sm:$0xff]
    %v444 = vld [vmem:[#allocation5 + $0x9f8] sm:$0xff]
    %v445 = vld [vmem:[#allocation5 + $0xa00] sm:$0xff]
    %v446 = vld [vmem:[#allocation5 + $0xa08] sm:$0xff]
    %v447 = vld [vmem:[#allocation5 + $0xa10] sm:$0xff]
    %v448 = vld [vmem:[#allocation5 + $0xa18] sm:$0xff]
    %v449 = vld [vmem:[#allocation5 + $0xa20] sm:$0xff]
    %v450 = vld [vmem:[#allocation5 + $0xa28] sm:$0xff]
    %v451 = vld [vmem:[#allocation5 + $0xa30] sm:$0xff]
    %v452 = vld [vmem:[#allocation5 + $0xa38] sm:$0xff]
    %v453 = vld [vmem:[#allocation5 + $0xa40] sm:$0xff]
    %v454 = vld [vmem:[#allocation5 + $0xa48] sm:$0xff]
    %v455 = vld [vmem:[#allocation5 + $0xa50] sm:$0xff]
    %v456 = vld [vmem:[#allocation5 + $0xa58] sm:$0xff]
    %v457 = vld [vmem:[#allocation5 + $0xa60] sm:$0xff]
    %v458 = vld [vmem:[#allocation5 + $0xa68] sm:$0xff]
    %v459 = vld [vmem:[#allocation5 + $0xa70] sm:$0xff]
    %v460 = vld [vmem:[#allocation5 + $0xa78] sm:$0xff]
    %v461 = vld [vmem:[#allocation5 + $0xa80] sm:$0xff]
    %v462 = vld [vmem:[#allocation5 + $0xa88] sm:$0xff]
    %v463 = vld [vmem:[#allocation5 + $0xa90] sm:$0xff]
    %v464 = vld [vmem:[#allocation5 + $0xa98] sm:$0xff]
    %v465 = vld [vmem:[#allocation5 + $0xaa0] sm:$0xff]
    %v466 = vld [vmem:[#allocation5 + $0xaa8] sm:$0xff]
    %v467 = vld [vmem:[#allocation5 + $0xab0] sm:$0xff]
    %v468 = vld [vmem:[#allocation5 + $0xab8] sm:$0xff]
    %v469 = vld [vmem:[#allocation5 + $0xac0] sm:$0xff]
    %v470 = vld [vmem:[#allocation5 + $0xac8] sm:$0xff]
    %v471 = vld [vmem:[#allocation5 + $0xad0] sm:$0xff]
    %v472 = vld [vmem:[#allocation5 + $0xad8] sm:$0xff]
    %v473 = vld [vmem:[#allocation5 + $0xae0] sm:$0xff]
    %v474 = vld [vmem:[#allocation5 + $0xae8] sm:$0xff]
    %v475 = vld [vmem:[#allocation5 + $0xaf0] sm:$0xff]
    %v476 = vld [vmem:[#allocation5 + $0xaf8] sm:$0xff]
    %v477 = vld [vmem:[#allocation5 + $0xb00] sm:$0xff]
    %v478 = vld [vmem:[#allocation5 + $0xb08] sm:$0xff]
    %v479 = vld [vmem:[#allocation5 + $0xb10] sm:$0xff]
    %v480 = vld [vmem:[#allocation5 + $0xb18] sm:$0xff]
    %v481 = vld [vmem:[#allocation5 + $0xb20] sm:$0xff]
    %v482 = vld [vmem:[#allocation5 + $0xb28] sm:$0xff]
    %v483 = vld [vmem:[#allocation5 + $0xb30] sm:$0xff]
    %v484 = vld [vmem:[#allocation5 + $0xb38] sm:$0xff]
    %v485 = vld [vmem:[#allocation5 + $0xb40] sm:$0xff]
    %v486 = vld [vmem:[#allocation5 + $0xb48] sm:$0xff]
    %v487 = vld [vmem:[#allocation5 + $0xb50] sm:$0xff]
    %v488 = vld [vmem:[#allocation5 + $0xb58] sm:$0xff]
    %v489 = vld [vmem:[#allocation5 + $0xb60] sm:$0xff]
    %v490 = vld [vmem:[#allocation5 + $0xb68] sm:$0xff]
    %v491 = vld [vmem:[#allocation5 + $0xb70] sm:$0xff]
    %v492 = vld [vmem:[#allocation5 + $0xb78] sm:$0xff]
    %v493 = vld [vmem:[#allocation5 + $0xb80] sm:$0xff]
    %v494 = vld [vmem:[#allocation5 + $0xb88] sm:$0xff]
    %v495 = vld [vmem:[#allocation5 + $0xb90] sm:$0xff]
    %v496 = vld [vmem:[#allocation5 + $0xb98] sm:$0xff]
    %v497 = vld [vmem:[#allocation5 + $0xba0] sm:$0xff]
    %v498 = vld [vmem:[#allocation5 + $0xba8] sm:$0xff]
    %v499 = vld [vmem:[#allocation5 + $0xbb0] sm:$0xff]
    %v500 = vld [vmem:[#allocation5 + $0xbb8] sm:$0xff]
    %v501 = vld [vmem:[#allocation5 + $0xbc0] sm:$0xff]
    %v502 = vld [vmem:[#allocation5 + $0xbc8] sm:$0xff]
    %v503 = vld [vmem:[#allocation5 + $0xbd0] sm:$0xff]
    %v504 = vld [vmem:[#allocation5 + $0xbd8] sm:$0xff]
    %v505 = vld [vmem:[#allocation5 + $0xbe0] sm:$0xff]
    %v506 = vld [vmem:[#allocation5 + $0xbe8] sm:$0xff]
    %v507 = vld [vmem:[#allocation5 + $0xbf0] sm:$0xff]
    %v508 = vld [vmem:[#allocation5 + $0xbf8] sm:$0xff]
    %v509 = vld [vmem:[#allocation5 + $0xc00] sm:$0xff]
    %v510 = vld [vmem:[#allocation5 + $0xc08] sm:$0xff]
    %v511 = vld [vmem:[#allocation5 + $0xc10] sm:$0xff]
    %v512 = vld [vmem:[#allocation5 + $0xc18] sm:$0xff]
    %v513 = vld [vmem:[#allocation5 + $0xc20] sm:$0xff]
    %v514 = vld [vmem:[#allocation5 + $0xc28] sm:$0xff]
    %v515 = vld [vmem:[#allocation5 + $0xc30] sm:$0xff]
    %v516 = vld [vmem:[#allocation5 + $0xc38] sm:$0xff]
    %v517 = vld [vmem:[#allocation5 + $0xc40] sm:$0xff]
    %v518 = vld [vmem:[#allocation5 + $0xc48] sm:$0xff]
    %v519 = vld [vmem:[#allocation5 + $0xc50] sm:$0xff]
    %v520 = vld [vmem:[#allocation5 + $0xc58] sm:$0xff]
    %v521 = vld [vmem:[#allocation5 + $0xc60] sm:$0xff]
    %v522 = vld [vmem:[#allocation5 + $0xc68] sm:$0xff]
    %v523 = vld [vmem:[#allocation5 + $0xc70] sm:$0xff]
    %v524 = vld [vmem:[#allocation5 + $0xc78] sm:$0xff]
    %v525 = vld [vmem:[#allocation5 + $0xc80] sm:$0xff]
    %v526 = vld [vmem:[#allocation5 + $0xc88] sm:$0xff]
    %v527 = vld [vmem:[#allocation5 + $0xc90] sm:$0xff]
    %v528 = vld [vmem:[#allocation5 + $0xc98] sm:$0xff]
    %v529 = vld [vmem:[#allocation5 + $0xca0] sm:$0xff]
    %v530 = vld [vmem:[#allocation5 + $0xca8] sm:$0xff]
    %v531 = vld [vmem:[#allocation5 + $0xcb0] sm:$0xff]
    %v532 = vld [vmem:[#allocation5 + $0xcb8] sm:$0xff]
    %v533 = vld [vmem:[#allocation5 + $0xcc0] sm:$0xff]
    %v534 = vld [vmem:[#allocation5 + $0xcc8] sm:$0xff]
    %v535 = vld [vmem:[#allocation5 + $0xcd0] sm:$0xff]
    %v536 = vld [vmem:[#allocation5 + $0xcd8] sm:$0xff]
    %v537 = vld [vmem:[#allocation5 + $0xce0] sm:$0xff]
    %v538 = vld [vmem:[#allocation5 + $0xce8] sm:$0xff]
    %v539 = vld [vmem:[#allocation5 + $0xcf0] sm:$0xff]
    %v540 = vld [vmem:[#allocation5 + $0xcf8] sm:$0xff]
    %v541 = vld [vmem:[#allocation5 + $0xd00] sm:$0xff]
    %v542 = vld [vmem:[#allocation5 + $0xd08] sm:$0xff]
    %v543 = vld [vmem:[#allocation5 + $0xd10] sm:$0xff]
    %v544 = vld [vmem:[#allocation5 + $0xd18] sm:$0xff]
    %v545 = vld [vmem:[#allocation5 + $0xd20] sm:$0xff]
    %v546 = vld [vmem:[#allocation5 + $0xd28] sm:$0xff]
    %v547 = vld [vmem:[#allocation5 + $0xd30] sm:$0xff]
    %v548 = vld [vmem:[#allocation5 + $0xd38] sm:$0xff]
    %v549 = vld [vmem:[#allocation5 + $0xd40] sm:$0xff]
    %v550 = vld [vmem:[#allocation5 + $0xd48] sm:$0xff]
    %v551 = vld [vmem:[#allocation5 + $0xd50] sm:$0xff]
    %v552 = vld [vmem:[#allocation5 + $0xd58] sm:$0xff]
    %v553 = vld [vmem:[#allocation5 + $0xd60] sm:$0xff]
    %v554 = vld [vmem:[#allocation5 + $0xd68] sm:$0xff]
    %v555 = vld [vmem:[#allocation5 + $0xd70] sm:$0xff]
    %v556 = vld [vmem:[#allocation5 + $0xd78] sm:$0xff]
    %v557 = vld [vmem:[#allocation5 + $0xd80] sm:$0xff]
    %v558 = vld [vmem:[#allocation5 + $0xd88] sm:$0xff]
    %v559 = vld [vmem:[#allocation5 + $0xd90] sm:$0xff]
    %v560 = vld [vmem:[#allocation5 + $0xd98] sm:$0xff]
    %v561 = vld [vmem:[#allocation5 + $0xda0] sm:$0xff]
    %v562 = vld [vmem:[#allocation5 + $0xda8] sm:$0xff]
    %v563 = vld [vmem:[#allocation5 + $0xdb0] sm:$0xff]
    %v564 = vld [vmem:[#allocation5 + $0xdb8] sm:$0xff]
    %v565 = vld [vmem:[#allocation5 + $0xdc0] sm:$0xff]
    %v566 = vld [vmem:[#allocation5 + $0xdc8] sm:$0xff]
    %v567 = vld [vmem:[#allocation5 + $0xdd0] sm:$0xff]
    %v568 = vld [vmem:[#allocation5 + $0xdd8] sm:$0xff]
    %v569 = vld [vmem:[#allocation5 + $0xde0] sm:$0xff]
    %v570 = vld [vmem:[#allocation5 + $0xde8] sm:$0xff]
    %v571 = vld [vmem:[#allocation5 + $0xdf0] sm:$0xff]
    %v572 = vld [vmem:[#allocation5 + $0xdf8] sm:$0xff]
    %v573 = vld [vmem:[#allocation5 + $0xe00] sm:$0xff]
    %v574 = vld [vmem:[#allocation5 + $0xe08] sm:$0xff]
    %v575 = vld [vmem:[#allocation5 + $0xe10] sm:$0xff]
    %v576 = vld [vmem:[#allocation5 + $0xe18] sm:$0xff]
    %v577 = vld [vmem:[#allocation5 + $0xe20] sm:$0xff]
    %v578 = vld [vmem:[#allocation5 + $0xe28] sm:$0xff]
    %v579 = vld [vmem:[#allocation5 + $0xe30] sm:$0xff]
    %v580 = vld [vmem:[#allocation5 + $0xe38] sm:$0xff]
    %v581 = vld [vmem:[#allocation5 + $0xe40] sm:$0xff]
    %v582 = vld [vmem:[#allocation5 + $0xe48] sm:$0xff]
    %v583 = vld [vmem:[#allocation5 + $0xe50] sm:$0xff]
    %v584 = vld [vmem:[#allocation5 + $0xe58] sm:$0xff]
    %v585 = vld [vmem:[#allocation5 + $0xe60] sm:$0xff]
    %v586 = vld [vmem:[#allocation5 + $0xe68] sm:$0xff]
    %v587 = vld [vmem:[#allocation5 + $0xe70] sm:$0xff]
    %v588 = vld [vmem:[#allocation5 + $0xe78] sm:$0xff]
    %v589 = vld [vmem:[#allocation5 + $0xe80] sm:$0xff]
    %v590 = vld [vmem:[#allocation5 + $0xe88] sm:$0xff]
    %v591 = vld [vmem:[#allocation5 + $0xe90] sm:$0xff]
    %v592 = vld [vmem:[#allocation5 + $0xe98] sm:$0xff]
    %v593 = vld [vmem:[#allocation5 + $0xea0] sm:$0xff]
    %v594 = vld [vmem:[#allocation5 + $0xea8] sm:$0xff]
    %v595 = vld [vmem:[#allocation5 + $0xeb0] sm:$0xff]
    %v596 = vld [vmem:[#allocation5 + $0xeb8] sm:$0xff]
    %v597 = vld [vmem:[#allocation5 + $0xec0] sm:$0xff]
    %v598 = vld [vmem:[#allocation5 + $0xec8] sm:$0xff]
    %v599 = vld [vmem:[#allocation5 + $0xed0] sm:$0xff]
    %v600 = vld [vmem:[#allocation5 + $0xed8] sm:$0xff]
    %v601 = vld [vmem:[#allocation5 + $0xee0] sm:$0xff]
    %v602 = vld [vmem:[#allocation5 + $0xee8] sm:$0xff]
    %v603 = vld [vmem:[#allocation5 + $0xef0] sm:$0xff]
    %v604 = vld [vmem:[#allocation5 + $0xef8] sm:$0xff]
    %v605 = vld [vmem:[#allocation5 + $0xf00] sm:$0xff]
    %v606 = vld [vmem:[#allocation5 + $0xf08] sm:$0xff]
    %v607 = vld [vmem:[#allocation5 + $0xf10] sm:$0xff]
    %v608 = vld [vmem:[#allocation5 + $0xf18] sm:$0xff]
    %v609 = vld [vmem:[#allocation5 + $0xf20] sm:$0xff]
    %v610 = vld [vmem:[#allocation5 + $0xf28] sm:$0xff]
    %v611 = vld [vmem:[#allocation5 + $0xf30] sm:$0xff]
    %v612 = vld [vmem:[#allocation5 + $0xf38] sm:$0xff]
    %v613 = vld [vmem:[#allocation5 + $0xf40] sm:$0xff]
    %v614 = vld [vmem:[#allocation5 + $0xf48] sm:$0xff]
    %v615 = vld [vmem:[#allocation5 + $0xf50] sm:$0xff]
    %v616 = vld [vmem:[#allocation5 + $0xf58] sm:$0xff]
    %v617 = vld [vmem:[#allocation5 + $0xf60] sm:$0xff]
    %v618 = vld [vmem:[#allocation5 + $0xf68] sm:$0xff]
    %v619 = vld [vmem:[#allocation5 + $0xf70] sm:$0xff]
    %v620 = vld [vmem:[#allocation5 + $0xf78] sm:$0xff]
    %v621 = vld [vmem:[#allocation5 + $0xf80] sm:$0xff]
    %v622 = vld [vmem:[#allocation5 + $0xf88] sm:$0xff]
    %v623 = vld [vmem:[#allocation5 + $0xf90] sm:$0xff]
    %v624 = vld [vmem:[#allocation5 + $0xf98] sm:$0xff]
    %v625 = vld [vmem:[#allocation5 + $0xfa0] sm:$0xff]
    %v626 = vld [vmem:[#allocation5 + $0xfa8] sm:$0xff]
    %v627 = vld [vmem:[#allocation5 + $0xfb0] sm:$0xff]
    %v628 = vld [vmem:[#allocation5 + $0xfb8] sm:$0xff]
    %v629 = vld [vmem:[#allocation5 + $0xfc0] sm:$0xff]
    %v630 = vld [vmem:[#allocation5 + $0xfc8] sm:$0xff]
    %v631 = vld [vmem:[#allocation5 + $0xfd0] sm:$0xff]
    %v632 = vld [vmem:[#allocation5 + $0xfd8] sm:$0xff]
    %v633 = vld [vmem:[#allocation5 + $0xfe0] sm:$0xff]
    %v634 = vld [vmem:[#allocation5 + $0xfe8] sm:$0xff]
    %v635 = vld [vmem:[#allocation5 + $0xff0] sm:$0xff]
    %v636 = vld [vmem:[#allocation5 + $0xff8] sm:$0xff]
    %v637 = vld [vmem:[#allocation5 + $0x1000] sm:$0xff]
    %v638 = vld [vmem:[#allocation5 + $0x1008] sm:$0xff]
    %v639 = vld [vmem:[#allocation5 + $0x1010] sm:$0xff]
    %v640 = vld [vmem:[#allocation5 + $0x1018] sm:$0xff]
    %v641 = vld [vmem:[#allocation5 + $0x1020] sm:$0xff]
    %v642 = vld [vmem:[#allocation5 + $0x1028] sm:$0xff]
    %v643 = vld [vmem:[#allocation5 + $0x1030] sm:$0xff]
    %v644 = vld [vmem:[#allocation5 + $0x1038] sm:$0xff]
    %v645 = vld [vmem:[#allocation5 + $0x1040] sm:$0xff]
    %v646 = vld [vmem:[#allocation5 + $0x1048] sm:$0xff]
    %v647 = vld [vmem:[#allocation5 + $0x1050] sm:$0xff]
    %v648 = vld [vmem:[#allocation5 + $0x1058] sm:$0xff]
    %v649 = vld [vmem:[#allocation5 + $0x1060] sm:$0xff]
    %v650 = vld [vmem:[#allocation5 + $0x1068] sm:$0xff]
    %v651 = vld [vmem:[#allocation5 + $0x1070] sm:$0xff]
    %v652 = vld [vmem:[#allocation5 + $0x1078] sm:$0xff]
    %v653 = vld [vmem:[#allocation5 + $0x1080] sm:$0xff]
    %v654 = vld [vmem:[#allocation5 + $0x1088] sm:$0xff]
    %v655 = vld [vmem:[#allocation5 + $0x1090] sm:$0xff]
    %v656 = vld [vmem:[#allocation5 + $0x1098] sm:$0xff]
    %v657 = vld [vmem:[#allocation5 + $0x10a0] sm:$0xff]
    %v658 = vld [vmem:[#allocation5 + $0x10a8] sm:$0xff]
    %v659 = vld [vmem:[#allocation5 + $0x10b0] sm:$0xff]
    %v660 = vld [vmem:[#allocation5 + $0x10b8] sm:$0xff]
    %v661 = vld [vmem:[#allocation5 + $0x10c0] sm:$0xff]
    %v662 = vld [vmem:[#allocation5 + $0x10c8] sm:$0xff]
    %v663 = vld [vmem:[#allocation5 + $0x10d0] sm:$0xff]
    %v664 = vld [vmem:[#allocation5 + $0x10d8] sm:$0xff]
    %v665 = vld [vmem:[#allocation5 + $0x10e0] sm:$0xff]
    %v666 = vld [vmem:[#allocation5 + $0x10e8] sm:$0xff]
    %v667 = vld [vmem:[#allocation5 + $0x10f0] sm:$0xff]
    %v668 = vld [vmem:[#allocation5 + $0x10f8] sm:$0xff]
    %v669 = vld [vmem:[#allocation5 + $0x1100] sm:$0xff]
    %v670 = vld [vmem:[#allocation5 + $0x1108] sm:$0xff]
    %v671 = vld [vmem:[#allocation5 + $0x1110] sm:$0xff]
    %v672 = vld [vmem:[#allocation5 + $0x1118] sm:$0xff]
    %v673 = vld [vmem:[#allocation5 + $0x1120] sm:$0xff]
    %v674 = vld [vmem:[#allocation5 + $0x1128] sm:$0xff]
    %v675 = vld [vmem:[#allocation5 + $0x1130] sm:$0xff]
    %v676 = vld [vmem:[#allocation5 + $0x1138] sm:$0xff]
    %v677 = vld [vmem:[#allocation5 + $0x1140] sm:$0xff]
    %v678 = vld [vmem:[#allocation5 + $0x1148] sm:$0xff]
    %v679 = vld [vmem:[#allocation5 + $0x1150] sm:$0xff]
    %v680 = vld [vmem:[#allocation5 + $0x1158] sm:$0xff]
    %v681 = vld [vmem:[#allocation5 + $0x1160] sm:$0xff]
    %v682 = vld [vmem:[#allocation5 + $0x1168] sm:$0xff]
    %v683 = vld [vmem:[#allocation5 + $0x1170] sm:$0xff]
    %v684 = vld [vmem:[#allocation5 + $0x1178] sm:$0xff]
    %v685 = vld [vmem:[#allocation5 + $0x1180] sm:$0xff]
    %v686 = vld [vmem:[#allocation5 + $0x1188] sm:$0xff]
    %v687 = vld [vmem:[#allocation5 + $0x1190] sm:$0xff]
    %v688 = vld [vmem:[#allocation5 + $0x1198] sm:$0xff]
    %v689 = vld [vmem:[#allocation5 + $0x11a0] sm:$0xff]
    %v690 = vld [vmem:[#allocation5 + $0x11a8] sm:$0xff]
    %v691 = vld [vmem:[#allocation5 + $0x11b0] sm:$0xff]
    %v692 = vld [vmem:[#allocation5 + $0x11b8] sm:$0xff]
    %v693 = vld [vmem:[#allocation5 + $0x11c0] sm:$0xff]
    %v694 = vld [vmem:[#allocation5 + $0x11c8] sm:$0xff]
    %v695 = vld [vmem:[#allocation5 + $0x11d0] sm:$0xff]
    %v696 = vld [vmem:[#allocation5 + $0x11d8] sm:$0xff]
    %v697 = vld [vmem:[#allocation5 + $0x11e0] sm:$0xff]
    %v698 = vld [vmem:[#allocation5 + $0x11e8] sm:$0xff]
    %v699 = vld [vmem:[#allocation5 + $0x11f0] sm:$0xff]
    %v700 = vld [vmem:[#allocation5 + $0x11f8] sm:$0xff]
    %v701 = vld [vmem:[#allocation5 + $0x1200] sm:$0xff]
    %v702 = vld [vmem:[#allocation5 + $0x1208] sm:$0xff]
    %v703 = vld [vmem:[#allocation5 + $0x1210] sm:$0xff]
    %v704 = vld [vmem:[#allocation5 + $0x1218] sm:$0xff]
    %v705 = vld [vmem:[#allocation5 + $0x1220] sm:$0xff]
    %v706 = vld [vmem:[#allocation5 + $0x1228] sm:$0xff]
    %v707 = vld [vmem:[#allocation5 + $0x1230] sm:$0xff]
    %v708 = vld [vmem:[#allocation5 + $0x1238] sm:$0xff]
    %v709 = vld [vmem:[#allocation5 + $0x1240] sm:$0xff]
    %v710 = vld [vmem:[#allocation5 + $0x1248] sm:$0xff]
    %v711 = vld [vmem:[#allocation5 + $0x1250] sm:$0xff]
    %v712 = vld [vmem:[#allocation5 + $0x1258] sm:$0xff]
    %v713 = vld [vmem:[#allocation5 + $0x1260] sm:$0xff]
    %v714 = vld [vmem:[#allocation5 + $0x1268] sm:$0xff]
    %v715 = vld [vmem:[#allocation5 + $0x1270] sm:$0xff]
    %v716 = vld [vmem:[#allocation5 + $0x1278] sm:$0xff]
    %v717 = vld [vmem:[#allocation5 + $0x1280] sm:$0xff]
    %v718 = vld [vmem:[#allocation5 + $0x1288] sm:$0xff]
    %v719 = vld [vmem:[#allocation5 + $0x1290] sm:$0xff]
    %v720 = vld [vmem:[#allocation5 + $0x1298] sm:$0xff]
    %v721 = vld [vmem:[#allocation5 + $0x12a0] sm:$0xff]
    %v722 = vld [vmem:[#allocation5 + $0x12a8] sm:$0xff]
    %v723 = vld [vmem:[#allocation5 + $0x12b0] sm:$0xff]
    %v724 = vld [vmem:[#allocation5 + $0x12b8] sm:$0xff]
    %v725 = vld [vmem:[#allocation5 + $0x12c0] sm:$0xff]
    %v726 = vld [vmem:[#allocation5 + $0x12c8] sm:$0xff]
    %v727 = vld [vmem:[#allocation5 + $0x12d0] sm:$0xff]
    %v728 = vld [vmem:[#allocation5 + $0x12d8] sm:$0xff]
    %v729 = vld [vmem:[#allocation5 + $0x12e0] sm:$0xff]
    %v730 = vld [vmem:[#allocation5 + $0x12e8] sm:$0xff]
    %v731 = vld [vmem:[#allocation5 + $0x12f0] sm:$0xff]
    %v732 = vld [vmem:[#allocation5 + $0x12f8] sm:$0xff]
    %v733 = vld [vmem:[#allocation5 + $0x1300] sm:$0xff]
    %v734 = vld [vmem:[#allocation5 + $0x1308] sm:$0xff]
    %v735 = vld [vmem:[#allocation5 + $0x1310] sm:$0xff]
    %v736 = vld [vmem:[#allocation5 + $0x1318] sm:$0xff]
    %v737 = vld [vmem:[#allocation5 + $0x1320] sm:$0xff]
    %v738 = vld [vmem:[#allocation5 + $0x1328] sm:$0xff]
    %v739 = vld [vmem:[#allocation5 + $0x1330] sm:$0xff]
    %v740 = vld [vmem:[#allocation5 + $0x1338] sm:$0xff]
    %v741 = vld [vmem:[#allocation5 + $0x1340] sm:$0xff]
    %v742 = vld [vmem:[#allocation5 + $0x1348] sm:$0xff]
    %v743 = vld [vmem:[#allocation5 + $0x1350] sm:$0xff]
    %v744 = vld [vmem:[#allocation5 + $0x1358] sm:$0xff]
    %v745 = vld [vmem:[#allocation5 + $0x1360] sm:$0xff]
    %v746 = vld [vmem:[#allocation5 + $0x1368] sm:$0xff]
    %v747 = vld [vmem:[#allocation5 + $0x1370] sm:$0xff]
    %v748 = vld [vmem:[#allocation5 + $0x1378] sm:$0xff]
    %v749 = vld [vmem:[#allocation5 + $0x1380] sm:$0xff]
    %v750 = vld [vmem:[#allocation5 + $0x1388] sm:$0xff]
    %v751 = vld [vmem:[#allocation5 + $0x1390] sm:$0xff]
    %v752 = vld [vmem:[#allocation5 + $0x1398] sm:$0xff]
    %v753 = vld [vmem:[#allocation5 + $0x13a0] sm:$0xff]
    %v754 = vld [vmem:[#allocation5 + $0x13a8] sm:$0xff]
    %v755 = vld [vmem:[#allocation5 + $0x13b0] sm:$0xff]
    %v756 = vld [vmem:[#allocation5 + $0x13b8] sm:$0xff]
    %v757 = vld [vmem:[#allocation5 + $0x13c0] sm:$0xff]
    %v758 = vld [vmem:[#allocation5 + $0x13c8] sm:$0xff]
    %v759 = vld [vmem:[#allocation5 + $0x13d0] sm:$0xff]
    %v760 = vld [vmem:[#allocation5 + $0x13d8] sm:$0xff]
    %v761 = vld [vmem:[#allocation5 + $0x13e0] sm:$0xff]
    %v762 = vld [vmem:[#allocation5 + $0x13e8] sm:$0xff]
    %v763 = vld [vmem:[#allocation5 + $0x13f0] sm:$0xff]
    %v764 = vld [vmem:[#allocation5 + $0x13f8] sm:$0xff]
    %v765 = vld [vmem:[#allocation7] sm:$0xff]
    %v766 = vld [vmem:[#allocation7 + $0x8] sm:$0x3]
    %v769 = vlaneseq
    %v770 = vshrl.u32 %v769, 7
    %v771 = vsub.s32 0, %v770
    %v772 = vrot.slane %v765, %v771
    %v773 = vlaneseq
    %v774 = vshrl.u32 %v773, 7
    %v775 = vsub.s32 1, %v774
    %v776 = vrot.slane %v765, %v775
    %v777 = vlaneseq
    %v778 = vshrl.u32 %v777, 7
    %v779 = vsub.s32 2, %v778
    %v780 = vrot.slane %v765, %v779
    %v781 = vlaneseq
    %v782 = vshrl.u32 %v781, 7
    %v783 = vsub.s32 3, %v782
    %v784 = vrot.slane %v765, %v783
    %v785 = vlaneseq
    %v786 = vshrl.u32 %v785, 7
    %v787 = vsub.s32 4, %v786
    %v788 = vrot.slane %v765, %v787
    %v789 = vlaneseq
    %v790 = vshrl.u32 %v789, 7
    %v791 = vsub.s32 5, %v790
    %v792 = vrot.slane %v765, %v791
    %v793 = vlaneseq
    %v794 = vshrl.u32 %v793, 7
    %v795 = vsub.s32 6, %v794
    %v796 = vrot.slane %v765, %v795
    %v797 = vlaneseq
    %v798 = vshrl.u32 %v797, 7
    %v799 = vsub.s32 7, %v798
    %v800 = vrot.slane %v765, %v799
    %v801 = vlaneseq
    %v802 = vshrl.u32 %v801, 7
    %v803 = vsub.s32 0, %v802
    %v804 = vrot.slane %v766, %v803
    %v805 = vlaneseq
    %v806 = vshrl.u32 %v805, 7
    %v807 = vsub.s32 1, %v806
    %v808 = vrot.slane %v766, %v807
    %v827 = vunpack.c.l.b16 %v117
    %v828 = vunpack.c.h.b16 %v117
    %v829 = vunpack.c.l.b16 %v118
    %v830 = vunpack.c.h.b16 %v118
    %v831 = vunpack.c.l.b16 %v119
    %v832 = vunpack.c.h.b16 %v119
    %v833 = vunpack.c.l.b16 %v120
    %v834 = vunpack.c.h.b16 %v120
    %v835 = vunpack.c.l.b16 %v121
    %v836 = vunpack.c.h.b16 %v121
    %v837 = vunpack.c.l.b16 %v122
    %v838 = vunpack.c.h.b16 %v122
    %v839 = vunpack.c.l.b16 %v123
    %v840 = vunpack.c.h.b16 %v123
    %v841 = vunpack.c.l.b16 %v124
    %v842 = vunpack.c.h.b16 %v124
    %v843 = vpack.c.b16 %v835, %v827
    %v844 = vpack.c.b16 %v836, %v828
    %v845 = vpack.c.b16 %v837, %v829
    %v846 = vpack.c.b16 %v838, %v830
    %v847 = vpack.c.b16 %v839, %v831
    %v848 = vpack.c.b16 %v840, %v832
    %v849 = vpack.c.b16 %v841, %v833
    %v850 = vpack.c.b16 %v842, %v834
    %v1499 = vunpack.c.l.b16 %v125
    %v1500 = vunpack.c.h.b16 %v125
    %v1501 = vunpack.c.l.b16 %v126
    %v1502 = vunpack.c.h.b16 %v126
    %v1503 = vunpack.c.l.b16 %v127
    %v1504 = vunpack.c.h.b16 %v127
    %v1505 = vunpack.c.l.b16 %v128
    %v1506 = vunpack.c.h.b16 %v128
    %v1507 = vunpack.c.l.b16 %v129
    %v1508 = vunpack.c.h.b16 %v129
    %v1509 = vunpack.c.l.b16 %v130
    %v1510 = vunpack.c.h.b16 %v130
    %v1511 = vunpack.c.l.b16 %v131
    %v1512 = vunpack.c.h.b16 %v131
    %v1513 = vunpack.c.l.b16 %v132
    %v1514 = vunpack.c.h.b16 %v132
    %v1515 = vunpack.c.l.b16 %v133
    %v1516 = vunpack.c.h.b16 %v133
    %v1517 = vunpack.c.l.b16 %v134
    %v1518 = vunpack.c.h.b16 %v134
    %v1519 = vunpack.c.l.b16 %v135
    %v1520 = vunpack.c.h.b16 %v135
    %v1521 = vunpack.c.l.b16 %v136
    %v1522 = vunpack.c.h.b16 %v136
    %v1523 = vunpack.c.l.b16 %v137
    %v1524 = vunpack.c.h.b16 %v137
    %v1525 = vunpack.c.l.b16 %v138
    %v1526 = vunpack.c.h.b16 %v138
    %v1527 = vunpack.c.l.b16 %v139
    %v1528 = vunpack.c.h.b16 %v139
    %v1529 = vunpack.c.l.b16 %v140
    %v1530 = vunpack.c.h.b16 %v140
    %v1531 = vunpack.c.l.b16 %v141
    %v1532 = vunpack.c.h.b16 %v141
    %v1533 = vunpack.c.l.b16 %v142
    %v1534 = vunpack.c.h.b16 %v142
    %v1535 = vunpack.c.l.b16 %v143
    %v1536 = vunpack.c.h.b16 %v143
    %v1537 = vunpack.c.l.b16 %v144
    %v1538 = vunpack.c.h.b16 %v144
    %v1539 = vunpack.c.l.b16 %v145
    %v1540 = vunpack.c.h.b16 %v145
    %v1541 = vunpack.c.l.b16 %v146
    %v1542 = vunpack.c.h.b16 %v146
    %v1543 = vunpack.c.l.b16 %v147
    %v1544 = vunpack.c.h.b16 %v147
    %v1545 = vunpack.c.l.b16 %v148
    %v1546 = vunpack.c.h.b16 %v148
    %v1547 = vunpack.c.l.b16 %v149
    %v1548 = vunpack.c.h.b16 %v149
    %v1549 = vunpack.c.l.b16 %v150
    %v1550 = vunpack.c.h.b16 %v150
    %v1551 = vunpack.c.l.b16 %v151
    %v1552 = vunpack.c.h.b16 %v151
    %v1553 = vunpack.c.l.b16 %v152
    %v1554 = vunpack.c.h.b16 %v152
    %v1555 = vunpack.c.l.b16 %v153
    %v1556 = vunpack.c.h.b16 %v153
    %v1557 = vunpack.c.l.b16 %v154
    %v1558 = vunpack.c.h.b16 %v154
    %v1559 = vunpack.c.l.b16 %v155
    %v1560 = vunpack.c.h.b16 %v155
    %v1561 = vunpack.c.l.b16 %v156
    %v1562 = vunpack.c.h.b16 %v156
    %v1563 = vunpack.c.l.b16 %v157
    %v1564 = vunpack.c.h.b16 %v157
    %v1565 = vunpack.c.l.b16 %v158
    %v1566 = vunpack.c.h.b16 %v158
    %v1567 = vunpack.c.l.b16 %v159
    %v1568 = vunpack.c.h.b16 %v159
    %v1569 = vunpack.c.l.b16 %v160
    %v1570 = vunpack.c.h.b16 %v160
    %v1571 = vunpack.c.l.b16 %v161
    %v1572 = vunpack.c.h.b16 %v161
    %v1573 = vunpack.c.l.b16 %v162
    %v1574 = vunpack.c.h.b16 %v162
    %v1575 = vunpack.c.l.b16 %v163
    %v1576 = vunpack.c.h.b16 %v163
    %v1577 = vunpack.c.l.b16 %v164
    %v1578 = vunpack.c.h.b16 %v164
    %v1579 = vunpack.c.l.b16 %v165
    %v1580 = vunpack.c.h.b16 %v165
    %v1581 = vunpack.c.l.b16 %v166
    %v1582 = vunpack.c.h.b16 %v166
    %v1583 = vunpack.c.l.b16 %v167
    %v1584 = vunpack.c.h.b16 %v167
    %v1585 = vunpack.c.l.b16 %v168
    %v1586 = vunpack.c.h.b16 %v168
    %v1587 = vunpack.c.l.b16 %v169
    %v1588 = vunpack.c.h.b16 %v169
    %v1589 = vunpack.c.l.b16 %v170
    %v1590 = vunpack.c.h.b16 %v170
    %v1591 = vunpack.c.l.b16 %v171
    %v1592 = vunpack.c.h.b16 %v171
    %v1593 = vunpack.c.l.b16 %v172
    %v1594 = vunpack.c.h.b16 %v172
    %v1595 = vunpack.c.l.b16 %v173
    %v1596 = vunpack.c.h.b16 %v173
    %v1597 = vunpack.c.l.b16 %v174
    %v1598 = vunpack.c.h.b16 %v174
    %v1599 = vunpack.c.l.b16 %v175
    %v1600 = vunpack.c.h.b16 %v175
    %v1601 = vunpack.c.l.b16 %v176
    %v1602 = vunpack.c.h.b16 %v176
    %v1603 = vunpack.c.l.b16 %v177
    %v1604 = vunpack.c.h.b16 %v177
    %v1605 = vunpack.c.l.b16 %v178
    %v1606 = vunpack.c.h.b16 %v178
    %v1607 = vunpack.c.l.b16 %v179
    %v1608 = vunpack.c.h.b16 %v179
    %v1609 = vunpack.c.l.b16 %v180
    %v1610 = vunpack.c.h.b16 %v180
    %v1611 = vunpack.c.l.b16 %v181
    %v1612 = vunpack.c.h.b16 %v181
    %v1613 = vunpack.c.l.b16 %v182
    %v1614 = vunpack.c.h.b16 %v182
    %v1615 = vunpack.c.l.b16 %v183
    %v1616 = vunpack.c.h.b16 %v183
    %v1617 = vunpack.c.l.b16 %v184
    %v1618 = vunpack.c.h.b16 %v184
    %v1619 = vunpack.c.l.b16 %v185
    %v1620 = vunpack.c.h.b16 %v185
    %v1621 = vunpack.c.l.b16 %v186
    %v1622 = vunpack.c.h.b16 %v186
    %v1623 = vunpack.c.l.b16 %v187
    %v1624 = vunpack.c.h.b16 %v187
    %v1625 = vunpack.c.l.b16 %v188
    %v1626 = vunpack.c.h.b16 %v188
    %v1627 = vunpack.c.l.b16 %v189
    %v1628 = vunpack.c.h.b16 %v189
    %v1629 = vunpack.c.l.b16 %v190
    %v1630 = vunpack.c.h.b16 %v190
    %v1631 = vunpack.c.l.b16 %v191
    %v1632 = vunpack.c.h.b16 %v191
    %v1633 = vunpack.c.l.b16 %v192
    %v1634 = vunpack.c.h.b16 %v192
    %v1635 = vunpack.c.l.b16 %v193
    %v1636 = vunpack.c.h.b16 %v193
    %v1637 = vunpack.c.l.b16 %v194
    %v1638 = vunpack.c.h.b16 %v194
    %v1639 = vunpack.c.l.b16 %v195
    %v1640 = vunpack.c.h.b16 %v195
    %v1641 = vunpack.c.l.b16 %v196
    %v1642 = vunpack.c.h.b16 %v196
    %v1643 = vunpack.c.l.b16 %v197
    %v1644 = vunpack.c.h.b16 %v197
    %v1645 = vunpack.c.l.b16 %v198
    %v1646 = vunpack.c.h.b16 %v198
    %v1647 = vunpack.c.l.b16 %v199
    %v1648 = vunpack.c.h.b16 %v199
    %v1649 = vunpack.c.l.b16 %v200
    %v1650 = vunpack.c.h.b16 %v200
    %v1651 = vunpack.c.l.b16 %v201
    %v1652 = vunpack.c.h.b16 %v201
    %v1653 = vunpack.c.l.b16 %v202
    %v1654 = vunpack.c.h.b16 %v202
    %v1655 = vunpack.c.l.b16 %v203
    %v1656 = vunpack.c.h.b16 %v203
    %v1657 = vunpack.c.l.b16 %v204
    %v1658 = vunpack.c.h.b16 %v204
    %v1659 = vunpack.c.l.b16 %v205
    %v1660 = vunpack.c.h.b16 %v205
    %v1661 = vunpack.c.l.b16 %v206
    %v1662 = vunpack.c.h.b16 %v206
    %v1663 = vunpack.c.l.b16 %v207
    %v1664 = vunpack.c.h.b16 %v207
    %v1665 = vunpack.c.l.b16 %v208
    %v1666 = vunpack.c.h.b16 %v208
    %v1667 = vunpack.c.l.b16 %v209
    %v1668 = vunpack.c.h.b16 %v209
    %v1669 = vunpack.c.l.b16 %v210
    %v1670 = vunpack.c.h.b16 %v210
    %v1671 = vunpack.c.l.b16 %v211
    %v1672 = vunpack.c.h.b16 %v211
    %v1673 = vunpack.c.l.b16 %v212
    %v1674 = vunpack.c.h.b16 %v212
    %v1675 = vunpack.c.l.b16 %v213
    %v1676 = vunpack.c.h.b16 %v213
    %v1677 = vunpack.c.l.b16 %v214
    %v1678 = vunpack.c.h.b16 %v214
    %v1679 = vunpack.c.l.b16 %v215
    %v1680 = vunpack.c.h.b16 %v215
    %v1681 = vunpack.c.l.b16 %v216
    %v1682 = vunpack.c.h.b16 %v216
    %v1683 = vunpack.c.l.b16 %v217
    %v1684 = vunpack.c.h.b16 %v217
    %v1685 = vunpack.c.l.b16 %v218
    %v1686 = vunpack.c.h.b16 %v218
    %v1687 = vunpack.c.l.b16 %v219
    %v1688 = vunpack.c.h.b16 %v219
    %v1689 = vunpack.c.l.b16 %v220
    %v1690 = vunpack.c.h.b16 %v220
    %v1691 = vunpack.c.l.b16 %v221
    %v1692 = vunpack.c.h.b16 %v221
    %v1693 = vunpack.c.l.b16 %v222
    %v1694 = vunpack.c.h.b16 %v222
    %v1695 = vunpack.c.l.b16 %v223
    %v1696 = vunpack.c.h.b16 %v223
    %v1697 = vunpack.c.l.b16 %v224
    %v1698 = vunpack.c.h.b16 %v224
    %v1699 = vunpack.c.l.b16 %v225
    %v1700 = vunpack.c.h.b16 %v225
    %v1701 = vunpack.c.l.b16 %v226
    %v1702 = vunpack.c.h.b16 %v226
    %v1703 = vunpack.c.l.b16 %v227
    %v1704 = vunpack.c.h.b16 %v227
    %v1705 = vunpack.c.l.b16 %v228
    %v1706 = vunpack.c.h.b16 %v228
    %v1707 = vunpack.c.l.b16 %v229
    %v1708 = vunpack.c.h.b16 %v229
    %v1709 = vunpack.c.l.b16 %v230
    %v1710 = vunpack.c.h.b16 %v230
    %v1711 = vunpack.c.l.b16 %v231
    %v1712 = vunpack.c.h.b16 %v231
    %v1713 = vunpack.c.l.b16 %v232
    %v1714 = vunpack.c.h.b16 %v232
    %v1715 = vunpack.c.l.b16 %v233
    %v1716 = vunpack.c.h.b16 %v233
    %v1717 = vunpack.c.l.b16 %v234
    %v1718 = vunpack.c.h.b16 %v234
    %v1719 = vunpack.c.l.b16 %v235
    %v1720 = vunpack.c.h.b16 %v235
    %v1721 = vunpack.c.l.b16 %v236
    %v1722 = vunpack.c.h.b16 %v236
    %v1723 = vunpack.c.l.b16 %v237
    %v1724 = vunpack.c.h.b16 %v237
    %v1725 = vunpack.c.l.b16 %v238
    %v1726 = vunpack.c.h.b16 %v238
    %v1727 = vunpack.c.l.b16 %v239
    %v1728 = vunpack.c.h.b16 %v239
    %v1729 = vunpack.c.l.b16 %v240
    %v1730 = vunpack.c.h.b16 %v240
    %v1731 = vunpack.c.l.b16 %v241
    %v1732 = vunpack.c.h.b16 %v241
    %v1733 = vunpack.c.l.b16 %v242
    %v1734 = vunpack.c.h.b16 %v242
    %v1735 = vunpack.c.l.b16 %v243
    %v1736 = vunpack.c.h.b16 %v243
    %v1737 = vunpack.c.l.b16 %v244
    %v1738 = vunpack.c.h.b16 %v244
    %v1739 = vunpack.c.l.b16 %v245
    %v1740 = vunpack.c.h.b16 %v245
    %v1741 = vunpack.c.l.b16 %v246
    %v1742 = vunpack.c.h.b16 %v246
    %v1743 = vunpack.c.l.b16 %v247
    %v1744 = vunpack.c.h.b16 %v247
    %v1745 = vunpack.c.l.b16 %v248
    %v1746 = vunpack.c.h.b16 %v248
    %v1747 = vunpack.c.l.b16 %v249
    %v1748 = vunpack.c.h.b16 %v249
    %v1749 = vunpack.c.l.b16 %v250
    %v1750 = vunpack.c.h.b16 %v250
    %v1751 = vunpack.c.l.b16 %v251
    %v1752 = vunpack.c.h.b16 %v251
    %v1753 = vunpack.c.l.b16 %v252
    %v1754 = vunpack.c.h.b16 %v252
    %v1755 = vunpack.c.l.b16 %v253
    %v1756 = vunpack.c.h.b16 %v253
    %v1757 = vunpack.c.l.b16 %v254
    %v1758 = vunpack.c.h.b16 %v254
    %v1759 = vunpack.c.l.b16 %v255
    %v1760 = vunpack.c.h.b16 %v255
    %v1761 = vunpack.c.l.b16 %v256
    %v1762 = vunpack.c.h.b16 %v256
    %v1763 = vunpack.c.l.b16 %v257
    %v1764 = vunpack.c.h.b16 %v257
    %v1765 = vunpack.c.l.b16 %v258
    %v1766 = vunpack.c.h.b16 %v258
    %v1767 = vunpack.c.l.b16 %v259
    %v1768 = vunpack.c.h.b16 %v259
    %v1769 = vunpack.c.l.b16 %v260
    %v1770 = vunpack.c.h.b16 %v260
    %v1771 = vunpack.c.l.b16 %v261
    %v1772 = vunpack.c.h.b16 %v261
    %v1773 = vunpack.c.l.b16 %v262
    %v1774 = vunpack.c.h.b16 %v262
    %v1775 = vunpack.c.l.b16 %v263
    %v1776 = vunpack.c.h.b16 %v263
    %v1777 = vunpack.c.l.b16 %v264
    %v1778 = vunpack.c.h.b16 %v264
    %v1779 = vunpack.c.l.b16 %v265
    %v1780 = vunpack.c.h.b16 %v265
    %v1781 = vunpack.c.l.b16 %v266
    %v1782 = vunpack.c.h.b16 %v266
    %v1783 = vunpack.c.l.b16 %v267
    %v1784 = vunpack.c.h.b16 %v267
    %v1785 = vunpack.c.l.b16 %v268
    %v1786 = vunpack.c.h.b16 %v268
    %v1787 = vunpack.c.l.b16 %v269
    %v1788 = vunpack.c.h.b16 %v269
    %v1789 = vunpack.c.l.b16 %v270
    %v1790 = vunpack.c.h.b16 %v270
    %v1791 = vunpack.c.l.b16 %v271
    %v1792 = vunpack.c.h.b16 %v271
    %v1793 = vunpack.c.l.b16 %v272
    %v1794 = vunpack.c.h.b16 %v272
    %v1795 = vunpack.c.l.b16 %v273
    %v1796 = vunpack.c.h.b16 %v273
    %v1797 = vunpack.c.l.b16 %v274
    %v1798 = vunpack.c.h.b16 %v274
    %v1799 = vunpack.c.l.b16 %v275
    %v1800 = vunpack.c.h.b16 %v275
    %v1801 = vunpack.c.l.b16 %v276
    %v1802 = vunpack.c.h.b16 %v276
    %v1803 = vunpack.c.l.b16 %v277
    %v1804 = vunpack.c.h.b16 %v277
    %v1805 = vunpack.c.l.b16 %v278
    %v1806 = vunpack.c.h.b16 %v278
    %v1807 = vunpack.c.l.b16 %v279
    %v1808 = vunpack.c.h.b16 %v279
    %v1809 = vunpack.c.l.b16 %v280
    %v1810 = vunpack.c.h.b16 %v280
    %v1811 = vunpack.c.l.b16 %v281
    %v1812 = vunpack.c.h.b16 %v281
    %v1813 = vunpack.c.l.b16 %v282
    %v1814 = vunpack.c.h.b16 %v282
    %v1815 = vunpack.c.l.b16 %v283
    %v1816 = vunpack.c.h.b16 %v283
    %v1817 = vunpack.c.l.b16 %v284
    %v1818 = vunpack.c.h.b16 %v284
    %v1819 = vunpack.c.l.b16 %v285
    %v1820 = vunpack.c.h.b16 %v285
    %v1821 = vunpack.c.l.b16 %v286
    %v1822 = vunpack.c.h.b16 %v286
    %v1823 = vunpack.c.l.b16 %v287
    %v1824 = vunpack.c.h.b16 %v287
    %v1825 = vunpack.c.l.b16 %v288
    %v1826 = vunpack.c.h.b16 %v288
    %v1827 = vunpack.c.l.b16 %v289
    %v1828 = vunpack.c.h.b16 %v289
    %v1829 = vunpack.c.l.b16 %v290
    %v1830 = vunpack.c.h.b16 %v290
    %v1831 = vunpack.c.l.b16 %v291
    %v1832 = vunpack.c.h.b16 %v291
    %v1833 = vunpack.c.l.b16 %v292
    %v1834 = vunpack.c.h.b16 %v292
    %v1835 = vunpack.c.l.b16 %v293
    %v1836 = vunpack.c.h.b16 %v293
    %v1837 = vunpack.c.l.b16 %v294
    %v1838 = vunpack.c.h.b16 %v294
    %v1839 = vunpack.c.l.b16 %v295
    %v1840 = vunpack.c.h.b16 %v295
    %v1841 = vunpack.c.l.b16 %v296
    %v1842 = vunpack.c.h.b16 %v296
    %v1843 = vunpack.c.l.b16 %v297
    %v1844 = vunpack.c.h.b16 %v297
    %v1845 = vunpack.c.l.b16 %v298
    %v1846 = vunpack.c.h.b16 %v298
    %v1847 = vunpack.c.l.b16 %v299
    %v1848 = vunpack.c.h.b16 %v299
    %v1849 = vunpack.c.l.b16 %v300
    %v1850 = vunpack.c.h.b16 %v300
    %v1851 = vunpack.c.l.b16 %v301
    %v1852 = vunpack.c.h.b16 %v301
    %v1853 = vunpack.c.l.b16 %v302
    %v1854 = vunpack.c.h.b16 %v302
    %v1855 = vunpack.c.l.b16 %v303
    %v1856 = vunpack.c.h.b16 %v303
    %v1857 = vunpack.c.l.b16 %v304
    %v1858 = vunpack.c.h.b16 %v304
    %v1859 = vunpack.c.l.b16 %v305
    %v1860 = vunpack.c.h.b16 %v305
    %v1861 = vunpack.c.l.b16 %v306
    %v1862 = vunpack.c.h.b16 %v306
    %v1863 = vunpack.c.l.b16 %v307
    %v1864 = vunpack.c.h.b16 %v307
    %v1865 = vunpack.c.l.b16 %v308
    %v1866 = vunpack.c.h.b16 %v308
    %v1867 = vunpack.c.l.b16 %v309
    %v1868 = vunpack.c.h.b16 %v309
    %v1869 = vunpack.c.l.b16 %v310
    %v1870 = vunpack.c.h.b16 %v310
    %v1871 = vunpack.c.l.b16 %v311
    %v1872 = vunpack.c.h.b16 %v311
    %v1873 = vunpack.c.l.b16 %v312
    %v1874 = vunpack.c.h.b16 %v312
    %v1875 = vunpack.c.l.b16 %v313
    %v1876 = vunpack.c.h.b16 %v313
    %v1877 = vunpack.c.l.b16 %v314
    %v1878 = vunpack.c.h.b16 %v314
    %v1879 = vunpack.c.l.b16 %v315
    %v1880 = vunpack.c.h.b16 %v315
    %v1881 = vunpack.c.l.b16 %v316
    %v1882 = vunpack.c.h.b16 %v316
    %v1883 = vunpack.c.l.b16 %v317
    %v1884 = vunpack.c.h.b16 %v317
    %v1885 = vunpack.c.l.b16 %v318
    %v1886 = vunpack.c.h.b16 %v318
    %v1887 = vunpack.c.l.b16 %v319
    %v1888 = vunpack.c.h.b16 %v319
    %v1889 = vunpack.c.l.b16 %v320
    %v1890 = vunpack.c.h.b16 %v320
    %v1891 = vunpack.c.l.b16 %v321
    %v1892 = vunpack.c.h.b16 %v321
    %v1893 = vunpack.c.l.b16 %v322
    %v1894 = vunpack.c.h.b16 %v322
    %v1895 = vunpack.c.l.b16 %v323
    %v1896 = vunpack.c.h.b16 %v323
    %v1897 = vunpack.c.l.b16 %v324
    %v1898 = vunpack.c.h.b16 %v324
    %v1899 = vunpack.c.l.b16 %v325
    %v1900 = vunpack.c.h.b16 %v325
    %v1901 = vunpack.c.l.b16 %v326
    %v1902 = vunpack.c.h.b16 %v326
    %v1903 = vunpack.c.l.b16 %v327
    %v1904 = vunpack.c.h.b16 %v327
    %v1905 = vunpack.c.l.b16 %v328
    %v1906 = vunpack.c.h.b16 %v328
    %v1907 = vunpack.c.l.b16 %v329
    %v1908 = vunpack.c.h.b16 %v329
    %v1909 = vunpack.c.l.b16 %v330
    %v1910 = vunpack.c.h.b16 %v330
    %v1911 = vunpack.c.l.b16 %v331
    %v1912 = vunpack.c.h.b16 %v331
    %v1913 = vunpack.c.l.b16 %v332
    %v1914 = vunpack.c.h.b16 %v332
    %v1915 = vunpack.c.l.b16 %v333
    %v1916 = vunpack.c.h.b16 %v333
    %v1917 = vunpack.c.l.b16 %v334
    %v1918 = vunpack.c.h.b16 %v334
    %v1919 = vunpack.c.l.b16 %v335
    %v1920 = vunpack.c.h.b16 %v335
    %v1921 = vunpack.c.l.b16 %v336
    %v1922 = vunpack.c.h.b16 %v336
    %v1923 = vunpack.c.l.b16 %v337
    %v1924 = vunpack.c.h.b16 %v337
    %v1925 = vunpack.c.l.b16 %v338
    %v1926 = vunpack.c.h.b16 %v338
    %v1927 = vunpack.c.l.b16 %v339
    %v1928 = vunpack.c.h.b16 %v339
    %v1929 = vunpack.c.l.b16 %v340
    %v1930 = vunpack.c.h.b16 %v340
    %v1931 = vunpack.c.l.b16 %v341
    %v1932 = vunpack.c.h.b16 %v341
    %v1933 = vunpack.c.l.b16 %v342
    %v1934 = vunpack.c.h.b16 %v342
    %v1935 = vunpack.c.l.b16 %v343
    %v1936 = vunpack.c.h.b16 %v343
    %v1937 = vunpack.c.l.b16 %v344
    %v1938 = vunpack.c.h.b16 %v344
    %v1939 = vunpack.c.l.b16 %v345
    %v1940 = vunpack.c.h.b16 %v345
    %v1941 = vunpack.c.l.b16 %v346
    %v1942 = vunpack.c.h.b16 %v346
    %v1943 = vunpack.c.l.b16 %v347
    %v1944 = vunpack.c.h.b16 %v347
    %v1945 = vunpack.c.l.b16 %v348
    %v1946 = vunpack.c.h.b16 %v348
    %v1947 = vunpack.c.l.b16 %v349
    %v1948 = vunpack.c.h.b16 %v349
    %v1949 = vunpack.c.l.b16 %v350
    %v1950 = vunpack.c.h.b16 %v350
    %v1951 = vunpack.c.l.b16 %v351
    %v1952 = vunpack.c.h.b16 %v351
    %v1953 = vunpack.c.l.b16 %v352
    %v1954 = vunpack.c.h.b16 %v352
    %v1955 = vunpack.c.l.b16 %v353
    %v1956 = vunpack.c.h.b16 %v353
    %v1957 = vunpack.c.l.b16 %v354
    %v1958 = vunpack.c.h.b16 %v354
    %v1959 = vunpack.c.l.b16 %v355
    %v1960 = vunpack.c.h.b16 %v355
    %v1961 = vunpack.c.l.b16 %v356
    %v1962 = vunpack.c.h.b16 %v356
    %v1963 = vunpack.c.l.b16 %v357
    %v1964 = vunpack.c.h.b16 %v357
    %v1965 = vunpack.c.l.b16 %v358
    %v1966 = vunpack.c.h.b16 %v358
    %v1967 = vunpack.c.l.b16 %v359
    %v1968 = vunpack.c.h.b16 %v359
    %v1969 = vunpack.c.l.b16 %v360
    %v1970 = vunpack.c.h.b16 %v360
    %v1971 = vunpack.c.l.b16 %v361
    %v1972 = vunpack.c.h.b16 %v361
    %v1973 = vunpack.c.l.b16 %v362
    %v1974 = vunpack.c.h.b16 %v362
    %v1975 = vunpack.c.l.b16 %v363
    %v1976 = vunpack.c.h.b16 %v363
    %v1977 = vunpack.c.l.b16 %v364
    %v1978 = vunpack.c.h.b16 %v364
    %v1979 = vunpack.c.l.b16 %v365
    %v1980 = vunpack.c.h.b16 %v365
    %v1981 = vunpack.c.l.b16 %v366
    %v1982 = vunpack.c.h.b16 %v366
    %v1983 = vunpack.c.l.b16 %v367
    %v1984 = vunpack.c.h.b16 %v367
    %v1985 = vunpack.c.l.b16 %v368
    %v1986 = vunpack.c.h.b16 %v368
    %v1987 = vunpack.c.l.b16 %v369
    %v1988 = vunpack.c.h.b16 %v369
    %v1989 = vunpack.c.l.b16 %v370
    %v1990 = vunpack.c.h.b16 %v370
    %v1991 = vunpack.c.l.b16 %v371
    %v1992 = vunpack.c.h.b16 %v371
    %v1993 = vunpack.c.l.b16 %v372
    %v1994 = vunpack.c.h.b16 %v372
    %v1995 = vunpack.c.l.b16 %v373
    %v1996 = vunpack.c.h.b16 %v373
    %v1997 = vunpack.c.l.b16 %v374
    %v1998 = vunpack.c.h.b16 %v374
    %v1999 = vunpack.c.l.b16 %v375
    %v2000 = vunpack.c.h.b16 %v375
    %v2001 = vunpack.c.l.b16 %v376
    %v2002 = vunpack.c.h.b16 %v376
    %v2003 = vunpack.c.l.b16 %v377
    %v2004 = vunpack.c.h.b16 %v377
    %v2005 = vunpack.c.l.b16 %v378
    %v2006 = vunpack.c.h.b16 %v378
    %v2007 = vunpack.c.l.b16 %v379
    %v2008 = vunpack.c.h.b16 %v379
    %v2009 = vunpack.c.l.b16 %v380
    %v2010 = vunpack.c.h.b16 %v380
    %v2011 = vunpack.c.l.b16 %v381
    %v2012 = vunpack.c.h.b16 %v381
    %v2013 = vunpack.c.l.b16 %v382
    %v2014 = vunpack.c.h.b16 %v382
    %v2015 = vunpack.c.l.b16 %v383
    %v2016 = vunpack.c.h.b16 %v383
    %v2017 = vunpack.c.l.b16 %v384
    %v2018 = vunpack.c.h.b16 %v384
    %v2019 = vunpack.c.l.b16 %v385
    %v2020 = vunpack.c.h.b16 %v385
    %v2021 = vunpack.c.l.b16 %v386
    %v2022 = vunpack.c.h.b16 %v386
    %v2023 = vunpack.c.l.b16 %v387
    %v2024 = vunpack.c.h.b16 %v387
    %v2025 = vunpack.c.l.b16 %v388
    %v2026 = vunpack.c.h.b16 %v388
    %v2027 = vunpack.c.l.b16 %v389
    %v2028 = vunpack.c.h.b16 %v389
    %v2029 = vunpack.c.l.b16 %v390
    %v2030 = vunpack.c.h.b16 %v390
    %v2031 = vunpack.c.l.b16 %v391
    %v2032 = vunpack.c.h.b16 %v391
    %v2033 = vunpack.c.l.b16 %v392
    %v2034 = vunpack.c.h.b16 %v392
    %v2035 = vunpack.c.l.b16 %v393
    %v2036 = vunpack.c.h.b16 %v393
    %v2037 = vunpack.c.l.b16 %v394
    %v2038 = vunpack.c.h.b16 %v394
    %v2039 = vunpack.c.l.b16 %v395
    %v2040 = vunpack.c.h.b16 %v395
    %v2041 = vunpack.c.l.b16 %v396
    %v2042 = vunpack.c.h.b16 %v396
    %v2043 = vunpack.c.l.b16 %v397
    %v2044 = vunpack.c.h.b16 %v397
    %v2045 = vunpack.c.l.b16 %v398
    %v2046 = vunpack.c.h.b16 %v398
    %v2047 = vunpack.c.l.b16 %v399
    %v2048 = vunpack.c.h.b16 %v399
    %v2049 = vunpack.c.l.b16 %v400
    %v2050 = vunpack.c.h.b16 %v400
    %v2051 = vunpack.c.l.b16 %v401
    %v2052 = vunpack.c.h.b16 %v401
    %v2053 = vunpack.c.l.b16 %v402
    %v2054 = vunpack.c.h.b16 %v402
    %v2055 = vunpack.c.l.b16 %v403
    %v2056 = vunpack.c.h.b16 %v403
    %v2057 = vunpack.c.l.b16 %v404
    %v2058 = vunpack.c.h.b16 %v404
    %v2059 = vunpack.c.l.b16 %v405
    %v2060 = vunpack.c.h.b16 %v405
    %v2061 = vunpack.c.l.b16 %v406
    %v2062 = vunpack.c.h.b16 %v406
    %v2063 = vunpack.c.l.b16 %v407
    %v2064 = vunpack.c.h.b16 %v407
    %v2065 = vunpack.c.l.b16 %v408
    %v2066 = vunpack.c.h.b16 %v408
    %v2067 = vunpack.c.l.b16 %v409
    %v2068 = vunpack.c.h.b16 %v409
    %v2069 = vunpack.c.l.b16 %v410
    %v2070 = vunpack.c.h.b16 %v410
    %v2071 = vunpack.c.l.b16 %v411
    %v2072 = vunpack.c.h.b16 %v411
    %v2073 = vunpack.c.l.b16 %v412
    %v2074 = vunpack.c.h.b16 %v412
    %v2075 = vunpack.c.l.b16 %v413
    %v2076 = vunpack.c.h.b16 %v413
    %v2077 = vunpack.c.l.b16 %v414
    %v2078 = vunpack.c.h.b16 %v414
    %v2079 = vunpack.c.l.b16 %v415
    %v2080 = vunpack.c.h.b16 %v415
    %v2081 = vunpack.c.l.b16 %v416
    %v2082 = vunpack.c.h.b16 %v416
    %v2083 = vunpack.c.l.b16 %v417
    %v2084 = vunpack.c.h.b16 %v417
    %v2085 = vunpack.c.l.b16 %v418
    %v2086 = vunpack.c.h.b16 %v418
    %v2087 = vunpack.c.l.b16 %v419
    %v2088 = vunpack.c.h.b16 %v419
    %v2089 = vunpack.c.l.b16 %v420
    %v2090 = vunpack.c.h.b16 %v420
    %v2091 = vunpack.c.l.b16 %v421
    %v2092 = vunpack.c.h.b16 %v421
    %v2093 = vunpack.c.l.b16 %v422
    %v2094 = vunpack.c.h.b16 %v422
    %v2095 = vunpack.c.l.b16 %v423
    %v2096 = vunpack.c.h.b16 %v423
    %v2097 = vunpack.c.l.b16 %v424
    %v2098 = vunpack.c.h.b16 %v424
    %v2099 = vunpack.c.l.b16 %v425
    %v2100 = vunpack.c.h.b16 %v425
    %v2101 = vunpack.c.l.b16 %v426
    %v2102 = vunpack.c.h.b16 %v426
    %v2103 = vunpack.c.l.b16 %v427
    %v2104 = vunpack.c.h.b16 %v427
    %v2105 = vunpack.c.l.b16 %v428
    %v2106 = vunpack.c.h.b16 %v428
    %v2107 = vunpack.c.l.b16 %v429
    %v2108 = vunpack.c.h.b16 %v429
    %v2109 = vunpack.c.l.b16 %v430
    %v2110 = vunpack.c.h.b16 %v430
    %v2111 = vunpack.c.l.b16 %v431
    %v2112 = vunpack.c.h.b16 %v431
    %v2113 = vunpack.c.l.b16 %v432
    %v2114 = vunpack.c.h.b16 %v432
    %v2115 = vunpack.c.l.b16 %v433
    %v2116 = vunpack.c.h.b16 %v433
    %v2117 = vunpack.c.l.b16 %v434
    %v2118 = vunpack.c.h.b16 %v434
    %v2119 = vunpack.c.l.b16 %v435
    %v2120 = vunpack.c.h.b16 %v435
    %v2121 = vunpack.c.l.b16 %v436
    %v2122 = vunpack.c.h.b16 %v436
    %v2123 = vunpack.c.l.b16 %v437
    %v2124 = vunpack.c.h.b16 %v437
    %v2125 = vunpack.c.l.b16 %v438
    %v2126 = vunpack.c.h.b16 %v438
    %v2127 = vunpack.c.l.b16 %v439
    %v2128 = vunpack.c.h.b16 %v439
    %v2129 = vunpack.c.l.b16 %v440
    %v2130 = vunpack.c.h.b16 %v440
    %v2131 = vunpack.c.l.b16 %v441
    %v2132 = vunpack.c.h.b16 %v441
    %v2133 = vunpack.c.l.b16 %v442
    %v2134 = vunpack.c.h.b16 %v442
    %v2135 = vunpack.c.l.b16 %v443
    %v2136 = vunpack.c.h.b16 %v443
    %v2137 = vunpack.c.l.b16 %v444
    %v2138 = vunpack.c.h.b16 %v444
    %v2139 = vunpack.c.l.b16 %v445
    %v2140 = vunpack.c.h.b16 %v445
    %v2141 = vunpack.c.l.b16 %v446
    %v2142 = vunpack.c.h.b16 %v446
    %v2143 = vunpack.c.l.b16 %v447
    %v2144 = vunpack.c.h.b16 %v447
    %v2145 = vunpack.c.l.b16 %v448
    %v2146 = vunpack.c.h.b16 %v448
    %v2147 = vunpack.c.l.b16 %v449
    %v2148 = vunpack.c.h.b16 %v449
    %v2149 = vunpack.c.l.b16 %v450
    %v2150 = vunpack.c.h.b16 %v450
    %v2151 = vunpack.c.l.b16 %v451
    %v2152 = vunpack.c.h.b16 %v451
    %v2153 = vunpack.c.l.b16 %v452
    %v2154 = vunpack.c.h.b16 %v452
    %v2155 = vunpack.c.l.b16 %v453
    %v2156 = vunpack.c.h.b16 %v453
    %v2157 = vunpack.c.l.b16 %v454
    %v2158 = vunpack.c.h.b16 %v454
    %v2159 = vunpack.c.l.b16 %v455
    %v2160 = vunpack.c.h.b16 %v455
    %v2161 = vunpack.c.l.b16 %v456
    %v2162 = vunpack.c.h.b16 %v456
    %v2163 = vunpack.c.l.b16 %v457
    %v2164 = vunpack.c.h.b16 %v457
    %v2165 = vunpack.c.l.b16 %v458
    %v2166 = vunpack.c.h.b16 %v458
    %v2167 = vunpack.c.l.b16 %v459
    %v2168 = vunpack.c.h.b16 %v459
    %v2169 = vunpack.c.l.b16 %v460
    %v2170 = vunpack.c.h.b16 %v460
    %v2171 = vunpack.c.l.b16 %v461
    %v2172 = vunpack.c.h.b16 %v461
    %v2173 = vunpack.c.l.b16 %v462
    %v2174 = vunpack.c.h.b16 %v462
    %v2175 = vunpack.c.l.b16 %v463
    %v2176 = vunpack.c.h.b16 %v463
    %v2177 = vunpack.c.l.b16 %v464
    %v2178 = vunpack.c.h.b16 %v464
    %v2179 = vunpack.c.l.b16 %v465
    %v2180 = vunpack.c.h.b16 %v465
    %v2181 = vunpack.c.l.b16 %v466
    %v2182 = vunpack.c.h.b16 %v466
    %v2183 = vunpack.c.l.b16 %v467
    %v2184 = vunpack.c.h.b16 %v467
    %v2185 = vunpack.c.l.b16 %v468
    %v2186 = vunpack.c.h.b16 %v468
    %v2187 = vunpack.c.l.b16 %v469
    %v2188 = vunpack.c.h.b16 %v469
    %v2189 = vunpack.c.l.b16 %v470
    %v2190 = vunpack.c.h.b16 %v470
    %v2191 = vunpack.c.l.b16 %v471
    %v2192 = vunpack.c.h.b16 %v471
    %v2193 = vunpack.c.l.b16 %v472
    %v2194 = vunpack.c.h.b16 %v472
    %v2195 = vunpack.c.l.b16 %v473
    %v2196 = vunpack.c.h.b16 %v473
    %v2197 = vunpack.c.l.b16 %v474
    %v2198 = vunpack.c.h.b16 %v474
    %v2199 = vunpack.c.l.b16 %v475
    %v2200 = vunpack.c.h.b16 %v475
    %v2201 = vunpack.c.l.b16 %v476
    %v2202 = vunpack.c.h.b16 %v476
    %v2203 = vunpack.c.l.b16 %v477
    %v2204 = vunpack.c.h.b16 %v477
    %v2205 = vunpack.c.l.b16 %v478
    %v2206 = vunpack.c.h.b16 %v478
    %v2207 = vunpack.c.l.b16 %v479
    %v2208 = vunpack.c.h.b16 %v479
    %v2209 = vunpack.c.l.b16 %v480
    %v2210 = vunpack.c.h.b16 %v480
    %v2211 = vunpack.c.l.b16 %v481
    %v2212 = vunpack.c.h.b16 %v481
    %v2213 = vunpack.c.l.b16 %v482
    %v2214 = vunpack.c.h.b16 %v482
    %v2215 = vunpack.c.l.b16 %v483
    %v2216 = vunpack.c.h.b16 %v483
    %v2217 = vunpack.c.l.b16 %v484
    %v2218 = vunpack.c.h.b16 %v484
    %v2219 = vunpack.c.l.b16 %v485
    %v2220 = vunpack.c.h.b16 %v485
    %v2221 = vunpack.c.l.b16 %v486
    %v2222 = vunpack.c.h.b16 %v486
    %v2223 = vunpack.c.l.b16 %v487
    %v2224 = vunpack.c.h.b16 %v487
    %v2225 = vunpack.c.l.b16 %v488
    %v2226 = vunpack.c.h.b16 %v488
    %v2227 = vunpack.c.l.b16 %v489
    %v2228 = vunpack.c.h.b16 %v489
    %v2229 = vunpack.c.l.b16 %v490
    %v2230 = vunpack.c.h.b16 %v490
    %v2231 = vunpack.c.l.b16 %v491
    %v2232 = vunpack.c.h.b16 %v491
    %v2233 = vunpack.c.l.b16 %v492
    %v2234 = vunpack.c.h.b16 %v492
    %v2235 = vunpack.c.l.b16 %v493
    %v2236 = vunpack.c.h.b16 %v493
    %v2237 = vunpack.c.l.b16 %v494
    %v2238 = vunpack.c.h.b16 %v494
    %v2239 = vunpack.c.l.b16 %v495
    %v2240 = vunpack.c.h.b16 %v495
    %v2241 = vunpack.c.l.b16 %v496
    %v2242 = vunpack.c.h.b16 %v496
    %v2243 = vunpack.c.l.b16 %v497
    %v2244 = vunpack.c.h.b16 %v497
    %v2245 = vunpack.c.l.b16 %v498
    %v2246 = vunpack.c.h.b16 %v498
    %v2247 = vunpack.c.l.b16 %v499
    %v2248 = vunpack.c.h.b16 %v499
    %v2249 = vunpack.c.l.b16 %v500
    %v2250 = vunpack.c.h.b16 %v500
    %v2251 = vunpack.c.l.b16 %v501
    %v2252 = vunpack.c.h.b16 %v501
    %v2253 = vunpack.c.l.b16 %v502
    %v2254 = vunpack.c.h.b16 %v502
    %v2255 = vunpack.c.l.b16 %v503
    %v2256 = vunpack.c.h.b16 %v503
    %v2257 = vunpack.c.l.b16 %v504
    %v2258 = vunpack.c.h.b16 %v504
    %v2259 = vunpack.c.l.b16 %v505
    %v2260 = vunpack.c.h.b16 %v505
    %v2261 = vunpack.c.l.b16 %v506
    %v2262 = vunpack.c.h.b16 %v506
    %v2263 = vunpack.c.l.b16 %v507
    %v2264 = vunpack.c.h.b16 %v507
    %v2265 = vunpack.c.l.b16 %v508
    %v2266 = vunpack.c.h.b16 %v508
    %v2267 = vunpack.c.l.b16 %v509
    %v2268 = vunpack.c.h.b16 %v509
    %v2269 = vunpack.c.l.b16 %v510
    %v2270 = vunpack.c.h.b16 %v510
    %v2271 = vunpack.c.l.b16 %v511
    %v2272 = vunpack.c.h.b16 %v511
    %v2273 = vunpack.c.l.b16 %v512
    %v2274 = vunpack.c.h.b16 %v512
    %v2275 = vunpack.c.l.b16 %v513
    %v2276 = vunpack.c.h.b16 %v513
    %v2277 = vunpack.c.l.b16 %v514
    %v2278 = vunpack.c.h.b16 %v514
    %v2279 = vunpack.c.l.b16 %v515
    %v2280 = vunpack.c.h.b16 %v515
    %v2281 = vunpack.c.l.b16 %v516
    %v2282 = vunpack.c.h.b16 %v516
    %v2283 = vunpack.c.l.b16 %v517
    %v2284 = vunpack.c.h.b16 %v517
    %v2285 = vunpack.c.l.b16 %v518
    %v2286 = vunpack.c.h.b16 %v518
    %v2287 = vunpack.c.l.b16 %v519
    %v2288 = vunpack.c.h.b16 %v519
    %v2289 = vunpack.c.l.b16 %v520
    %v2290 = vunpack.c.h.b16 %v520
    %v2291 = vunpack.c.l.b16 %v521
    %v2292 = vunpack.c.h.b16 %v521
    %v2293 = vunpack.c.l.b16 %v522
    %v2294 = vunpack.c.h.b16 %v522
    %v2295 = vunpack.c.l.b16 %v523
    %v2296 = vunpack.c.h.b16 %v523
    %v2297 = vunpack.c.l.b16 %v524
    %v2298 = vunpack.c.h.b16 %v524
    %v2299 = vunpack.c.l.b16 %v525
    %v2300 = vunpack.c.h.b16 %v525
    %v2301 = vunpack.c.l.b16 %v526
    %v2302 = vunpack.c.h.b16 %v526
    %v2303 = vunpack.c.l.b16 %v527
    %v2304 = vunpack.c.h.b16 %v527
    %v2305 = vunpack.c.l.b16 %v528
    %v2306 = vunpack.c.h.b16 %v528
    %v2307 = vunpack.c.l.b16 %v529
    %v2308 = vunpack.c.h.b16 %v529
    %v2309 = vunpack.c.l.b16 %v530
    %v2310 = vunpack.c.h.b16 %v530
    %v2311 = vunpack.c.l.b16 %v531
    %v2312 = vunpack.c.h.b16 %v531
    %v2313 = vunpack.c.l.b16 %v532
    %v2314 = vunpack.c.h.b16 %v532
    %v2315 = vunpack.c.l.b16 %v533
    %v2316 = vunpack.c.h.b16 %v533
    %v2317 = vunpack.c.l.b16 %v534
    %v2318 = vunpack.c.h.b16 %v534
    %v2319 = vunpack.c.l.b16 %v535
    %v2320 = vunpack.c.h.b16 %v535
    %v2321 = vunpack.c.l.b16 %v536
    %v2322 = vunpack.c.h.b16 %v536
    %v2323 = vunpack.c.l.b16 %v537
    %v2324 = vunpack.c.h.b16 %v537
    %v2325 = vunpack.c.l.b16 %v538
    %v2326 = vunpack.c.h.b16 %v538
    %v2327 = vunpack.c.l.b16 %v539
    %v2328 = vunpack.c.h.b16 %v539
    %v2329 = vunpack.c.l.b16 %v540
    %v2330 = vunpack.c.h.b16 %v540
    %v2331 = vunpack.c.l.b16 %v541
    %v2332 = vunpack.c.h.b16 %v541
    %v2333 = vunpack.c.l.b16 %v542
    %v2334 = vunpack.c.h.b16 %v542
    %v2335 = vunpack.c.l.b16 %v543
    %v2336 = vunpack.c.h.b16 %v543
    %v2337 = vunpack.c.l.b16 %v544
    %v2338 = vunpack.c.h.b16 %v544
    %v2339 = vunpack.c.l.b16 %v545
    %v2340 = vunpack.c.h.b16 %v545
    %v2341 = vunpack.c.l.b16 %v546
    %v2342 = vunpack.c.h.b16 %v546
    %v2343 = vunpack.c.l.b16 %v547
    %v2344 = vunpack.c.h.b16 %v547
    %v2345 = vunpack.c.l.b16 %v548
    %v2346 = vunpack.c.h.b16 %v548
    %v2347 = vunpack.c.l.b16 %v549
    %v2348 = vunpack.c.h.b16 %v549
    %v2349 = vunpack.c.l.b16 %v550
    %v2350 = vunpack.c.h.b16 %v550
    %v2351 = vunpack.c.l.b16 %v551
    %v2352 = vunpack.c.h.b16 %v551
    %v2353 = vunpack.c.l.b16 %v552
    %v2354 = vunpack.c.h.b16 %v552
    %v2355 = vunpack.c.l.b16 %v553
    %v2356 = vunpack.c.h.b16 %v553
    %v2357 = vunpack.c.l.b16 %v554
    %v2358 = vunpack.c.h.b16 %v554
    %v2359 = vunpack.c.l.b16 %v555
    %v2360 = vunpack.c.h.b16 %v555
    %v2361 = vunpack.c.l.b16 %v556
    %v2362 = vunpack.c.h.b16 %v556
    %v2363 = vunpack.c.l.b16 %v557
    %v2364 = vunpack.c.h.b16 %v557
    %v2365 = vunpack.c.l.b16 %v558
    %v2366 = vunpack.c.h.b16 %v558
    %v2367 = vunpack.c.l.b16 %v559
    %v2368 = vunpack.c.h.b16 %v559
    %v2369 = vunpack.c.l.b16 %v560
    %v2370 = vunpack.c.h.b16 %v560
    %v2371 = vunpack.c.l.b16 %v561
    %v2372 = vunpack.c.h.b16 %v561
    %v2373 = vunpack.c.l.b16 %v562
    %v2374 = vunpack.c.h.b16 %v562
    %v2375 = vunpack.c.l.b16 %v563
    %v2376 = vunpack.c.h.b16 %v563
    %v2377 = vunpack.c.l.b16 %v564
    %v2378 = vunpack.c.h.b16 %v564
    %v2379 = vunpack.c.l.b16 %v565
    %v2380 = vunpack.c.h.b16 %v565
    %v2381 = vunpack.c.l.b16 %v566
    %v2382 = vunpack.c.h.b16 %v566
    %v2383 = vunpack.c.l.b16 %v567
    %v2384 = vunpack.c.h.b16 %v567
    %v2385 = vunpack.c.l.b16 %v568
    %v2386 = vunpack.c.h.b16 %v568
    %v2387 = vunpack.c.l.b16 %v569
    %v2388 = vunpack.c.h.b16 %v569
    %v2389 = vunpack.c.l.b16 %v570
    %v2390 = vunpack.c.h.b16 %v570
    %v2391 = vunpack.c.l.b16 %v571
    %v2392 = vunpack.c.h.b16 %v571
    %v2393 = vunpack.c.l.b16 %v572
    %v2394 = vunpack.c.h.b16 %v572
    %v2395 = vunpack.c.l.b16 %v573
    %v2396 = vunpack.c.h.b16 %v573
    %v2397 = vunpack.c.l.b16 %v574
    %v2398 = vunpack.c.h.b16 %v574
    %v2399 = vunpack.c.l.b16 %v575
    %v2400 = vunpack.c.h.b16 %v575
    %v2401 = vunpack.c.l.b16 %v576
    %v2402 = vunpack.c.h.b16 %v576
    %v2403 = vunpack.c.l.b16 %v577
    %v2404 = vunpack.c.h.b16 %v577
    %v2405 = vunpack.c.l.b16 %v578
    %v2406 = vunpack.c.h.b16 %v578
    %v2407 = vunpack.c.l.b16 %v579
    %v2408 = vunpack.c.h.b16 %v579
    %v2409 = vunpack.c.l.b16 %v580
    %v2410 = vunpack.c.h.b16 %v580
    %v2411 = vunpack.c.l.b16 %v581
    %v2412 = vunpack.c.h.b16 %v581
    %v2413 = vunpack.c.l.b16 %v582
    %v2414 = vunpack.c.h.b16 %v582
    %v2415 = vunpack.c.l.b16 %v583
    %v2416 = vunpack.c.h.b16 %v583
    %v2417 = vunpack.c.l.b16 %v584
    %v2418 = vunpack.c.h.b16 %v584
    %v2419 = vunpack.c.l.b16 %v585
    %v2420 = vunpack.c.h.b16 %v585
    %v2421 = vunpack.c.l.b16 %v586
    %v2422 = vunpack.c.h.b16 %v586
    %v2423 = vunpack.c.l.b16 %v587
    %v2424 = vunpack.c.h.b16 %v587
    %v2425 = vunpack.c.l.b16 %v588
    %v2426 = vunpack.c.h.b16 %v588
    %v2427 = vunpack.c.l.b16 %v589
    %v2428 = vunpack.c.h.b16 %v589
    %v2429 = vunpack.c.l.b16 %v590
    %v2430 = vunpack.c.h.b16 %v590
    %v2431 = vunpack.c.l.b16 %v591
    %v2432 = vunpack.c.h.b16 %v591
    %v2433 = vunpack.c.l.b16 %v592
    %v2434 = vunpack.c.h.b16 %v592
    %v2435 = vunpack.c.l.b16 %v593
    %v2436 = vunpack.c.h.b16 %v593
    %v2437 = vunpack.c.l.b16 %v594
    %v2438 = vunpack.c.h.b16 %v594
    %v2439 = vunpack.c.l.b16 %v595
    %v2440 = vunpack.c.h.b16 %v595
    %v2441 = vunpack.c.l.b16 %v596
    %v2442 = vunpack.c.h.b16 %v596
    %v2443 = vunpack.c.l.b16 %v597
    %v2444 = vunpack.c.h.b16 %v597
    %v2445 = vunpack.c.l.b16 %v598
    %v2446 = vunpack.c.h.b16 %v598
    %v2447 = vunpack.c.l.b16 %v599
    %v2448 = vunpack.c.h.b16 %v599
    %v2449 = vunpack.c.l.b16 %v600
    %v2450 = vunpack.c.h.b16 %v600
    %v2451 = vunpack.c.l.b16 %v601
    %v2452 = vunpack.c.h.b16 %v601
    %v2453 = vunpack.c.l.b16 %v602
    %v2454 = vunpack.c.h.b16 %v602
    %v2455 = vunpack.c.l.b16 %v603
    %v2456 = vunpack.c.h.b16 %v603
    %v2457 = vunpack.c.l.b16 %v604
    %v2458 = vunpack.c.h.b16 %v604
    %v2459 = vunpack.c.l.b16 %v605
    %v2460 = vunpack.c.h.b16 %v605
    %v2461 = vunpack.c.l.b16 %v606
    %v2462 = vunpack.c.h.b16 %v606
    %v2463 = vunpack.c.l.b16 %v607
    %v2464 = vunpack.c.h.b16 %v607
    %v2465 = vunpack.c.l.b16 %v608
    %v2466 = vunpack.c.h.b16 %v608
    %v2467 = vunpack.c.l.b16 %v609
    %v2468 = vunpack.c.h.b16 %v609
    %v2469 = vunpack.c.l.b16 %v610
    %v2470 = vunpack.c.h.b16 %v610
    %v2471 = vunpack.c.l.b16 %v611
    %v2472 = vunpack.c.h.b16 %v611
    %v2473 = vunpack.c.l.b16 %v612
    %v2474 = vunpack.c.h.b16 %v612
    %v2475 = vunpack.c.l.b16 %v613
    %v2476 = vunpack.c.h.b16 %v613
    %v2477 = vunpack.c.l.b16 %v614
    %v2478 = vunpack.c.h.b16 %v614
    %v2479 = vunpack.c.l.b16 %v615
    %v2480 = vunpack.c.h.b16 %v615
    %v2481 = vunpack.c.l.b16 %v616
    %v2482 = vunpack.c.h.b16 %v616
    %v2483 = vunpack.c.l.b16 %v617
    %v2484 = vunpack.c.h.b16 %v617
    %v2485 = vunpack.c.l.b16 %v618
    %v2486 = vunpack.c.h.b16 %v618
    %v2487 = vunpack.c.l.b16 %v619
    %v2488 = vunpack.c.h.b16 %v619
    %v2489 = vunpack.c.l.b16 %v620
    %v2490 = vunpack.c.h.b16 %v620
    %v2491 = vunpack.c.l.b16 %v621
    %v2492 = vunpack.c.h.b16 %v621
    %v2493 = vunpack.c.l.b16 %v622
    %v2494 = vunpack.c.h.b16 %v622
    %v2495 = vunpack.c.l.b16 %v623
    %v2496 = vunpack.c.h.b16 %v623
    %v2497 = vunpack.c.l.b16 %v624
    %v2498 = vunpack.c.h.b16 %v624
    %v2499 = vunpack.c.l.b16 %v625
    %v2500 = vunpack.c.h.b16 %v625
    %v2501 = vunpack.c.l.b16 %v626
    %v2502 = vunpack.c.h.b16 %v626
    %v2503 = vunpack.c.l.b16 %v627
    %v2504 = vunpack.c.h.b16 %v627
    %v2505 = vunpack.c.l.b16 %v628
    %v2506 = vunpack.c.h.b16 %v628
    %v2507 = vunpack.c.l.b16 %v629
    %v2508 = vunpack.c.h.b16 %v629
    %v2509 = vunpack.c.l.b16 %v630
    %v2510 = vunpack.c.h.b16 %v630
    %v2511 = vunpack.c.l.b16 %v631
    %v2512 = vunpack.c.h.b16 %v631
    %v2513 = vunpack.c.l.b16 %v632
    %v2514 = vunpack.c.h.b16 %v632
    %v2515 = vunpack.c.l.b16 %v633
    %v2516 = vunpack.c.h.b16 %v633
    %v2517 = vunpack.c.l.b16 %v634
    %v2518 = vunpack.c.h.b16 %v634
    %v2519 = vunpack.c.l.b16 %v635
    %v2520 = vunpack.c.h.b16 %v635
    %v2521 = vunpack.c.l.b16 %v636
    %v2522 = vunpack.c.h.b16 %v636
    %v2523 = vunpack.c.l.b16 %v637
    %v2524 = vunpack.c.h.b16 %v637
    %v2525 = vunpack.c.l.b16 %v638
    %v2526 = vunpack.c.h.b16 %v638
    %v2527 = vunpack.c.l.b16 %v639
    %v2528 = vunpack.c.h.b16 %v639
    %v2529 = vunpack.c.l.b16 %v640
    %v2530 = vunpack.c.h.b16 %v640
    %v2531 = vunpack.c.l.b16 %v641
    %v2532 = vunpack.c.h.b16 %v641
    %v2533 = vunpack.c.l.b16 %v642
    %v2534 = vunpack.c.h.b16 %v642
    %v2535 = vunpack.c.l.b16 %v643
    %v2536 = vunpack.c.h.b16 %v643
    %v2537 = vunpack.c.l.b16 %v644
    %v2538 = vunpack.c.h.b16 %v644
    %v2539 = vunpack.c.l.b16 %v645
    %v2540 = vunpack.c.h.b16 %v645
    %v2541 = vunpack.c.l.b16 %v646
    %v2542 = vunpack.c.h.b16 %v646
    %v2543 = vunpack.c.l.b16 %v647
    %v2544 = vunpack.c.h.b16 %v647
    %v2545 = vunpack.c.l.b16 %v648
    %v2546 = vunpack.c.h.b16 %v648
    %v2547 = vunpack.c.l.b16 %v649
    %v2548 = vunpack.c.h.b16 %v649
    %v2549 = vunpack.c.l.b16 %v650
    %v2550 = vunpack.c.h.b16 %v650
    %v2551 = vunpack.c.l.b16 %v651
    %v2552 = vunpack.c.h.b16 %v651
    %v2553 = vunpack.c.l.b16 %v652
    %v2554 = vunpack.c.h.b16 %v652
    %v2555 = vunpack.c.l.b16 %v653
    %v2556 = vunpack.c.h.b16 %v653
    %v2557 = vunpack.c.l.b16 %v654
    %v2558 = vunpack.c.h.b16 %v654
    %v2559 = vunpack.c.l.b16 %v655
    %v2560 = vunpack.c.h.b16 %v655
    %v2561 = vunpack.c.l.b16 %v656
    %v2562 = vunpack.c.h.b16 %v656
    %v2563 = vunpack.c.l.b16 %v657
    %v2564 = vunpack.c.h.b16 %v657
    %v2565 = vunpack.c.l.b16 %v658
    %v2566 = vunpack.c.h.b16 %v658
    %v2567 = vunpack.c.l.b16 %v659
    %v2568 = vunpack.c.h.b16 %v659
    %v2569 = vunpack.c.l.b16 %v660
    %v2570 = vunpack.c.h.b16 %v660
    %v2571 = vunpack.c.l.b16 %v661
    %v2572 = vunpack.c.h.b16 %v661
    %v2573 = vunpack.c.l.b16 %v662
    %v2574 = vunpack.c.h.b16 %v662
    %v2575 = vunpack.c.l.b16 %v663
    %v2576 = vunpack.c.h.b16 %v663
    %v2577 = vunpack.c.l.b16 %v664
    %v2578 = vunpack.c.h.b16 %v664
    %v2579 = vunpack.c.l.b16 %v665
    %v2580 = vunpack.c.h.b16 %v665
    %v2581 = vunpack.c.l.b16 %v666
    %v2582 = vunpack.c.h.b16 %v666
    %v2583 = vunpack.c.l.b16 %v667
    %v2584 = vunpack.c.h.b16 %v667
    %v2585 = vunpack.c.l.b16 %v668
    %v2586 = vunpack.c.h.b16 %v668
    %v2587 = vunpack.c.l.b16 %v669
    %v2588 = vunpack.c.h.b16 %v669
    %v2589 = vunpack.c.l.b16 %v670
    %v2590 = vunpack.c.h.b16 %v670
    %v2591 = vunpack.c.l.b16 %v671
    %v2592 = vunpack.c.h.b16 %v671
    %v2593 = vunpack.c.l.b16 %v672
    %v2594 = vunpack.c.h.b16 %v672
    %v2595 = vunpack.c.l.b16 %v673
    %v2596 = vunpack.c.h.b16 %v673
    %v2597 = vunpack.c.l.b16 %v674
    %v2598 = vunpack.c.h.b16 %v674
    %v2599 = vunpack.c.l.b16 %v675
    %v2600 = vunpack.c.h.b16 %v675
    %v2601 = vunpack.c.l.b16 %v676
    %v2602 = vunpack.c.h.b16 %v676
    %v2603 = vunpack.c.l.b16 %v677
    %v2604 = vunpack.c.h.b16 %v677
    %v2605 = vunpack.c.l.b16 %v678
    %v2606 = vunpack.c.h.b16 %v678
    %v2607 = vunpack.c.l.b16 %v679
    %v2608 = vunpack.c.h.b16 %v679
    %v2609 = vunpack.c.l.b16 %v680
    %v2610 = vunpack.c.h.b16 %v680
    %v2611 = vunpack.c.l.b16 %v681
    %v2612 = vunpack.c.h.b16 %v681
    %v2613 = vunpack.c.l.b16 %v682
    %v2614 = vunpack.c.h.b16 %v682
    %v2615 = vunpack.c.l.b16 %v683
    %v2616 = vunpack.c.h.b16 %v683
    %v2617 = vunpack.c.l.b16 %v684
    %v2618 = vunpack.c.h.b16 %v684
    %v2619 = vunpack.c.l.b16 %v685
    %v2620 = vunpack.c.h.b16 %v685
    %v2621 = vunpack.c.l.b16 %v686
    %v2622 = vunpack.c.h.b16 %v686
    %v2623 = vunpack.c.l.b16 %v687
    %v2624 = vunpack.c.h.b16 %v687
    %v2625 = vunpack.c.l.b16 %v688
    %v2626 = vunpack.c.h.b16 %v688
    %v2627 = vunpack.c.l.b16 %v689
    %v2628 = vunpack.c.h.b16 %v689
    %v2629 = vunpack.c.l.b16 %v690
    %v2630 = vunpack.c.h.b16 %v690
    %v2631 = vunpack.c.l.b16 %v691
    %v2632 = vunpack.c.h.b16 %v691
    %v2633 = vunpack.c.l.b16 %v692
    %v2634 = vunpack.c.h.b16 %v692
    %v2635 = vunpack.c.l.b16 %v693
    %v2636 = vunpack.c.h.b16 %v693
    %v2637 = vunpack.c.l.b16 %v694
    %v2638 = vunpack.c.h.b16 %v694
    %v2639 = vunpack.c.l.b16 %v695
    %v2640 = vunpack.c.h.b16 %v695
    %v2641 = vunpack.c.l.b16 %v696
    %v2642 = vunpack.c.h.b16 %v696
    %v2643 = vunpack.c.l.b16 %v697
    %v2644 = vunpack.c.h.b16 %v697
    %v2645 = vunpack.c.l.b16 %v698
    %v2646 = vunpack.c.h.b16 %v698
    %v2647 = vunpack.c.l.b16 %v699
    %v2648 = vunpack.c.h.b16 %v699
    %v2649 = vunpack.c.l.b16 %v700
    %v2650 = vunpack.c.h.b16 %v700
    %v2651 = vunpack.c.l.b16 %v701
    %v2652 = vunpack.c.h.b16 %v701
    %v2653 = vunpack.c.l.b16 %v702
    %v2654 = vunpack.c.h.b16 %v702
    %v2655 = vunpack.c.l.b16 %v703
    %v2656 = vunpack.c.h.b16 %v703
    %v2657 = vunpack.c.l.b16 %v704
    %v2658 = vunpack.c.h.b16 %v704
    %v2659 = vunpack.c.l.b16 %v705
    %v2660 = vunpack.c.h.b16 %v705
    %v2661 = vunpack.c.l.b16 %v706
    %v2662 = vunpack.c.h.b16 %v706
    %v2663 = vunpack.c.l.b16 %v707
    %v2664 = vunpack.c.h.b16 %v707
    %v2665 = vunpack.c.l.b16 %v708
    %v2666 = vunpack.c.h.b16 %v708
    %v2667 = vunpack.c.l.b16 %v709
    %v2668 = vunpack.c.h.b16 %v709
    %v2669 = vunpack.c.l.b16 %v710
    %v2670 = vunpack.c.h.b16 %v710
    %v2671 = vunpack.c.l.b16 %v711
    %v2672 = vunpack.c.h.b16 %v711
    %v2673 = vunpack.c.l.b16 %v712
    %v2674 = vunpack.c.h.b16 %v712
    %v2675 = vunpack.c.l.b16 %v713
    %v2676 = vunpack.c.h.b16 %v713
    %v2677 = vunpack.c.l.b16 %v714
    %v2678 = vunpack.c.h.b16 %v714
    %v2679 = vunpack.c.l.b16 %v715
    %v2680 = vunpack.c.h.b16 %v715
    %v2681 = vunpack.c.l.b16 %v716
    %v2682 = vunpack.c.h.b16 %v716
    %v2683 = vunpack.c.l.b16 %v717
    %v2684 = vunpack.c.h.b16 %v717
    %v2685 = vunpack.c.l.b16 %v718
    %v2686 = vunpack.c.h.b16 %v718
    %v2687 = vunpack.c.l.b16 %v719
    %v2688 = vunpack.c.h.b16 %v719
    %v2689 = vunpack.c.l.b16 %v720
    %v2690 = vunpack.c.h.b16 %v720
    %v2691 = vunpack.c.l.b16 %v721
    %v2692 = vunpack.c.h.b16 %v721
    %v2693 = vunpack.c.l.b16 %v722
    %v2694 = vunpack.c.h.b16 %v722
    %v2695 = vunpack.c.l.b16 %v723
    %v2696 = vunpack.c.h.b16 %v723
    %v2697 = vunpack.c.l.b16 %v724
    %v2698 = vunpack.c.h.b16 %v724
    %v2699 = vunpack.c.l.b16 %v725
    %v2700 = vunpack.c.h.b16 %v725
    %v2701 = vunpack.c.l.b16 %v726
    %v2702 = vunpack.c.h.b16 %v726
    %v2703 = vunpack.c.l.b16 %v727
    %v2704 = vunpack.c.h.b16 %v727
    %v2705 = vunpack.c.l.b16 %v728
    %v2706 = vunpack.c.h.b16 %v728
    %v2707 = vunpack.c.l.b16 %v729
    %v2708 = vunpack.c.h.b16 %v729
    %v2709 = vunpack.c.l.b16 %v730
    %v2710 = vunpack.c.h.b16 %v730
    %v2711 = vunpack.c.l.b16 %v731
    %v2712 = vunpack.c.h.b16 %v731
    %v2713 = vunpack.c.l.b16 %v732
    %v2714 = vunpack.c.h.b16 %v732
    %v2715 = vunpack.c.l.b16 %v733
    %v2716 = vunpack.c.h.b16 %v733
    %v2717 = vunpack.c.l.b16 %v734
    %v2718 = vunpack.c.h.b16 %v734
    %v2719 = vunpack.c.l.b16 %v735
    %v2720 = vunpack.c.h.b16 %v735
    %v2721 = vunpack.c.l.b16 %v736
    %v2722 = vunpack.c.h.b16 %v736
    %v2723 = vunpack.c.l.b16 %v737
    %v2724 = vunpack.c.h.b16 %v737
    %v2725 = vunpack.c.l.b16 %v738
    %v2726 = vunpack.c.h.b16 %v738
    %v2727 = vunpack.c.l.b16 %v739
    %v2728 = vunpack.c.h.b16 %v739
    %v2729 = vunpack.c.l.b16 %v740
    %v2730 = vunpack.c.h.b16 %v740
    %v2731 = vunpack.c.l.b16 %v741
    %v2732 = vunpack.c.h.b16 %v741
    %v2733 = vunpack.c.l.b16 %v742
    %v2734 = vunpack.c.h.b16 %v742
    %v2735 = vunpack.c.l.b16 %v743
    %v2736 = vunpack.c.h.b16 %v743
    %v2737 = vunpack.c.l.b16 %v744
    %v2738 = vunpack.c.h.b16 %v744
    %v2739 = vunpack.c.l.b16 %v745
    %v2740 = vunpack.c.h.b16 %v745
    %v2741 = vunpack.c.l.b16 %v746
    %v2742 = vunpack.c.h.b16 %v746
    %v2743 = vunpack.c.l.b16 %v747
    %v2744 = vunpack.c.h.b16 %v747
    %v2745 = vunpack.c.l.b16 %v748
    %v2746 = vunpack.c.h.b16 %v748
    %v2747 = vunpack.c.l.b16 %v749
    %v2748 = vunpack.c.h.b16 %v749
    %v2749 = vunpack.c.l.b16 %v750
    %v2750 = vunpack.c.h.b16 %v750
    %v2751 = vunpack.c.l.b16 %v751
    %v2752 = vunpack.c.h.b16 %v751
    %v2753 = vunpack.c.l.b16 %v752
    %v2754 = vunpack.c.h.b16 %v752
    %v2755 = vunpack.c.l.b16 %v753
    %v2756 = vunpack.c.h.b16 %v753
    %v2757 = vunpack.c.l.b16 %v754
    %v2758 = vunpack.c.h.b16 %v754
    %v2759 = vunpack.c.l.b16 %v755
    %v2760 = vunpack.c.h.b16 %v755
    %v2761 = vunpack.c.l.b16 %v756
    %v2762 = vunpack.c.h.b16 %v756
    %v2763 = vunpack.c.l.b16 %v757
    %v2764 = vunpack.c.h.b16 %v757
    %v2765 = vunpack.c.l.b16 %v758
    %v2766 = vunpack.c.h.b16 %v758
    %v2767 = vunpack.c.l.b16 %v759
    %v2768 = vunpack.c.h.b16 %v759
    %v2769 = vunpack.c.l.b16 %v760
    %v2770 = vunpack.c.h.b16 %v760
    %v2771 = vunpack.c.l.b16 %v761
    %v2772 = vunpack.c.h.b16 %v761
    %v2773 = vunpack.c.l.b16 %v762
    %v2774 = vunpack.c.h.b16 %v762
    %v2775 = vunpack.c.l.b16 %v763
    %v2776 = vunpack.c.h.b16 %v763
    %v2777 = vunpack.c.l.b16 %v764
    %v2778 = vunpack.c.h.b16 %v764
    %v2779 = vpack.c.b16 %v1509, %v1499
    %v2780 = vpack.c.b16 %v1510, %v1500
    %v2781 = vpack.c.b16 %v1511, %v1501
    %v2782 = vpack.c.b16 %v1512, %v1502
    %v2783 = vpack.c.b16 %v1513, %v1503
    %v2784 = vpack.c.b16 %v1514, %v1504
    %v2785 = vpack.c.b16 %v1515, %v1505
    %v2786 = vpack.c.b16 %v1516, %v1506
    %v2787 = vpack.c.b16 %v1517, %v1507
    %v2788 = vpack.c.b16 %v1518, %v1508
    %v2789 = vpack.c.b16 %v1529, %v1519
    %v2790 = vpack.c.b16 %v1530, %v1520
    %v2791 = vpack.c.b16 %v1531, %v1521
    %v2792 = vpack.c.b16 %v1532, %v1522
    %v2793 = vpack.c.b16 %v1533, %v1523
    %v2794 = vpack.c.b16 %v1534, %v1524
    %v2795 = vpack.c.b16 %v1535, %v1525
    %v2796 = vpack.c.b16 %v1536, %v1526
    %v2797 = vpack.c.b16 %v1537, %v1527
    %v2798 = vpack.c.b16 %v1538, %v1528
    %v2799 = vpack.c.b16 %v1549, %v1539
    %v2800 = vpack.c.b16 %v1550, %v1540
    %v2801 = vpack.c.b16 %v1551, %v1541
    %v2802 = vpack.c.b16 %v1552, %v1542
    %v2803 = vpack.c.b16 %v1553, %v1543
    %v2804 = vpack.c.b16 %v1554, %v1544
    %v2805 = vpack.c.b16 %v1555, %v1545
    %v2806 = vpack.c.b16 %v1556, %v1546
    %v2807 = vpack.c.b16 %v1557, %v1547
    %v2808 = vpack.c.b16 %v1558, %v1548
    %v2809 = vpack.c.b16 %v1569, %v1559
    %v2810 = vpack.c.b16 %v1570, %v1560
    %v2811 = vpack.c.b16 %v1571, %v1561
    %v2812 = vpack.c.b16 %v1572, %v1562
    %v2813 = vpack.c.b16 %v1573, %v1563
    %v2814 = vpack.c.b16 %v1574, %v1564
    %v2815 = vpack.c.b16 %v1575, %v1565
    %v2816 = vpack.c.b16 %v1576, %v1566
    %v2817 = vpack.c.b16 %v1577, %v1567
    %v2818 = vpack.c.b16 %v1578, %v1568
    %v2819 = vpack.c.b16 %v1589, %v1579
    %v2820 = vpack.c.b16 %v1590, %v1580
    %v2821 = vpack.c.b16 %v1591, %v1581
    %v2822 = vpack.c.b16 %v1592, %v1582
    %v2823 = vpack.c.b16 %v1593, %v1583
    %v2824 = vpack.c.b16 %v1594, %v1584
    %v2825 = vpack.c.b16 %v1595, %v1585
    %v2826 = vpack.c.b16 %v1596, %v1586
    %v2827 = vpack.c.b16 %v1597, %v1587
    %v2828 = vpack.c.b16 %v1598, %v1588
    %v2829 = vpack.c.b16 %v1609, %v1599
    %v2830 = vpack.c.b16 %v1610, %v1600
    %v2831 = vpack.c.b16 %v1611, %v1601
    %v2832 = vpack.c.b16 %v1612, %v1602
    %v2833 = vpack.c.b16 %v1613, %v1603
    %v2834 = vpack.c.b16 %v1614, %v1604
    %v2835 = vpack.c.b16 %v1615, %v1605
    %v2836 = vpack.c.b16 %v1616, %v1606
    %v2837 = vpack.c.b16 %v1617, %v1607
    %v2838 = vpack.c.b16 %v1618, %v1608
    %v2839 = vpack.c.b16 %v1629, %v1619
    %v2840 = vpack.c.b16 %v1630, %v1620
    %v2841 = vpack.c.b16 %v1631, %v1621
    %v2842 = vpack.c.b16 %v1632, %v1622
    %v2843 = vpack.c.b16 %v1633, %v1623
    %v2844 = vpack.c.b16 %v1634, %v1624
    %v2845 = vpack.c.b16 %v1635, %v1625
    %v2846 = vpack.c.b16 %v1636, %v1626
    %v2847 = vpack.c.b16 %v1637, %v1627
    %v2848 = vpack.c.b16 %v1638, %v1628
    %v2849 = vpack.c.b16 %v1649, %v1639
    %v2850 = vpack.c.b16 %v1650, %v1640
    %v2851 = vpack.c.b16 %v1651, %v1641
    %v2852 = vpack.c.b16 %v1652, %v1642
    %v2853 = vpack.c.b16 %v1653, %v1643
    %v2854 = vpack.c.b16 %v1654, %v1644
    %v2855 = vpack.c.b16 %v1655, %v1645
    %v2856 = vpack.c.b16 %v1656, %v1646
    %v2857 = vpack.c.b16 %v1657, %v1647
    %v2858 = vpack.c.b16 %v1658, %v1648
    %v2859 = vpack.c.b16 %v1669, %v1659
    %v2860 = vpack.c.b16 %v1670, %v1660
    %v2861 = vpack.c.b16 %v1671, %v1661
    %v2862 = vpack.c.b16 %v1672, %v1662
    %v2863 = vpack.c.b16 %v1673, %v1663
    %v2864 = vpack.c.b16 %v1674, %v1664
    %v2865 = vpack.c.b16 %v1675, %v1665
    %v2866 = vpack.c.b16 %v1676, %v1666
    %v2867 = vpack.c.b16 %v1677, %v1667
    %v2868 = vpack.c.b16 %v1678, %v1668
    %v2869 = vpack.c.b16 %v1689, %v1679
    %v2870 = vpack.c.b16 %v1690, %v1680
    %v2871 = vpack.c.b16 %v1691, %v1681
    %v2872 = vpack.c.b16 %v1692, %v1682
    %v2873 = vpack.c.b16 %v1693, %v1683
    %v2874 = vpack.c.b16 %v1694, %v1684
    %v2875 = vpack.c.b16 %v1695, %v1685
    %v2876 = vpack.c.b16 %v1696, %v1686
    %v2877 = vpack.c.b16 %v1697, %v1687
    %v2878 = vpack.c.b16 %v1698, %v1688
    %v2879 = vpack.c.b16 %v1709, %v1699
    %v2880 = vpack.c.b16 %v1710, %v1700
    %v2881 = vpack.c.b16 %v1711, %v1701
    %v2882 = vpack.c.b16 %v1712, %v1702
    %v2883 = vpack.c.b16 %v1713, %v1703
    %v2884 = vpack.c.b16 %v1714, %v1704
    %v2885 = vpack.c.b16 %v1715, %v1705
    %v2886 = vpack.c.b16 %v1716, %v1706
    %v2887 = vpack.c.b16 %v1717, %v1707
    %v2888 = vpack.c.b16 %v1718, %v1708
    %v2889 = vpack.c.b16 %v1729, %v1719
    %v2890 = vpack.c.b16 %v1730, %v1720
    %v2891 = vpack.c.b16 %v1731, %v1721
    %v2892 = vpack.c.b16 %v1732, %v1722
    %v2893 = vpack.c.b16 %v1733, %v1723
    %v2894 = vpack.c.b16 %v1734, %v1724
    %v2895 = vpack.c.b16 %v1735, %v1725
    %v2896 = vpack.c.b16 %v1736, %v1726
    %v2897 = vpack.c.b16 %v1737, %v1727
    %v2898 = vpack.c.b16 %v1738, %v1728
    %v2899 = vpack.c.b16 %v1749, %v1739
    %v2900 = vpack.c.b16 %v1750, %v1740
    %v2901 = vpack.c.b16 %v1751, %v1741
    %v2902 = vpack.c.b16 %v1752, %v1742
    %v2903 = vpack.c.b16 %v1753, %v1743
    %v2904 = vpack.c.b16 %v1754, %v1744
    %v2905 = vpack.c.b16 %v1755, %v1745
    %v2906 = vpack.c.b16 %v1756, %v1746
    %v2907 = vpack.c.b16 %v1757, %v1747
    %v2908 = vpack.c.b16 %v1758, %v1748
    %v2909 = vpack.c.b16 %v1769, %v1759
    %v2910 = vpack.c.b16 %v1770, %v1760
    %v2911 = vpack.c.b16 %v1771, %v1761
    %v2912 = vpack.c.b16 %v1772, %v1762
    %v2913 = vpack.c.b16 %v1773, %v1763
    %v2914 = vpack.c.b16 %v1774, %v1764
    %v2915 = vpack.c.b16 %v1775, %v1765
    %v2916 = vpack.c.b16 %v1776, %v1766
    %v2917 = vpack.c.b16 %v1777, %v1767
    %v2918 = vpack.c.b16 %v1778, %v1768
    %v2919 = vpack.c.b16 %v1789, %v1779
    %v2920 = vpack.c.b16 %v1790, %v1780
    %v2921 = vpack.c.b16 %v1791, %v1781
    %v2922 = vpack.c.b16 %v1792, %v1782
    %v2923 = vpack.c.b16 %v1793, %v1783
    %v2924 = vpack.c.b16 %v1794, %v1784
    %v2925 = vpack.c.b16 %v1795, %v1785
    %v2926 = vpack.c.b16 %v1796, %v1786
    %v2927 = vpack.c.b16 %v1797, %v1787
    %v2928 = vpack.c.b16 %v1798, %v1788
    %v2929 = vpack.c.b16 %v1809, %v1799
    %v2930 = vpack.c.b16 %v1810, %v1800
    %v2931 = vpack.c.b16 %v1811, %v1801
    %v2932 = vpack.c.b16 %v1812, %v1802
    %v2933 = vpack.c.b16 %v1813, %v1803
    %v2934 = vpack.c.b16 %v1814, %v1804
    %v2935 = vpack.c.b16 %v1815, %v1805
    %v2936 = vpack.c.b16 %v1816, %v1806
    %v2937 = vpack.c.b16 %v1817, %v1807
    %v2938 = vpack.c.b16 %v1818, %v1808
    %v2939 = vpack.c.b16 %v1829, %v1819
    %v2940 = vpack.c.b16 %v1830, %v1820
    %v2941 = vpack.c.b16 %v1831, %v1821
    %v2942 = vpack.c.b16 %v1832, %v1822
    %v2943 = vpack.c.b16 %v1833, %v1823
    %v2944 = vpack.c.b16 %v1834, %v1824
    %v2945 = vpack.c.b16 %v1835, %v1825
    %v2946 = vpack.c.b16 %v1836, %v1826
    %v2947 = vpack.c.b16 %v1837, %v1827
    %v2948 = vpack.c.b16 %v1838, %v1828
    %v2949 = vpack.c.b16 %v1849, %v1839
    %v2950 = vpack.c.b16 %v1850, %v1840
    %v2951 = vpack.c.b16 %v1851, %v1841
    %v2952 = vpack.c.b16 %v1852, %v1842
    %v2953 = vpack.c.b16 %v1853, %v1843
    %v2954 = vpack.c.b16 %v1854, %v1844
    %v2955 = vpack.c.b16 %v1855, %v1845
    %v2956 = vpack.c.b16 %v1856, %v1846
    %v2957 = vpack.c.b16 %v1857, %v1847
    %v2958 = vpack.c.b16 %v1858, %v1848
    %v2959 = vpack.c.b16 %v1869, %v1859
    %v2960 = vpack.c.b16 %v1870, %v1860
    %v2961 = vpack.c.b16 %v1871, %v1861
    %v2962 = vpack.c.b16 %v1872, %v1862
    %v2963 = vpack.c.b16 %v1873, %v1863
    %v2964 = vpack.c.b16 %v1874, %v1864
    %v2965 = vpack.c.b16 %v1875, %v1865
    %v2966 = vpack.c.b16 %v1876, %v1866
    %v2967 = vpack.c.b16 %v1877, %v1867
    %v2968 = vpack.c.b16 %v1878, %v1868
    %v2969 = vpack.c.b16 %v1889, %v1879
    %v2970 = vpack.c.b16 %v1890, %v1880
    %v2971 = vpack.c.b16 %v1891, %v1881
    %v2972 = vpack.c.b16 %v1892, %v1882
    %v2973 = vpack.c.b16 %v1893, %v1883
    %v2974 = vpack.c.b16 %v1894, %v1884
    %v2975 = vpack.c.b16 %v1895, %v1885
    %v2976 = vpack.c.b16 %v1896, %v1886
    %v2977 = vpack.c.b16 %v1897, %v1887
    %v2978 = vpack.c.b16 %v1898, %v1888
    %v2979 = vpack.c.b16 %v1909, %v1899
    %v2980 = vpack.c.b16 %v1910, %v1900
    %v2981 = vpack.c.b16 %v1911, %v1901
    %v2982 = vpack.c.b16 %v1912, %v1902
    %v2983 = vpack.c.b16 %v1913, %v1903
    %v2984 = vpack.c.b16 %v1914, %v1904
    %v2985 = vpack.c.b16 %v1915, %v1905
    %v2986 = vpack.c.b16 %v1916, %v1906
    %v2987 = vpack.c.b16 %v1917, %v1907
    %v2988 = vpack.c.b16 %v1918, %v1908
    %v2989 = vpack.c.b16 %v1929, %v1919
    %v2990 = vpack.c.b16 %v1930, %v1920
    %v2991 = vpack.c.b16 %v1931, %v1921
    %v2992 = vpack.c.b16 %v1932, %v1922
    %v2993 = vpack.c.b16 %v1933, %v1923
    %v2994 = vpack.c.b16 %v1934, %v1924
    %v2995 = vpack.c.b16 %v1935, %v1925
    %v2996 = vpack.c.b16 %v1936, %v1926
    %v2997 = vpack.c.b16 %v1937, %v1927
    %v2998 = vpack.c.b16 %v1938, %v1928
    %v2999 = vpack.c.b16 %v1949, %v1939
    %v3000 = vpack.c.b16 %v1950, %v1940
    %v3001 = vpack.c.b16 %v1951, %v1941
    %v3002 = vpack.c.b16 %v1952, %v1942
    %v3003 = vpack.c.b16 %v1953, %v1943
    %v3004 = vpack.c.b16 %v1954, %v1944
    %v3005 = vpack.c.b16 %v1955, %v1945
    %v3006 = vpack.c.b16 %v1956, %v1946
    %v3007 = vpack.c.b16 %v1957, %v1947
    %v3008 = vpack.c.b16 %v1958, %v1948
    %v3009 = vpack.c.b16 %v1969, %v1959
    %v3010 = vpack.c.b16 %v1970, %v1960
    %v3011 = vpack.c.b16 %v1971, %v1961
    %v3012 = vpack.c.b16 %v1972, %v1962
    %v3013 = vpack.c.b16 %v1973, %v1963
    %v3014 = vpack.c.b16 %v1974, %v1964
    %v3015 = vpack.c.b16 %v1975, %v1965
    %v3016 = vpack.c.b16 %v1976, %v1966
    %v3017 = vpack.c.b16 %v1977, %v1967
    %v3018 = vpack.c.b16 %v1978, %v1968
    %v3019 = vpack.c.b16 %v1989, %v1979
    %v3020 = vpack.c.b16 %v1990, %v1980
    %v3021 = vpack.c.b16 %v1991, %v1981
    %v3022 = vpack.c.b16 %v1992, %v1982
    %v3023 = vpack.c.b16 %v1993, %v1983
    %v3024 = vpack.c.b16 %v1994, %v1984
    %v3025 = vpack.c.b16 %v1995, %v1985
    %v3026 = vpack.c.b16 %v1996, %v1986
    %v3027 = vpack.c.b16 %v1997, %v1987
    %v3028 = vpack.c.b16 %v1998, %v1988
    %v3029 = vpack.c.b16 %v2009, %v1999
    %v3030 = vpack.c.b16 %v2010, %v2000
    %v3031 = vpack.c.b16 %v2011, %v2001
    %v3032 = vpack.c.b16 %v2012, %v2002
    %v3033 = vpack.c.b16 %v2013, %v2003
    %v3034 = vpack.c.b16 %v2014, %v2004
    %v3035 = vpack.c.b16 %v2015, %v2005
    %v3036 = vpack.c.b16 %v2016, %v2006
    %v3037 = vpack.c.b16 %v2017, %v2007
    %v3038 = vpack.c.b16 %v2018, %v2008
    %v3039 = vpack.c.b16 %v2029, %v2019
    %v3040 = vpack.c.b16 %v2030, %v2020
    %v3041 = vpack.c.b16 %v2031, %v2021
    %v3042 = vpack.c.b16 %v2032, %v2022
    %v3043 = vpack.c.b16 %v2033, %v2023
    %v3044 = vpack.c.b16 %v2034, %v2024
    %v3045 = vpack.c.b16 %v2035, %v2025
    %v3046 = vpack.c.b16 %v2036, %v2026
    %v3047 = vpack.c.b16 %v2037, %v2027
    %v3048 = vpack.c.b16 %v2038, %v2028
    %v3049 = vpack.c.b16 %v2049, %v2039
    %v3050 = vpack.c.b16 %v2050, %v2040
    %v3051 = vpack.c.b16 %v2051, %v2041
    %v3052 = vpack.c.b16 %v2052, %v2042
    %v3053 = vpack.c.b16 %v2053, %v2043
    %v3054 = vpack.c.b16 %v2054, %v2044
    %v3055 = vpack.c.b16 %v2055, %v2045
    %v3056 = vpack.c.b16 %v2056, %v2046
    %v3057 = vpack.c.b16 %v2057, %v2047
    %v3058 = vpack.c.b16 %v2058, %v2048
    %v3059 = vpack.c.b16 %v2069, %v2059
    %v3060 = vpack.c.b16 %v2070, %v2060
    %v3061 = vpack.c.b16 %v2071, %v2061
    %v3062 = vpack.c.b16 %v2072, %v2062
    %v3063 = vpack.c.b16 %v2073, %v2063
    %v3064 = vpack.c.b16 %v2074, %v2064
    %v3065 = vpack.c.b16 %v2075, %v2065
    %v3066 = vpack.c.b16 %v2076, %v2066
    %v3067 = vpack.c.b16 %v2077, %v2067
    %v3068 = vpack.c.b16 %v2078, %v2068
    %v3069 = vpack.c.b16 %v2089, %v2079
    %v3070 = vpack.c.b16 %v2090, %v2080
    %v3071 = vpack.c.b16 %v2091, %v2081
    %v3072 = vpack.c.b16 %v2092, %v2082
    %v3073 = vpack.c.b16 %v2093, %v2083
    %v3074 = vpack.c.b16 %v2094, %v2084
    %v3075 = vpack.c.b16 %v2095, %v2085
    %v3076 = vpack.c.b16 %v2096, %v2086
    %v3077 = vpack.c.b16 %v2097, %v2087
    %v3078 = vpack.c.b16 %v2098, %v2088
    %v3079 = vpack.c.b16 %v2109, %v2099
    %v3080 = vpack.c.b16 %v2110, %v2100
    %v3081 = vpack.c.b16 %v2111, %v2101
    %v3082 = vpack.c.b16 %v2112, %v2102
    %v3083 = vpack.c.b16 %v2113, %v2103
    %v3084 = vpack.c.b16 %v2114, %v2104
    %v3085 = vpack.c.b16 %v2115, %v2105
    %v3086 = vpack.c.b16 %v2116, %v2106
    %v3087 = vpack.c.b16 %v2117, %v2107
    %v3088 = vpack.c.b16 %v2118, %v2108
    %v3089 = vpack.c.b16 %v2129, %v2119
    %v3090 = vpack.c.b16 %v2130, %v2120
    %v3091 = vpack.c.b16 %v2131, %v2121
    %v3092 = vpack.c.b16 %v2132, %v2122
    %v3093 = vpack.c.b16 %v2133, %v2123
    %v3094 = vpack.c.b16 %v2134, %v2124
    %v3095 = vpack.c.b16 %v2135, %v2125
    %v3096 = vpack.c.b16 %v2136, %v2126
    %v3097 = vpack.c.b16 %v2137, %v2127
    %v3098 = vpack.c.b16 %v2138, %v2128
    %v3099 = vpack.c.b16 %v2149, %v2139
    %v3100 = vpack.c.b16 %v2150, %v2140
    %v3101 = vpack.c.b16 %v2151, %v2141
    %v3102 = vpack.c.b16 %v2152, %v2142
    %v3103 = vpack.c.b16 %v2153, %v2143
    %v3104 = vpack.c.b16 %v2154, %v2144
    %v3105 = vpack.c.b16 %v2155, %v2145
    %v3106 = vpack.c.b16 %v2156, %v2146
    %v3107 = vpack.c.b16 %v2157, %v2147
    %v3108 = vpack.c.b16 %v2158, %v2148
    %v3109 = vpack.c.b16 %v2169, %v2159
    %v3110 = vpack.c.b16 %v2170, %v2160
    %v3111 = vpack.c.b16 %v2171, %v2161
    %v3112 = vpack.c.b16 %v2172, %v2162
    %v3113 = vpack.c.b16 %v2173, %v2163
    %v3114 = vpack.c.b16 %v2174, %v2164
    %v3115 = vpack.c.b16 %v2175, %v2165
    %v3116 = vpack.c.b16 %v2176, %v2166
    %v3117 = vpack.c.b16 %v2177, %v2167
    %v3118 = vpack.c.b16 %v2178, %v2168
    %v3119 = vpack.c.b16 %v2189, %v2179
    %v3120 = vpack.c.b16 %v2190, %v2180
    %v3121 = vpack.c.b16 %v2191, %v2181
    %v3122 = vpack.c.b16 %v2192, %v2182
    %v3123 = vpack.c.b16 %v2193, %v2183
    %v3124 = vpack.c.b16 %v2194, %v2184
    %v3125 = vpack.c.b16 %v2195, %v2185
    %v3126 = vpack.c.b16 %v2196, %v2186
    %v3127 = vpack.c.b16 %v2197, %v2187
    %v3128 = vpack.c.b16 %v2198, %v2188
    %v3129 = vpack.c.b16 %v2209, %v2199
    %v3130 = vpack.c.b16 %v2210, %v2200
    %v3131 = vpack.c.b16 %v2211, %v2201
    %v3132 = vpack.c.b16 %v2212, %v2202
    %v3133 = vpack.c.b16 %v2213, %v2203
    %v3134 = vpack.c.b16 %v2214, %v2204
    %v3135 = vpack.c.b16 %v2215, %v2205
    %v3136 = vpack.c.b16 %v2216, %v2206
    %v3137 = vpack.c.b16 %v2217, %v2207
    %v3138 = vpack.c.b16 %v2218, %v2208
    %v3139 = vpack.c.b16 %v2229, %v2219
    %v3140 = vpack.c.b16 %v2230, %v2220
    %v3141 = vpack.c.b16 %v2231, %v2221
    %v3142 = vpack.c.b16 %v2232, %v2222
    %v3143 = vpack.c.b16 %v2233, %v2223
    %v3144 = vpack.c.b16 %v2234, %v2224
    %v3145 = vpack.c.b16 %v2235, %v2225
    %v3146 = vpack.c.b16 %v2236, %v2226
    %v3147 = vpack.c.b16 %v2237, %v2227
    %v3148 = vpack.c.b16 %v2238, %v2228
    %v3149 = vpack.c.b16 %v2249, %v2239
    %v3150 = vpack.c.b16 %v2250, %v2240
    %v3151 = vpack.c.b16 %v2251, %v2241
    %v3152 = vpack.c.b16 %v2252, %v2242
    %v3153 = vpack.c.b16 %v2253, %v2243
    %v3154 = vpack.c.b16 %v2254, %v2244
    %v3155 = vpack.c.b16 %v2255, %v2245
    %v3156 = vpack.c.b16 %v2256, %v2246
    %v3157 = vpack.c.b16 %v2257, %v2247
    %v3158 = vpack.c.b16 %v2258, %v2248
    %v3159 = vpack.c.b16 %v2269, %v2259
    %v3160 = vpack.c.b16 %v2270, %v2260
    %v3161 = vpack.c.b16 %v2271, %v2261
    %v3162 = vpack.c.b16 %v2272, %v2262
    %v3163 = vpack.c.b16 %v2273, %v2263
    %v3164 = vpack.c.b16 %v2274, %v2264
    %v3165 = vpack.c.b16 %v2275, %v2265
    %v3166 = vpack.c.b16 %v2276, %v2266
    %v3167 = vpack.c.b16 %v2277, %v2267
    %v3168 = vpack.c.b16 %v2278, %v2268
    %v3169 = vpack.c.b16 %v2289, %v2279
    %v3170 = vpack.c.b16 %v2290, %v2280
    %v3171 = vpack.c.b16 %v2291, %v2281
    %v3172 = vpack.c.b16 %v2292, %v2282
    %v3173 = vpack.c.b16 %v2293, %v2283
    %v3174 = vpack.c.b16 %v2294, %v2284
    %v3175 = vpack.c.b16 %v2295, %v2285
    %v3176 = vpack.c.b16 %v2296, %v2286
    %v3177 = vpack.c.b16 %v2297, %v2287
    %v3178 = vpack.c.b16 %v2298, %v2288
    %v3179 = vpack.c.b16 %v2309, %v2299
    %v3180 = vpack.c.b16 %v2310, %v2300
    %v3181 = vpack.c.b16 %v2311, %v2301
    %v3182 = vpack.c.b16 %v2312, %v2302
    %v3183 = vpack.c.b16 %v2313, %v2303
    %v3184 = vpack.c.b16 %v2314, %v2304
    %v3185 = vpack.c.b16 %v2315, %v2305
    %v3186 = vpack.c.b16 %v2316, %v2306
    %v3187 = vpack.c.b16 %v2317, %v2307
    %v3188 = vpack.c.b16 %v2318, %v2308
    %v3189 = vpack.c.b16 %v2329, %v2319
    %v3190 = vpack.c.b16 %v2330, %v2320
    %v3191 = vpack.c.b16 %v2331, %v2321
    %v3192 = vpack.c.b16 %v2332, %v2322
    %v3193 = vpack.c.b16 %v2333, %v2323
    %v3194 = vpack.c.b16 %v2334, %v2324
    %v3195 = vpack.c.b16 %v2335, %v2325
    %v3196 = vpack.c.b16 %v2336, %v2326
    %v3197 = vpack.c.b16 %v2337, %v2327
    %v3198 = vpack.c.b16 %v2338, %v2328
    %v3199 = vpack.c.b16 %v2349, %v2339
    %v3200 = vpack.c.b16 %v2350, %v2340
    %v3201 = vpack.c.b16 %v2351, %v2341
    %v3202 = vpack.c.b16 %v2352, %v2342
    %v3203 = vpack.c.b16 %v2353, %v2343
    %v3204 = vpack.c.b16 %v2354, %v2344
    %v3205 = vpack.c.b16 %v2355, %v2345
    %v3206 = vpack.c.b16 %v2356, %v2346
    %v3207 = vpack.c.b16 %v2357, %v2347
    %v3208 = vpack.c.b16 %v2358, %v2348
    %v3209 = vpack.c.b16 %v2369, %v2359
    %v3210 = vpack.c.b16 %v2370, %v2360
    %v3211 = vpack.c.b16 %v2371, %v2361
    %v3212 = vpack.c.b16 %v2372, %v2362
    %v3213 = vpack.c.b16 %v2373, %v2363
    %v3214 = vpack.c.b16 %v2374, %v2364
    %v3215 = vpack.c.b16 %v2375, %v2365
    %v3216 = vpack.c.b16 %v2376, %v2366
    %v3217 = vpack.c.b16 %v2377, %v2367
    %v3218 = vpack.c.b16 %v2378, %v2368
    %v3219 = vpack.c.b16 %v2389, %v2379
    %v3220 = vpack.c.b16 %v2390, %v2380
    %v3221 = vpack.c.b16 %v2391, %v2381
    %v3222 = vpack.c.b16 %v2392, %v2382
    %v3223 = vpack.c.b16 %v2393, %v2383
    %v3224 = vpack.c.b16 %v2394, %v2384
    %v3225 = vpack.c.b16 %v2395, %v2385
    %v3226 = vpack.c.b16 %v2396, %v2386
    %v3227 = vpack.c.b16 %v2397, %v2387
    %v3228 = vpack.c.b16 %v2398, %v2388
    %v3229 = vpack.c.b16 %v2409, %v2399
    %v3230 = vpack.c.b16 %v2410, %v2400
    %v3231 = vpack.c.b16 %v2411, %v2401
    %v3232 = vpack.c.b16 %v2412, %v2402
    %v3233 = vpack.c.b16 %v2413, %v2403
    %v3234 = vpack.c.b16 %v2414, %v2404
    %v3235 = vpack.c.b16 %v2415, %v2405
    %v3236 = vpack.c.b16 %v2416, %v2406
    %v3237 = vpack.c.b16 %v2417, %v2407
    %v3238 = vpack.c.b16 %v2418, %v2408
    %v3239 = vpack.c.b16 %v2429, %v2419
    %v3240 = vpack.c.b16 %v2430, %v2420
    %v3241 = vpack.c.b16 %v2431, %v2421
    %v3242 = vpack.c.b16 %v2432, %v2422
    %v3243 = vpack.c.b16 %v2433, %v2423
    %v3244 = vpack.c.b16 %v2434, %v2424
    %v3245 = vpack.c.b16 %v2435, %v2425
    %v3246 = vpack.c.b16 %v2436, %v2426
    %v3247 = vpack.c.b16 %v2437, %v2427
    %v3248 = vpack.c.b16 %v2438, %v2428
    %v3249 = vpack.c.b16 %v2449, %v2439
    %v3250 = vpack.c.b16 %v2450, %v2440
    %v3251 = vpack.c.b16 %v2451, %v2441
    %v3252 = vpack.c.b16 %v2452, %v2442
    %v3253 = vpack.c.b16 %v2453, %v2443
    %v3254 = vpack.c.b16 %v2454, %v2444
    %v3255 = vpack.c.b16 %v2455, %v2445
    %v3256 = vpack.c.b16 %v2456, %v2446
    %v3257 = vpack.c.b16 %v2457, %v2447
    %v3258 = vpack.c.b16 %v2458, %v2448
    %v3259 = vpack.c.b16 %v2469, %v2459
    %v3260 = vpack.c.b16 %v2470, %v2460
    %v3261 = vpack.c.b16 %v2471, %v2461
    %v3262 = vpack.c.b16 %v2472, %v2462
    %v3263 = vpack.c.b16 %v2473, %v2463
    %v3264 = vpack.c.b16 %v2474, %v2464
    %v3265 = vpack.c.b16 %v2475, %v2465
    %v3266 = vpack.c.b16 %v2476, %v2466
    %v3267 = vpack.c.b16 %v2477, %v2467
    %v3268 = vpack.c.b16 %v2478, %v2468
    %v3269 = vpack.c.b16 %v2489, %v2479
    %v3270 = vpack.c.b16 %v2490, %v2480
    %v3271 = vpack.c.b16 %v2491, %v2481
    %v3272 = vpack.c.b16 %v2492, %v2482
    %v3273 = vpack.c.b16 %v2493, %v2483
    %v3274 = vpack.c.b16 %v2494, %v2484
    %v3275 = vpack.c.b16 %v2495, %v2485
    %v3276 = vpack.c.b16 %v2496, %v2486
    %v3277 = vpack.c.b16 %v2497, %v2487
    %v3278 = vpack.c.b16 %v2498, %v2488
    %v3279 = vpack.c.b16 %v2509, %v2499
    %v3280 = vpack.c.b16 %v2510, %v2500
    %v3281 = vpack.c.b16 %v2511, %v2501
    %v3282 = vpack.c.b16 %v2512, %v2502
    %v3283 = vpack.c.b16 %v2513, %v2503
    %v3284 = vpack.c.b16 %v2514, %v2504
    %v3285 = vpack.c.b16 %v2515, %v2505
    %v3286 = vpack.c.b16 %v2516, %v2506
    %v3287 = vpack.c.b16 %v2517, %v2507
    %v3288 = vpack.c.b16 %v2518, %v2508
    %v3289 = vpack.c.b16 %v2529, %v2519
    %v3290 = vpack.c.b16 %v2530, %v2520
    %v3291 = vpack.c.b16 %v2531, %v2521
    %v3292 = vpack.c.b16 %v2532, %v2522
    %v3293 = vpack.c.b16 %v2533, %v2523
    %v3294 = vpack.c.b16 %v2534, %v2524
    %v3295 = vpack.c.b16 %v2535, %v2525
    %v3296 = vpack.c.b16 %v2536, %v2526
    %v3297 = vpack.c.b16 %v2537, %v2527
    %v3298 = vpack.c.b16 %v2538, %v2528
    %v3299 = vpack.c.b16 %v2549, %v2539
    %v3300 = vpack.c.b16 %v2550, %v2540
    %v3301 = vpack.c.b16 %v2551, %v2541
    %v3302 = vpack.c.b16 %v2552, %v2542
    %v3303 = vpack.c.b16 %v2553, %v2543
    %v3304 = vpack.c.b16 %v2554, %v2544
    %v3305 = vpack.c.b16 %v2555, %v2545
    %v3306 = vpack.c.b16 %v2556, %v2546
    %v3307 = vpack.c.b16 %v2557, %v2547
    %v3308 = vpack.c.b16 %v2558, %v2548
    %v3309 = vpack.c.b16 %v2569, %v2559
    %v3310 = vpack.c.b16 %v2570, %v2560
    %v3311 = vpack.c.b16 %v2571, %v2561
    %v3312 = vpack.c.b16 %v2572, %v2562
    %v3313 = vpack.c.b16 %v2573, %v2563
    %v3314 = vpack.c.b16 %v2574, %v2564
    %v3315 = vpack.c.b16 %v2575, %v2565
    %v3316 = vpack.c.b16 %v2576, %v2566
    %v3317 = vpack.c.b16 %v2577, %v2567
    %v3318 = vpack.c.b16 %v2578, %v2568
    %v3319 = vpack.c.b16 %v2589, %v2579
    %v3320 = vpack.c.b16 %v2590, %v2580
    %v3321 = vpack.c.b16 %v2591, %v2581
    %v3322 = vpack.c.b16 %v2592, %v2582
    %v3323 = vpack.c.b16 %v2593, %v2583
    %v3324 = vpack.c.b16 %v2594, %v2584
    %v3325 = vpack.c.b16 %v2595, %v2585
    %v3326 = vpack.c.b16 %v2596, %v2586
    %v3327 = vpack.c.b16 %v2597, %v2587
    %v3328 = vpack.c.b16 %v2598, %v2588
    %v3329 = vpack.c.b16 %v2609, %v2599
    %v3330 = vpack.c.b16 %v2610, %v2600
    %v3331 = vpack.c.b16 %v2611, %v2601
    %v3332 = vpack.c.b16 %v2612, %v2602
    %v3333 = vpack.c.b16 %v2613, %v2603
    %v3334 = vpack.c.b16 %v2614, %v2604
    %v3335 = vpack.c.b16 %v2615, %v2605
    %v3336 = vpack.c.b16 %v2616, %v2606
    %v3337 = vpack.c.b16 %v2617, %v2607
    %v3338 = vpack.c.b16 %v2618, %v2608
    %v3339 = vpack.c.b16 %v2629, %v2619
    %v3340 = vpack.c.b16 %v2630, %v2620
    %v3341 = vpack.c.b16 %v2631, %v2621
    %v3342 = vpack.c.b16 %v2632, %v2622
    %v3343 = vpack.c.b16 %v2633, %v2623
    %v3344 = vpack.c.b16 %v2634, %v2624
    %v3345 = vpack.c.b16 %v2635, %v2625
    %v3346 = vpack.c.b16 %v2636, %v2626
    %v3347 = vpack.c.b16 %v2637, %v2627
    %v3348 = vpack.c.b16 %v2638, %v2628
    %v3349 = vpack.c.b16 %v2649, %v2639
    %v3350 = vpack.c.b16 %v2650, %v2640
    %v3351 = vpack.c.b16 %v2651, %v2641
    %v3352 = vpack.c.b16 %v2652, %v2642
    %v3353 = vpack.c.b16 %v2653, %v2643
    %v3354 = vpack.c.b16 %v2654, %v2644
    %v3355 = vpack.c.b16 %v2655, %v2645
    %v3356 = vpack.c.b16 %v2656, %v2646
    %v3357 = vpack.c.b16 %v2657, %v2647
    %v3358 = vpack.c.b16 %v2658, %v2648
    %v3359 = vpack.c.b16 %v2669, %v2659
    %v3360 = vpack.c.b16 %v2670, %v2660
    %v3361 = vpack.c.b16 %v2671, %v2661
    %v3362 = vpack.c.b16 %v2672, %v2662
    %v3363 = vpack.c.b16 %v2673, %v2663
    %v3364 = vpack.c.b16 %v2674, %v2664
    %v3365 = vpack.c.b16 %v2675, %v2665
    %v3366 = vpack.c.b16 %v2676, %v2666
    %v3367 = vpack.c.b16 %v2677, %v2667
    %v3368 = vpack.c.b16 %v2678, %v2668
    %v3369 = vpack.c.b16 %v2689, %v2679
    %v3370 = vpack.c.b16 %v2690, %v2680
    %v3371 = vpack.c.b16 %v2691, %v2681
    %v3372 = vpack.c.b16 %v2692, %v2682
    %v3373 = vpack.c.b16 %v2693, %v2683
    %v3374 = vpack.c.b16 %v2694, %v2684
    %v3375 = vpack.c.b16 %v2695, %v2685
    %v3376 = vpack.c.b16 %v2696, %v2686
    %v3377 = vpack.c.b16 %v2697, %v2687
    %v3378 = vpack.c.b16 %v2698, %v2688
    %v3379 = vpack.c.b16 %v2709, %v2699
    %v3380 = vpack.c.b16 %v2710, %v2700
    %v3381 = vpack.c.b16 %v2711, %v2701
    %v3382 = vpack.c.b16 %v2712, %v2702
    %v3383 = vpack.c.b16 %v2713, %v2703
    %v3384 = vpack.c.b16 %v2714, %v2704
    %v3385 = vpack.c.b16 %v2715, %v2705
    %v3386 = vpack.c.b16 %v2716, %v2706
    %v3387 = vpack.c.b16 %v2717, %v2707
    %v3388 = vpack.c.b16 %v2718, %v2708
    %v3389 = vpack.c.b16 %v2729, %v2719
    %v3390 = vpack.c.b16 %v2730, %v2720
    %v3391 = vpack.c.b16 %v2731, %v2721
    %v3392 = vpack.c.b16 %v2732, %v2722
    %v3393 = vpack.c.b16 %v2733, %v2723
    %v3394 = vpack.c.b16 %v2734, %v2724
    %v3395 = vpack.c.b16 %v2735, %v2725
    %v3396 = vpack.c.b16 %v2736, %v2726
    %v3397 = vpack.c.b16 %v2737, %v2727
    %v3398 = vpack.c.b16 %v2738, %v2728
    %v3399 = vpack.c.b16 %v2749, %v2739
    %v3400 = vpack.c.b16 %v2750, %v2740
    %v3401 = vpack.c.b16 %v2751, %v2741
    %v3402 = vpack.c.b16 %v2752, %v2742
    %v3403 = vpack.c.b16 %v2753, %v2743
    %v3404 = vpack.c.b16 %v2754, %v2744
    %v3405 = vpack.c.b16 %v2755, %v2745
    %v3406 = vpack.c.b16 %v2756, %v2746
    %v3407 = vpack.c.b16 %v2757, %v2747
    %v3408 = vpack.c.b16 %v2758, %v2748
    %v3409 = vpack.c.b16 %v2769, %v2759
    %v3410 = vpack.c.b16 %v2770, %v2760
    %v3411 = vpack.c.b16 %v2771, %v2761
    %v3412 = vpack.c.b16 %v2772, %v2762
    %v3413 = vpack.c.b16 %v2773, %v2763
    %v3414 = vpack.c.b16 %v2774, %v2764
    %v3415 = vpack.c.b16 %v2775, %v2765
    %v3416 = vpack.c.b16 %v2776, %v2766
    %v3417 = vpack.c.b16 %v2777, %v2767
    %v3418 = vpack.c.b16 %v2778, %v2768
    %4059 = vmatprep.subr.bf16.mxu0 %v2850
    %4060 = vmatpush1.bf16.msra.mxu0 %v2849
    %4061 = vmatprep.subr.bf16.mxu0 %v2840
    %4062 = vmatpush1.bf16.msra.mxu0 %v2839
    %4063 = vmatprep.subr.bf16.mxu0 %v2830
    %4064 = vmatpush1.bf16.msra.mxu0 %v2829
    %4065 = vmatprep.subr.bf16.mxu0 %v2820
    %4066 = vmatpush1.bf16.msra.mxu0 %v2819
    %4067 = vmatprep.subr.bf16.mxu0 %v2810
    %4068 = vmatpush1.bf16.msra.mxu0 %v2809
    %4069 = vmatprep.subr.bf16.mxu0 %v2800
    %4070 = vmatpush1.bf16.msra.mxu0 %v2799
    %4071 = vmatprep.subr.bf16.mxu0 %v2790
    %4072 = vmatpush1.bf16.msra.mxu0 %v2789
    %4073 = vmatprep.subr.bf16.mxu0 %v2780
    %4074 = vmatpush1.bf16.msra.mxu0 %v2779
    %4075 = vmatprep.subr.bf16.mxu0 %v2930
    %4076 = vmatpush2.bf16.msra.mxu0 %v2929
    %4077 = vmatprep.subr.bf16.mxu0 %v2920
    %4078 = vmatpush2.bf16.msra.mxu0 %v2919
    %4079 = vmatprep.subr.bf16.mxu0 %v2910
    %4080 = vmatpush2.bf16.msra.mxu0 %v2909
    %4081 = vmatprep.subr.bf16.mxu0 %v2900
    %4082 = vmatpush2.bf16.msra.mxu0 %v2899
    %4083 = vmatprep.subr.bf16.mxu0 %v2890
    %4084 = vmatpush2.bf16.msra.mxu0 %v2889
    %4085 = vmatprep.subr.bf16.mxu0 %v2880
    %4086 = vmatpush2.bf16.msra.mxu0 %v2879
    %4087 = vmatprep.subr.bf16.mxu0 %v2870
    %4088 = vmatpush2.bf16.msra.mxu0 %v2869
    %4089 = vmatprep.subr.bf16.mxu0 %v2860
    %4090 = vmatpush2.bf16.msra.mxu0 %v2859
    %4091 = vmatprep.mubr.bf16.mxu0 %v844
    %4092 = vmatmul.mubr.bf16.gmra.mxu0 %v843
    %v4093 = vpop.f32.mrf.mxu0
    %v4094 = vadd.f32 %v772, %v4093
    %v4095 = vpop.f32.mrf.mxu0
    %v4096 = vadd.f32 %v776, %v4095
    %v4097 = vpop.f32.mrf.mxu0
    %v4098 = vadd.f32 %v772, %v4097
    %v4099 = vpop.f32.mrf.mxu0
    %v4100 = vadd.f32 %v776, %v4099
    %4101 = vdwg.mxu0
    %4102 = vmatprep.subr.bf16.mxu0 %v3010
    %4103 = vmatpush1.bf16.msra.mxu0 %v3009
    %4104 = vmatprep.subr.bf16.mxu0 %v3000
    %4105 = vmatpush1.bf16.msra.mxu0 %v2999
    %4106 = vmatprep.subr.bf16.mxu0 %v2990
    %4107 = vmatpush1.bf16.msra.mxu0 %v2989
    %4108 = vmatprep.subr.bf16.mxu0 %v2980
    %4109 = vmatpush1.bf16.msra.mxu0 %v2979
    %4110 = vmatprep.subr.bf16.mxu0 %v2970
    %4111 = vmatpush1.bf16.msra.mxu0 %v2969
    %4112 = vmatprep.subr.bf16.mxu0 %v2960
    %4113 = vmatpush1.bf16.msra.mxu0 %v2959
    %4114 = vmatprep.subr.bf16.mxu0 %v2950
    %4115 = vmatpush1.bf16.msra.mxu0 %v2949
    %4116 = vmatprep.subr.bf16.mxu0 %v2940
    %4117 = vmatpush1.bf16.msra.mxu0 %v2939
    %4118 = vmatprep.subr.bf16.mxu0 %v3090
    %4119 = vmatpush2.bf16.msra.mxu0 %v3089
    %4120 = vmatprep.subr.bf16.mxu0 %v3080
    %4121 = vmatpush2.bf16.msra.mxu0 %v3079
    %4122 = vmatprep.subr.bf16.mxu0 %v3070
    %4123 = vmatpush2.bf16.msra.mxu0 %v3069
    %4124 = vmatprep.subr.bf16.mxu0 %v3060
    %4125 = vmatpush2.bf16.msra.mxu0 %v3059
    %4126 = vmatprep.subr.bf16.mxu0 %v3050
    %4127 = vmatpush2.bf16.msra.mxu0 %v3049
    %4128 = vmatprep.subr.bf16.mxu0 %v3040
    %4129 = vmatpush2.bf16.msra.mxu0 %v3039
    %4130 = vmatprep.subr.bf16.mxu0 %v3030
    %4131 = vmatpush2.bf16.msra.mxu0 %v3029
    %4132 = vmatprep.subr.bf16.mxu0 %v3020
    %4133 = vmatpush2.bf16.msra.mxu0 %v3019
    %4134 = vmatprep.mubr.bf16.mxu0 %v846
    %4135 = vmatmul.mubr.bf16.gmra.mxu0 %v845
    %v4136 = vpop.f32.mrf.mxu0
    %v4137 = vadd.f32 %v4094, %v4136
    %v4138 = vpop.f32.mrf.mxu0
    %v4139 = vadd.f32 %v4096, %v4138
    %v4140 = vpop.f32.mrf.mxu0
    %v4141 = vadd.f32 %v4098, %v4140
    %v4142 = vpop.f32.mrf.mxu0
    %v4143 = vadd.f32 %v4100, %v4142
    %4144 = vdwg.mxu0
    %4145 = vmatprep.subr.bf16.mxu0 %v3170
    %4146 = vmatpush1.bf16.msra.mxu0 %v3169
    %4147 = vmatprep.subr.bf16.mxu0 %v3160
    %4148 = vmatpush1.bf16.msra.mxu0 %v3159
    %4149 = vmatprep.subr.bf16.mxu0 %v3150
    %4150 = vmatpush1.bf16.msra.mxu0 %v3149
    %4151 = vmatprep.subr.bf16.mxu0 %v3140
    %4152 = vmatpush1.bf16.msra.mxu0 %v3139
    %4153 = vmatprep.subr.bf16.mxu0 %v3130
    %4154 = vmatpush1.bf16.msra.mxu0 %v3129
    %4155 = vmatprep.subr.bf16.mxu0 %v3120
    %4156 = vmatpush1.bf16.msra.mxu0 %v3119
    %4157 = vmatprep.subr.bf16.mxu0 %v3110
    %4158 = vmatpush1.bf16.msra.mxu0 %v3109
    %4159 = vmatprep.subr.bf16.mxu0 %v3100
    %4160 = vmatpush1.bf16.msra.mxu0 %v3099
    %4161 = vmatprep.subr.bf16.mxu0 %v3250
    %4162 = vmatpush2.bf16.msra.mxu0 %v3249
    %4163 = vmatprep.subr.bf16.mxu0 %v3240
    %4164 = vmatpush2.bf16.msra.mxu0 %v3239
    %4165 = vmatprep.subr.bf16.mxu0 %v3230
    %4166 = vmatpush2.bf16.msra.mxu0 %v3229
    %4167 = vmatprep.subr.bf16.mxu0 %v3220
    %4168 = vmatpush2.bf16.msra.mxu0 %v3219
    %4169 = vmatprep.subr.bf16.mxu0 %v3210
    %4170 = vmatpush2.bf16.msra.mxu0 %v3209
    %4171 = vmatprep.subr.bf16.mxu0 %v3200
    %4172 = vmatpush2.bf16.msra.mxu0 %v3199
    %4173 = vmatprep.subr.bf16.mxu0 %v3190
    %4174 = vmatpush2.bf16.msra.mxu0 %v3189
    %4175 = vmatprep.subr.bf16.mxu0 %v3180
    %4176 = vmatpush2.bf16.msra.mxu0 %v3179
    %4177 = vmatprep.mubr.bf16.mxu0 %v848
    %4178 = vmatmul.mubr.bf16.gmra.mxu0 %v847
    %v4179 = vpop.f32.mrf.mxu0
    %v4180 = vadd.f32 %v4137, %v4179
    %v4181 = vpop.f32.mrf.mxu0
    %v4182 = vadd.f32 %v4139, %v4181
    %v4183 = vpop.f32.mrf.mxu0
    %v4184 = vadd.f32 %v4141, %v4183
    %v4185 = vpop.f32.mrf.mxu0
    %v4186 = vadd.f32 %v4143, %v4185
    %4187 = vdwg.mxu0
    %4188 = vmatprep.subr.bf16.mxu0 %v3330
    %4189 = vmatpush1.bf16.msra.mxu0 %v3329
    %4190 = vmatprep.subr.bf16.mxu0 %v3320
    %4191 = vmatpush1.bf16.msra.mxu0 %v3319
    %4192 = vmatprep.subr.bf16.mxu0 %v3310
    %4193 = vmatpush1.bf16.msra.mxu0 %v3309
    %4194 = vmatprep.subr.bf16.mxu0 %v3300
    %4195 = vmatpush1.bf16.msra.mxu0 %v3299
    %4196 = vmatprep.subr.bf16.mxu0 %v3290
    %4197 = vmatpush1.bf16.msra.mxu0 %v3289
    %4198 = vmatprep.subr.bf16.mxu0 %v3280
    %4199 = vmatpush1.bf16.msra.mxu0 %v3279
    %4200 = vmatprep.subr.bf16.mxu0 %v3270
    %4201 = vmatpush1.bf16.msra.mxu0 %v3269
    %4202 = vmatprep.subr.bf16.mxu0 %v3260
    %4203 = vmatpush1.bf16.msra.mxu0 %v3259
    %4204 = vmatprep.subr.bf16.mxu0 %v3410
    %4205 = vmatpush2.bf16.msra.mxu0 %v3409
    %4206 = vmatprep.subr.bf16.mxu0 %v3400
    %4207 = vmatpush2.bf16.msra.mxu0 %v3399
    %4208 = vmatprep.subr.bf16.mxu0 %v3390
    %4209 = vmatpush2.bf16.msra.mxu0 %v3389
    %4210 = vmatprep.subr.bf16.mxu0 %v3380
    %4211 = vmatpush2.bf16.msra.mxu0 %v3379
    %4212 = vmatprep.subr.bf16.mxu0 %v3370
    %4213 = vmatpush2.bf16.msra.mxu0 %v3369
    %4214 = vmatprep.subr.bf16.mxu0 %v3360
    %4215 = vmatpush2.bf16.msra.mxu0 %v3359
    %4216 = vmatprep.subr.bf16.mxu0 %v3350
    %4217 = vmatpush2.bf16.msra.mxu0 %v3349
    %4218 = vmatprep.subr.bf16.mxu0 %v3340
    %4219 = vmatpush2.bf16.msra.mxu0 %v3339
    %4220 = vmatprep.mubr.bf16.mxu0 %v850
    %4221 = vmatmul.mubr.bf16.gmra.mxu0 %v849
    %v4222 = vpop.f32.mrf.mxu0
    %v4223 = vadd.f32 %v4180, %v4222
    %v4224 = vpop.f32.mrf.mxu0
    %v4225 = vadd.f32 %v4182, %v4224
    %v4226 = vpop.f32.mrf.mxu0
    %v4227 = vadd.f32 %v4184, %v4226
    %v4228 = vpop.f32.mrf.mxu0
    %v4229 = vadd.f32 %v4186, %v4228
    %4230 = vdwg.mxu0
    %4231 = vmatprep.subr.bf16.mxu0 %v2852
    %4232 = vmatpush1.bf16.msra.mxu0 %v2851
    %4233 = vmatprep.subr.bf16.mxu0 %v2842
    %4234 = vmatpush1.bf16.msra.mxu0 %v2841
    %4235 = vmatprep.subr.bf16.mxu0 %v2832
    %4236 = vmatpush1.bf16.msra.mxu0 %v2831
    %4237 = vmatprep.subr.bf16.mxu0 %v2822
    %4238 = vmatpush1.bf16.msra.mxu0 %v2821
    %4239 = vmatprep.subr.bf16.mxu0 %v2812
    %4240 = vmatpush1.bf16.msra.mxu0 %v2811
    %4241 = vmatprep.subr.bf16.mxu0 %v2802
    %4242 = vmatpush1.bf16.msra.mxu0 %v2801
    %4243 = vmatprep.subr.bf16.mxu0 %v2792
    %4244 = vmatpush1.bf16.msra.mxu0 %v2791
    %4245 = vmatprep.subr.bf16.mxu0 %v2782
    %4246 = vmatpush1.bf16.msra.mxu0 %v2781
    %4247 = vmatprep.subr.bf16.mxu0 %v2932
    %4248 = vmatpush2.bf16.msra.mxu0 %v2931
    %4249 = vmatprep.subr.bf16.mxu0 %v2922
    %4250 = vmatpush2.bf16.msra.mxu0 %v2921
    %4251 = vmatprep.subr.bf16.mxu0 %v2912
    %4252 = vmatpush2.bf16.msra.mxu0 %v2911
    %4253 = vmatprep.subr.bf16.mxu0 %v2902
    %4254 = vmatpush2.bf16.msra.mxu0 %v2901
    %4255 = vmatprep.subr.bf16.mxu0 %v2892
    %4256 = vmatpush2.bf16.msra.mxu0 %v2891
    %4257 = vmatprep.subr.bf16.mxu0 %v2882
    %4258 = vmatpush2.bf16.msra.mxu0 %v2881
    %4259 = vmatprep.subr.bf16.mxu0 %v2872
    %4260 = vmatpush2.bf16.msra.mxu0 %v2871
    %4261 = vmatprep.subr.bf16.mxu0 %v2862
    %4262 = vmatpush2.bf16.msra.mxu0 %v2861
    %4263 = vmatprep.mubr.bf16.mxu0 %v844
    %4264 = vmatmul.mubr.bf16.gmra.mxu0 %v843
    %v4265 = vpop.f32.mrf.mxu0
    %v4266 = vadd.f32 %v780, %v4265
    %v4267 = vpop.f32.mrf.mxu0
    %v4268 = vadd.f32 %v784, %v4267
    %v4269 = vpop.f32.mrf.mxu0
    %v4270 = vadd.f32 %v780, %v4269
    %v4271 = vpop.f32.mrf.mxu0
    %v4272 = vadd.f32 %v784, %v4271
    %4273 = vdwg.mxu0
    %4274 = vmatprep.subr.bf16.mxu0 %v3012
    %4275 = vmatpush1.bf16.msra.mxu0 %v3011
    %4276 = vmatprep.subr.bf16.mxu0 %v3002
    %4277 = vmatpush1.bf16.msra.mxu0 %v3001
    %4278 = vmatprep.subr.bf16.mxu0 %v2992
    %4279 = vmatpush1.bf16.msra.mxu0 %v2991
    %4280 = vmatprep.subr.bf16.mxu0 %v2982
    %4281 = vmatpush1.bf16.msra.mxu0 %v2981
    %4282 = vmatprep.subr.bf16.mxu0 %v2972
    %4283 = vmatpush1.bf16.msra.mxu0 %v2971
    %4284 = vmatprep.subr.bf16.mxu0 %v2962
    %4285 = vmatpush1.bf16.msra.mxu0 %v2961
    %4286 = vmatprep.subr.bf16.mxu0 %v2952
    %4287 = vmatpush1.bf16.msra.mxu0 %v2951
    %4288 = vmatprep.subr.bf16.mxu0 %v2942
    %4289 = vmatpush1.bf16.msra.mxu0 %v2941
    %4290 = vmatprep.subr.bf16.mxu0 %v3092
    %4291 = vmatpush2.bf16.msra.mxu0 %v3091
    %4292 = vmatprep.subr.bf16.mxu0 %v3082
    %4293 = vmatpush2.bf16.msra.mxu0 %v3081
    %4294 = vmatprep.subr.bf16.mxu0 %v3072
    %4295 = vmatpush2.bf16.msra.mxu0 %v3071
    %4296 = vmatprep.subr.bf16.mxu0 %v3062
    %4297 = vmatpush2.bf16.msra.mxu0 %v3061
    %4298 = vmatprep.subr.bf16.mxu0 %v3052
    %4299 = vmatpush2.bf16.msra.mxu0 %v3051
    %4300 = vmatprep.subr.bf16.mxu0 %v3042
    %4301 = vmatpush2.bf16.msra.mxu0 %v3041
    %4302 = vmatprep.subr.bf16.mxu0 %v3032
    %4303 = vmatpush2.bf16.msra.mxu0 %v3031
    %4304 = vmatprep.subr.bf16.mxu0 %v3022
    %4305 = vmatpush2.bf16.msra.mxu0 %v3021
    %4306 = vmatprep.mubr.bf16.mxu0 %v846
    %4307 = vmatmul.mubr.bf16.gmra.mxu0 %v845
    %v4308 = vpop.f32.mrf.mxu0
    %v4309 = vadd.f32 %v4266, %v4308
    %v4310 = vpop.f32.mrf.mxu0
    %v4311 = vadd.f32 %v4268, %v4310
    %v4312 = vpop.f32.mrf.mxu0
    %v4313 = vadd.f32 %v4270, %v4312
    %v4314 = vpop.f32.mrf.mxu0
    %v4315 = vadd.f32 %v4272, %v4314
    %4316 = vdwg.mxu0
    %4317 = vmatprep.subr.bf16.mxu0 %v3172
    %4318 = vmatpush1.bf16.msra.mxu0 %v3171
    %4319 = vmatprep.subr.bf16.mxu0 %v3162
    %4320 = vmatpush1.bf16.msra.mxu0 %v3161
    %4321 = vmatprep.subr.bf16.mxu0 %v3152
    %4322 = vmatpush1.bf16.msra.mxu0 %v3151
    %4323 = vmatprep.subr.bf16.mxu0 %v3142
    %4324 = vmatpush1.bf16.msra.mxu0 %v3141
    %4325 = vmatprep.subr.bf16.mxu0 %v3132
    %4326 = vmatpush1.bf16.msra.mxu0 %v3131
    %4327 = vmatprep.subr.bf16.mxu0 %v3122
    %4328 = vmatpush1.bf16.msra.mxu0 %v3121
    %4329 = vmatprep.subr.bf16.mxu0 %v3112
    %4330 = vmatpush1.bf16.msra.mxu0 %v3111
    %4331 = vmatprep.subr.bf16.mxu0 %v3102
    %4332 = vmatpush1.bf16.msra.mxu0 %v3101
    %4333 = vmatprep.subr.bf16.mxu0 %v3252
    %4334 = vmatpush2.bf16.msra.mxu0 %v3251
    %4335 = vmatprep.subr.bf16.mxu0 %v3242
    %4336 = vmatpush2.bf16.msra.mxu0 %v3241
    %4337 = vmatprep.subr.bf16.mxu0 %v3232
    %4338 = vmatpush2.bf16.msra.mxu0 %v3231
    %4339 = vmatprep.subr.bf16.mxu0 %v3222
    %4340 = vmatpush2.bf16.msra.mxu0 %v3221
    %4341 = vmatprep.subr.bf16.mxu0 %v3212
    %4342 = vmatpush2.bf16.msra.mxu0 %v3211
    %4343 = vmatprep.subr.bf16.mxu0 %v3202
    %4344 = vmatpush2.bf16.msra.mxu0 %v3201
    %4345 = vmatprep.subr.bf16.mxu0 %v3192
    %4346 = vmatpush2.bf16.msra.mxu0 %v3191
    %4347 = vmatprep.subr.bf16.mxu0 %v3182
    %4348 = vmatpush2.bf16.msra.mxu0 %v3181
    %4349 = vmatprep.mubr.bf16.mxu0 %v848
    %4350 = vmatmul.mubr.bf16.gmra.mxu0 %v847
    %v4351 = vpop.f32.mrf.mxu0
    %v4352 = vadd.f32 %v4309, %v4351
    %v4353 = vpop.f32.mrf.mxu0
    %v4354 = vadd.f32 %v4311, %v4353
    %v4355 = vpop.f32.mrf.mxu0
    %v4356 = vadd.f32 %v4313, %v4355
    %v4357 = vpop.f32.mrf.mxu0
    %v4358 = vadd.f32 %v4315, %v4357
    %4359 = vdwg.mxu0
    %4360 = vmatprep.subr.bf16.mxu0 %v3332
    %4361 = vmatpush1.bf16.msra.mxu0 %v3331
    %4362 = vmatprep.subr.bf16.mxu0 %v3322
    %4363 = vmatpush1.bf16.msra.mxu0 %v3321
    %4364 = vmatprep.subr.bf16.mxu0 %v3312
    %4365 = vmatpush1.bf16.msra.mxu0 %v3311
    %4366 = vmatprep.subr.bf16.mxu0 %v3302
    %4367 = vmatpush1.bf16.msra.mxu0 %v3301
    %4368 = vmatprep.subr.bf16.mxu0 %v3292
    %4369 = vmatpush1.bf16.msra.mxu0 %v3291
    %4370 = vmatprep.subr.bf16.mxu0 %v3282
    %4371 = vmatpush1.bf16.msra.mxu0 %v3281
    %4372 = vmatprep.subr.bf16.mxu0 %v3272
    %4373 = vmatpush1.bf16.msra.mxu0 %v3271
    %4374 = vmatprep.subr.bf16.mxu0 %v3262
    %4375 = vmatpush1.bf16.msra.mxu0 %v3261
    %4376 = vmatprep.subr.bf16.mxu0 %v3412
    %4377 = vmatpush2.bf16.msra.mxu0 %v3411
    %4378 = vmatprep.subr.bf16.mxu0 %v3402
    %4379 = vmatpush2.bf16.msra.mxu0 %v3401
    %4380 = vmatprep.subr.bf16.mxu0 %v3392
    %4381 = vmatpush2.bf16.msra.mxu0 %v3391
    %4382 = vmatprep.subr.bf16.mxu0 %v3382
    %4383 = vmatpush2.bf16.msra.mxu0 %v3381
    %4384 = vmatprep.subr.bf16.mxu0 %v3372
    %4385 = vmatpush2.bf16.msra.mxu0 %v3371
    %4386 = vmatprep.subr.bf16.mxu0 %v3362
    %4387 = vmatpush2.bf16.msra.mxu0 %v3361
    %4388 = vmatprep.subr.bf16.mxu0 %v3352
    %4389 = vmatpush2.bf16.msra.mxu0 %v3351
    %4390 = vmatprep.subr.bf16.mxu0 %v3342
    %4391 = vmatpush2.bf16.msra.mxu0 %v3341
    %4392 = vmatprep.mubr.bf16.mxu0 %v850
    %4393 = vmatmul.mubr.bf16.gmra.mxu0 %v849
    %v4394 = vpop.f32.mrf.mxu0
    %v4395 = vadd.f32 %v4352, %v4394
    %v4396 = vpop.f32.mrf.mxu0
    %v4397 = vadd.f32 %v4354, %v4396
    %v4398 = vpop.f32.mrf.mxu0
    %v4399 = vadd.f32 %v4356, %v4398
    %v4400 = vpop.f32.mrf.mxu0
    %v4401 = vadd.f32 %v4358, %v4400
    %4402 = vdwg.mxu0
    %4403 = vmatprep.subr.bf16.mxu0 %v2854
    %4404 = vmatpush1.bf16.msra.mxu0 %v2853
    %4405 = vmatprep.subr.bf16.mxu0 %v2844
    %4406 = vmatpush1.bf16.msra.mxu0 %v2843
    %4407 = vmatprep.subr.bf16.mxu0 %v2834
    %4408 = vmatpush1.bf16.msra.mxu0 %v2833
    %4409 = vmatprep.subr.bf16.mxu0 %v2824
    %4410 = vmatpush1.bf16.msra.mxu0 %v2823
    %4411 = vmatprep.subr.bf16.mxu0 %v2814
    %4412 = vmatpush1.bf16.msra.mxu0 %v2813
    %4413 = vmatprep.subr.bf16.mxu0 %v2804
    %4414 = vmatpush1.bf16.msra.mxu0 %v2803
    %4415 = vmatprep.subr.bf16.mxu0 %v2794
    %4416 = vmatpush1.bf16.msra.mxu0 %v2793
    %4417 = vmatprep.subr.bf16.mxu0 %v2784
    %4418 = vmatpush1.bf16.msra.mxu0 %v2783
    %4419 = vmatprep.subr.bf16.mxu0 %v2934
    %4420 = vmatpush2.bf16.msra.mxu0 %v2933
    %4421 = vmatprep.subr.bf16.mxu0 %v2924
    %4422 = vmatpush2.bf16.msra.mxu0 %v2923
    %4423 = vmatprep.subr.bf16.mxu0 %v2914
    %4424 = vmatpush2.bf16.msra.mxu0 %v2913
    %4425 = vmatprep.subr.bf16.mxu0 %v2904
    %4426 = vmatpush2.bf16.msra.mxu0 %v2903
    %4427 = vmatprep.subr.bf16.mxu0 %v2894
    %4428 = vmatpush2.bf16.msra.mxu0 %v2893
    %4429 = vmatprep.subr.bf16.mxu0 %v2884
    %4430 = vmatpush2.bf16.msra.mxu0 %v2883
    %4431 = vmatprep.subr.bf16.mxu0 %v2874
    %4432 = vmatpush2.bf16.msra.mxu0 %v2873
    %4433 = vmatprep.subr.bf16.mxu0 %v2864
    %4434 = vmatpush2.bf16.msra.mxu0 %v2863
    %4435 = vmatprep.mubr.bf16.mxu0 %v844
    %4436 = vmatmul.mubr.bf16.gmra.mxu0 %v843
    %v4437 = vpop.f32.mrf.mxu0
    %v4438 = vadd.f32 %v788, %v4437
    %v4439 = vpop.f32.mrf.mxu0
    %v4440 = vadd.f32 %v792, %v4439
    %v4441 = vpop.f32.mrf.mxu0
    %v4442 = vadd.f32 %v788, %v4441
    %v4443 = vpop.f32.mrf.mxu0
    %v4444 = vadd.f32 %v792, %v4443
    %4445 = vdwg.mxu0
    %4446 = vmatprep.subr.bf16.mxu0 %v3014
    %4447 = vmatpush1.bf16.msra.mxu0 %v3013
    %4448 = vmatprep.subr.bf16.mxu0 %v3004
    %4449 = vmatpush1.bf16.msra.mxu0 %v3003
    %4450 = vmatprep.subr.bf16.mxu0 %v2994
    %4451 = vmatpush1.bf16.msra.mxu0 %v2993
    %4452 = vmatprep.subr.bf16.mxu0 %v2984
    %4453 = vmatpush1.bf16.msra.mxu0 %v2983
    %4454 = vmatprep.subr.bf16.mxu0 %v2974
    %4455 = vmatpush1.bf16.msra.mxu0 %v2973
    %4456 = vmatprep.subr.bf16.mxu0 %v2964
    %4457 = vmatpush1.bf16.msra.mxu0 %v2963
    %4458 = vmatprep.subr.bf16.mxu0 %v2954
    %4459 = vmatpush1.bf16.msra.mxu0 %v2953
    %4460 = vmatprep.subr.bf16.mxu0 %v2944
    %4461 = vmatpush1.bf16.msra.mxu0 %v2943
    %4462 = vmatprep.subr.bf16.mxu0 %v3094
    %4463 = vmatpush2.bf16.msra.mxu0 %v3093
    %4464 = vmatprep.subr.bf16.mxu0 %v3084
    %4465 = vmatpush2.bf16.msra.mxu0 %v3083
    %4466 = vmatprep.subr.bf16.mxu0 %v3074
    %4467 = vmatpush2.bf16.msra.mxu0 %v3073
    %4468 = vmatprep.subr.bf16.mxu0 %v3064
    %4469 = vmatpush2.bf16.msra.mxu0 %v3063
    %4470 = vmatprep.subr.bf16.mxu0 %v3054
    %4471 = vmatpush2.bf16.msra.mxu0 %v3053
    %4472 = vmatprep.subr.bf16.mxu0 %v3044
    %4473 = vmatpush2.bf16.msra.mxu0 %v3043
    %4474 = vmatprep.subr.bf16.mxu0 %v3034
    %4475 = vmatpush2.bf16.msra.mxu0 %v3033
    %4476 = vmatprep.subr.bf16.mxu0 %v3024
    %4477 = vmatpush2.bf16.msra.mxu0 %v3023
    %4478 = vmatprep.mubr.bf16.mxu0 %v846
    %4479 = vmatmul.mubr.bf16.gmra.mxu0 %v845
    %v4480 = vpop.f32.mrf.mxu0
    %v4481 = vadd.f32 %v4438, %v4480
    %v4482 = vpop.f32.mrf.mxu0
    %v4483 = vadd.f32 %v4440, %v4482
    %v4484 = vpop.f32.mrf.mxu0
    %v4485 = vadd.f32 %v4442, %v4484
    %v4486 = vpop.f32.mrf.mxu0
    %v4487 = vadd.f32 %v4444, %v4486
    %4488 = vdwg.mxu0
    %4489 = vmatprep.subr.bf16.mxu0 %v3174
    %4490 = vmatpush1.bf16.msra.mxu0 %v3173
    %4491 = vmatprep.subr.bf16.mxu0 %v3164
    %4492 = vmatpush1.bf16.msra.mxu0 %v3163
    %4493 = vmatprep.subr.bf16.mxu0 %v3154
    %4494 = vmatpush1.bf16.msra.mxu0 %v3153
    %4495 = vmatprep.subr.bf16.mxu0 %v3144
    %4496 = vmatpush1.bf16.msra.mxu0 %v3143
    %4497 = vmatprep.subr.bf16.mxu0 %v3134
    %4498 = vmatpush1.bf16.msra.mxu0 %v3133
    %4499 = vmatprep.subr.bf16.mxu0 %v3124
    %4500 = vmatpush1.bf16.msra.mxu0 %v3123
    %4501 = vmatprep.subr.bf16.mxu0 %v3114
    %4502 = vmatpush1.bf16.msra.mxu0 %v3113
    %4503 = vmatprep.subr.bf16.mxu0 %v3104
    %4504 = vmatpush1.bf16.msra.mxu0 %v3103
    %4505 = vmatprep.subr.bf16.mxu0 %v3254
    %4506 = vmatpush2.bf16.msra.mxu0 %v3253
    %4507 = vmatprep.subr.bf16.mxu0 %v3244
    %4508 = vmatpush2.bf16.msra.mxu0 %v3243
    %4509 = vmatprep.subr.bf16.mxu0 %v3234
    %4510 = vmatpush2.bf16.msra.mxu0 %v3233
    %4511 = vmatprep.subr.bf16.mxu0 %v3224
    %4512 = vmatpush2.bf16.msra.mxu0 %v3223
    %4513 = vmatprep.subr.bf16.mxu0 %v3214
    %4514 = vmatpush2.bf16.msra.mxu0 %v3213
    %4515 = vmatprep.subr.bf16.mxu0 %v3204
    %4516 = vmatpush2.bf16.msra.mxu0 %v3203
    %4517 = vmatprep.subr.bf16.mxu0 %v3194
    %4518 = vmatpush2.bf16.msra.mxu0 %v3193
    %4519 = vmatprep.subr.bf16.mxu0 %v3184
    %4520 = vmatpush2.bf16.msra.mxu0 %v3183
    %4521 = vmatprep.mubr.bf16.mxu0 %v848
    %4522 = vmatmul.mubr.bf16.gmra.mxu0 %v847
    %v4523 = vpop.f32.mrf.mxu0
    %v4524 = vadd.f32 %v4481, %v4523
    %v4525 = vpop.f32.mrf.mxu0
    %v4526 = vadd.f32 %v4483, %v4525
    %v4527 = vpop.f32.mrf.mxu0
    %v4528 = vadd.f32 %v4485, %v4527
    %v4529 = vpop.f32.mrf.mxu0
    %v4530 = vadd.f32 %v4487, %v4529
    %4531 = vdwg.mxu0
    %4532 = vmatprep.subr.bf16.mxu0 %v3334
    %4533 = vmatpush1.bf16.msra.mxu0 %v3333
    %4534 = vmatprep.subr.bf16.mxu0 %v3324
    %4535 = vmatpush1.bf16.msra.mxu0 %v3323
    %4536 = vmatprep.subr.bf16.mxu0 %v3314
    %4537 = vmatpush1.bf16.msra.mxu0 %v3313
    %4538 = vmatprep.subr.bf16.mxu0 %v3304
    %4539 = vmatpush1.bf16.msra.mxu0 %v3303
    %4540 = vmatprep.subr.bf16.mxu0 %v3294
    %4541 = vmatpush1.bf16.msra.mxu0 %v3293
    %4542 = vmatprep.subr.bf16.mxu0 %v3284
    %4543 = vmatpush1.bf16.msra.mxu0 %v3283
    %4544 = vmatprep.subr.bf16.mxu0 %v3274
    %4545 = vmatpush1.bf16.msra.mxu0 %v3273
    %4546 = vmatprep.subr.bf16.mxu0 %v3264
    %4547 = vmatpush1.bf16.msra.mxu0 %v3263
    %4548 = vmatprep.subr.bf16.mxu0 %v3414
    %4549 = vmatpush2.bf16.msra.mxu0 %v3413
    %4550 = vmatprep.subr.bf16.mxu0 %v3404
    %4551 = vmatpush2.bf16.msra.mxu0 %v3403
    %4552 = vmatprep.subr.bf16.mxu0 %v3394
    %4553 = vmatpush2.bf16.msra.mxu0 %v3393
    %4554 = vmatprep.subr.bf16.mxu0 %v3384
    %4555 = vmatpush2.bf16.msra.mxu0 %v3383
    %4556 = vmatprep.subr.bf16.mxu0 %v3374
    %4557 = vmatpush2.bf16.msra.mxu0 %v3373
    %4558 = vmatprep.subr.bf16.mxu0 %v3364
    %4559 = vmatpush2.bf16.msra.mxu0 %v3363
    %4560 = vmatprep.subr.bf16.mxu0 %v3354
    %4561 = vmatpush2.bf16.msra.mxu0 %v3353
    %4562 = vmatprep.subr.bf16.mxu0 %v3344
    %4563 = vmatpush2.bf16.msra.mxu0 %v3343
    %4564 = vmatprep.mubr.bf16.mxu0 %v850
    %4565 = vmatmul.mubr.bf16.gmra.mxu0 %v849
    %v4566 = vpop.f32.mrf.mxu0
    %v4567 = vadd.f32 %v4524, %v4566
    %v4568 = vpop.f32.mrf.mxu0
    %v4569 = vadd.f32 %v4526, %v4568
    %v4570 = vpop.f32.mrf.mxu0
    %v4571 = vadd.f32 %v4528, %v4570
    %v4572 = vpop.f32.mrf.mxu0
    %v4573 = vadd.f32 %v4530, %v4572
    %4574 = vdwg.mxu0
    %4575 = vmatprep.subr.bf16.mxu0 %v2856
    %4576 = vmatpush1.bf16.msra.mxu0 %v2855
    %4577 = vmatprep.subr.bf16.mxu0 %v2846
    %4578 = vmatpush1.bf16.msra.mxu0 %v2845
    %4579 = vmatprep.subr.bf16.mxu0 %v2836
    %4580 = vmatpush1.bf16.msra.mxu0 %v2835
    %4581 = vmatprep.subr.bf16.mxu0 %v2826
    %4582 = vmatpush1.bf16.msra.mxu0 %v2825
    %4583 = vmatprep.subr.bf16.mxu0 %v2816
    %4584 = vmatpush1.bf16.msra.mxu0 %v2815
    %4585 = vmatprep.subr.bf16.mxu0 %v2806
    %4586 = vmatpush1.bf16.msra.mxu0 %v2805
    %4587 = vmatprep.subr.bf16.mxu0 %v2796
    %4588 = vmatpush1.bf16.msra.mxu0 %v2795
    %4589 = vmatprep.subr.bf16.mxu0 %v2786
    %4590 = vmatpush1.bf16.msra.mxu0 %v2785
    %4591 = vmatprep.subr.bf16.mxu0 %v2936
    %4592 = vmatpush2.bf16.msra.mxu0 %v2935
    %4593 = vmatprep.subr.bf16.mxu0 %v2926
    %4594 = vmatpush2.bf16.msra.mxu0 %v2925
    %4595 = vmatprep.subr.bf16.mxu0 %v2916
    %4596 = vmatpush2.bf16.msra.mxu0 %v2915
    %4597 = vmatprep.subr.bf16.mxu0 %v2906
    %4598 = vmatpush2.bf16.msra.mxu0 %v2905
    %4599 = vmatprep.subr.bf16.mxu0 %v2896
    %4600 = vmatpush2.bf16.msra.mxu0 %v2895
    %4601 = vmatprep.subr.bf16.mxu0 %v2886
    %4602 = vmatpush2.bf16.msra.mxu0 %v2885
    %4603 = vmatprep.subr.bf16.mxu0 %v2876
    %4604 = vmatpush2.bf16.msra.mxu0 %v2875
    %4605 = vmatprep.subr.bf16.mxu0 %v2866
    %4606 = vmatpush2.bf16.msra.mxu0 %v2865
    %4607 = vmatprep.mubr.bf16.mxu0 %v844
    %4608 = vmatmul.mubr.bf16.gmra.mxu0 %v843
    %v4609 = vpop.f32.mrf.mxu0
    %v4610 = vadd.f32 %v796, %v4609
    %v4611 = vpop.f32.mrf.mxu0
    %v4612 = vadd.f32 %v800, %v4611
    %v4613 = vpop.f32.mrf.mxu0
    %v4614 = vadd.f32 %v796, %v4613
    %v4615 = vpop.f32.mrf.mxu0
    %v4616 = vadd.f32 %v800, %v4615
    %4617 = vdwg.mxu0
    %4618 = vmatprep.subr.bf16.mxu0 %v3016
    %4619 = vmatpush1.bf16.msra.mxu0 %v3015
    %4620 = vmatprep.subr.bf16.mxu0 %v3006
    %4621 = vmatpush1.bf16.msra.mxu0 %v3005
    %4622 = vmatprep.subr.bf16.mxu0 %v2996
    %4623 = vmatpush1.bf16.msra.mxu0 %v2995
    %4624 = vmatprep.subr.bf16.mxu0 %v2986
    %4625 = vmatpush1.bf16.msra.mxu0 %v2985
    %4626 = vmatprep.subr.bf16.mxu0 %v2976
    %4627 = vmatpush1.bf16.msra.mxu0 %v2975
    %4628 = vmatprep.subr.bf16.mxu0 %v2966
    %4629 = vmatpush1.bf16.msra.mxu0 %v2965
    %4630 = vmatprep.subr.bf16.mxu0 %v2956
    %4631 = vmatpush1.bf16.msra.mxu0 %v2955
    %4632 = vmatprep.subr.bf16.mxu0 %v2946
    %4633 = vmatpush1.bf16.msra.mxu0 %v2945
    %4634 = vmatprep.subr.bf16.mxu0 %v3096
    %4635 = vmatpush2.bf16.msra.mxu0 %v3095
    %4636 = vmatprep.subr.bf16.mxu0 %v3086
    %4637 = vmatpush2.bf16.msra.mxu0 %v3085
    %4638 = vmatprep.subr.bf16.mxu0 %v3076
    %4639 = vmatpush2.bf16.msra.mxu0 %v3075
    %4640 = vmatprep.subr.bf16.mxu0 %v3066
    %4641 = vmatpush2.bf16.msra.mxu0 %v3065
    %4642 = vmatprep.subr.bf16.mxu0 %v3056
    %4643 = vmatpush2.bf16.msra.mxu0 %v3055
    %4644 = vmatprep.subr.bf16.mxu0 %v3046
    %4645 = vmatpush2.bf16.msra.mxu0 %v3045
    %4646 = vmatprep.subr.bf16.mxu0 %v3036
    %4647 = vmatpush2.bf16.msra.mxu0 %v3035
    %4648 = vmatprep.subr.bf16.mxu0 %v3026
    %4649 = vmatpush2.bf16.msra.mxu0 %v3025
    %4650 = vmatprep.mubr.bf16.mxu0 %v846
    %4651 = vmatmul.mubr.bf16.gmra.mxu0 %v845
    %v4652 = vpop.f32.mrf.mxu0
    %v4653 = vadd.f32 %v4610, %v4652
    %v4654 = vpop.f32.mrf.mxu0
    %v4655 = vadd.f32 %v4612, %v4654
    %v4656 = vpop.f32.mrf.mxu0
    %v4657 = vadd.f32 %v4614, %v4656
    %v4658 = vpop.f32.mrf.mxu0
    %v4659 = vadd.f32 %v4616, %v4658
    %4660 = vdwg.mxu0
    %4661 = vmatprep.subr.bf16.mxu0 %v3176
    %4662 = vmatpush1.bf16.msra.mxu0 %v3175
    %4663 = vmatprep.subr.bf16.mxu0 %v3166
    %4664 = vmatpush1.bf16.msra.mxu0 %v3165
    %4665 = vmatprep.subr.bf16.mxu0 %v3156
    %4666 = vmatpush1.bf16.msra.mxu0 %v3155
    %4667 = vmatprep.subr.bf16.mxu0 %v3146
    %4668 = vmatpush1.bf16.msra.mxu0 %v3145
    %4669 = vmatprep.subr.bf16.mxu0 %v3136
    %4670 = vmatpush1.bf16.msra.mxu0 %v3135
    %4671 = vmatprep.subr.bf16.mxu0 %v3126
    %4672 = vmatpush1.bf16.msra.mxu0 %v3125
    %4673 = vmatprep.subr.bf16.mxu0 %v3116
    %4674 = vmatpush1.bf16.msra.mxu0 %v3115
    %4675 = vmatprep.subr.bf16.mxu0 %v3106
    %4676 = vmatpush1.bf16.msra.mxu0 %v3105
    %4677 = vmatprep.subr.bf16.mxu0 %v3256
    %4678 = vmatpush2.bf16.msra.mxu0 %v3255
    %4679 = vmatprep.subr.bf16.mxu0 %v3246
    %4680 = vmatpush2.bf16.msra.mxu0 %v3245
    %4681 = vmatprep.subr.bf16.mxu0 %v3236
    %4682 = vmatpush2.bf16.msra.mxu0 %v3235
    %4683 = vmatprep.subr.bf16.mxu0 %v3226
    %4684 = vmatpush2.bf16.msra.mxu0 %v3225
    %4685 = vmatprep.subr.bf16.mxu0 %v3216
    %4686 = vmatpush2.bf16.msra.mxu0 %v3215
    %4687 = vmatprep.subr.bf16.mxu0 %v3206
    %4688 = vmatpush2.bf16.msra.mxu0 %v3205
    %4689 = vmatprep.subr.bf16.mxu0 %v3196
    %4690 = vmatpush2.bf16.msra.mxu0 %v3195
    %4691 = vmatprep.subr.bf16.mxu0 %v3186
    %4692 = vmatpush2.bf16.msra.mxu0 %v3185
    %4693 = vmatprep.mubr.bf16.mxu0 %v848
    %4694 = vmatmul.mubr.bf16.gmra.mxu0 %v847
    %v4695 = vpop.f32.mrf.mxu0
    %v4696 = vadd.f32 %v4653, %v4695
    %v4697 = vpop.f32.mrf.mxu0
    %v4698 = vadd.f32 %v4655, %v4697
    %v4699 = vpop.f32.mrf.mxu0
    %v4700 = vadd.f32 %v4657, %v4699
    %v4701 = vpop.f32.mrf.mxu0
    %v4702 = vadd.f32 %v4659, %v4701
    %4703 = vdwg.mxu0
    %4704 = vmatprep.subr.bf16.mxu0 %v3336
    %4705 = vmatpush1.bf16.msra.mxu0 %v3335
    %4706 = vmatprep.subr.bf16.mxu0 %v3326
    %4707 = vmatpush1.bf16.msra.mxu0 %v3325
    %4708 = vmatprep.subr.bf16.mxu0 %v3316
    %4709 = vmatpush1.bf16.msra.mxu0 %v3315
    %4710 = vmatprep.subr.bf16.mxu0 %v3306
    %4711 = vmatpush1.bf16.msra.mxu0 %v3305
    %4712 = vmatprep.subr.bf16.mxu0 %v3296
    %4713 = vmatpush1.bf16.msra.mxu0 %v3295
    %4714 = vmatprep.subr.bf16.mxu0 %v3286
    %4715 = vmatpush1.bf16.msra.mxu0 %v3285
    %4716 = vmatprep.subr.bf16.mxu0 %v3276
    %4717 = vmatpush1.bf16.msra.mxu0 %v3275
    %4718 = vmatprep.subr.bf16.mxu0 %v3266
    %4719 = vmatpush1.bf16.msra.mxu0 %v3265
    %4720 = vmatprep.subr.bf16.mxu0 %v3416
    %4721 = vmatpush2.bf16.msra.mxu0 %v3415
    %4722 = vmatprep.subr.bf16.mxu0 %v3406
    %4723 = vmatpush2.bf16.msra.mxu0 %v3405
    %4724 = vmatprep.subr.bf16.mxu0 %v3396
    %4725 = vmatpush2.bf16.msra.mxu0 %v3395
    %4726 = vmatprep.subr.bf16.mxu0 %v3386
    %4727 = vmatpush2.bf16.msra.mxu0 %v3385
    %4728 = vmatprep.subr.bf16.mxu0 %v3376
    %4729 = vmatpush2.bf16.msra.mxu0 %v3375
    %4730 = vmatprep.subr.bf16.mxu0 %v3366
    %4731 = vmatpush2.bf16.msra.mxu0 %v3365
    %4732 = vmatprep.subr.bf16.mxu0 %v3356
    %4733 = vmatpush2.bf16.msra.mxu0 %v3355
    %4734 = vmatprep.subr.bf16.mxu0 %v3346
    %4735 = vmatpush2.bf16.msra.mxu0 %v3345
    %4736 = vmatprep.mubr.bf16.mxu0 %v850
    %4737 = vmatmul.mubr.bf16.gmra.mxu0 %v849
    %v4738 = vpop.f32.mrf.mxu0
    %v4739 = vadd.f32 %v4696, %v4738
    %v4740 = vpop.f32.mrf.mxu0
    %v4741 = vadd.f32 %v4698, %v4740
    %v4742 = vpop.f32.mrf.mxu0
    %v4743 = vadd.f32 %v4700, %v4742
    %v4744 = vpop.f32.mrf.mxu0
    %v4745 = vadd.f32 %v4702, %v4744
    %4746 = vdwg.mxu0
    %4747 = vmatprep.subr.bf16.mxu0 %v2858
    %4748 = vmatpush1.bf16.msra.mxu0 %v2857
    %4749 = vmatprep.subr.bf16.mxu0 %v2848
    %4750 = vmatpush1.bf16.msra.mxu0 %v2847
    %4751 = vmatprep.subr.bf16.mxu0 %v2838
    %4752 = vmatpush1.bf16.msra.mxu0 %v2837
    %4753 = vmatprep.subr.bf16.mxu0 %v2828
    %4754 = vmatpush1.bf16.msra.mxu0 %v2827
    %4755 = vmatprep.subr.bf16.mxu0 %v2818
    %4756 = vmatpush1.bf16.msra.mxu0 %v2817
    %4757 = vmatprep.subr.bf16.mxu0 %v2808
    %4758 = vmatpush1.bf16.msra.mxu0 %v2807
    %4759 = vmatprep.subr.bf16.mxu0 %v2798
    %4760 = vmatpush1.bf16.msra.mxu0 %v2797
    %4761 = vmatprep.subr.bf16.mxu0 %v2788
    %4762 = vmatpush1.bf16.msra.mxu0 %v2787
    %4763 = vmatprep.subr.bf16.mxu0 %v2938
    %4764 = vmatpush2.bf16.msra.mxu0 %v2937
    %4765 = vmatprep.subr.bf16.mxu0 %v2928
    %4766 = vmatpush2.bf16.msra.mxu0 %v2927
    %4767 = vmatprep.subr.bf16.mxu0 %v2918
    %4768 = vmatpush2.bf16.msra.mxu0 %v2917
    %4769 = vmatprep.subr.bf16.mxu0 %v2908
    %4770 = vmatpush2.bf16.msra.mxu0 %v2907
    %4771 = vmatprep.subr.bf16.mxu0 %v2898
    %4772 = vmatpush2.bf16.msra.mxu0 %v2897
    %4773 = vmatprep.subr.bf16.mxu0 %v2888
    %4774 = vmatpush2.bf16.msra.mxu0 %v2887
    %4775 = vmatprep.subr.bf16.mxu0 %v2878
    %4776 = vmatpush2.bf16.msra.mxu0 %v2877
    %4777 = vmatprep.subr.bf16.mxu0 %v2868
    %4778 = vmatpush2.bf16.msra.mxu0 %v2867
    %4779 = vmatprep.mubr.bf16.mxu0 %v844
    %4780 = vmatmul.mubr.bf16.gmra.mxu0 %v843
    %v4781 = vpop.f32.mrf.mxu0
    %v4782 = vadd.f32 %v804, %v4781
    %v4783 = vpop.f32.mrf.mxu0
    %v4784 = vadd.f32 %v808, %v4783
    %v4785 = vpop.f32.mrf.mxu0
    %v4786 = vadd.f32 %v804, %v4785
    %v4787 = vpop.f32.mrf.mxu0
    %v4788 = vadd.f32 %v808, %v4787
    %4789 = vdwg.mxu0
    %4790 = vmatprep.subr.bf16.mxu0 %v3018
    %4791 = vmatpush1.bf16.msra.mxu0 %v3017
    %4792 = vmatprep.subr.bf16.mxu0 %v3008
    %4793 = vmatpush1.bf16.msra.mxu0 %v3007
    %4794 = vmatprep.subr.bf16.mxu0 %v2998
    %4795 = vmatpush1.bf16.msra.mxu0 %v2997
    %4796 = vmatprep.subr.bf16.mxu0 %v2988
    %4797 = vmatpush1.bf16.msra.mxu0 %v2987
    %4798 = vmatprep.subr.bf16.mxu0 %v2978
    %4799 = vmatpush1.bf16.msra.mxu0 %v2977
    %4800 = vmatprep.subr.bf16.mxu0 %v2968
    %4801 = vmatpush1.bf16.msra.mxu0 %v2967
    %4802 = vmatprep.subr.bf16.mxu0 %v2958
    %4803 = vmatpush1.bf16.msra.mxu0 %v2957
    %4804 = vmatprep.subr.bf16.mxu0 %v2948
    %4805 = vmatpush1.bf16.msra.mxu0 %v2947
    %4806 = vmatprep.subr.bf16.mxu0 %v3098
    %4807 = vmatpush2.bf16.msra.mxu0 %v3097
    %4808 = vmatprep.subr.bf16.mxu0 %v3088
    %4809 = vmatpush2.bf16.msra.mxu0 %v3087
    %4810 = vmatprep.subr.bf16.mxu0 %v3078
    %4811 = vmatpush2.bf16.msra.mxu0 %v3077
    %4812 = vmatprep.subr.bf16.mxu0 %v3068
    %4813 = vmatpush2.bf16.msra.mxu0 %v3067
    %4814 = vmatprep.subr.bf16.mxu0 %v3058
    %4815 = vmatpush2.bf16.msra.mxu0 %v3057
    %4816 = vmatprep.subr.bf16.mxu0 %v3048
    %4817 = vmatpush2.bf16.msra.mxu0 %v3047
    %4818 = vmatprep.subr.bf16.mxu0 %v3038
    %4819 = vmatpush2.bf16.msra.mxu0 %v3037
    %4820 = vmatprep.subr.bf16.mxu0 %v3028
    %4821 = vmatpush2.bf16.msra.mxu0 %v3027
    %4822 = vmatprep.mubr.bf16.mxu0 %v846
    %4823 = vmatmul.mubr.bf16.gmra.mxu0 %v845
    %v4824 = vpop.f32.mrf.mxu0
    %v4825 = vadd.f32 %v4782, %v4824
    %v4826 = vpop.f32.mrf.mxu0
    %v4827 = vadd.f32 %v4784, %v4826
    %v4828 = vpop.f32.mrf.mxu0
    %v4829 = vadd.f32 %v4786, %v4828
    %v4830 = vpop.f32.mrf.mxu0
    %v4831 = vadd.f32 %v4788, %v4830
    %4832 = vdwg.mxu0
    %4833 = vmatprep.subr.bf16.mxu0 %v3178
    %4834 = vmatpush1.bf16.msra.mxu0 %v3177
    %4835 = vmatprep.subr.bf16.mxu0 %v3168
    %4836 = vmatpush1.bf16.msra.mxu0 %v3167
    %4837 = vmatprep.subr.bf16.mxu0 %v3158
    %4838 = vmatpush1.bf16.msra.mxu0 %v3157
    %4839 = vmatprep.subr.bf16.mxu0 %v3148
    %4840 = vmatpush1.bf16.msra.mxu0 %v3147
    %4841 = vmatprep.subr.bf16.mxu0 %v3138
    %4842 = vmatpush1.bf16.msra.mxu0 %v3137
    %4843 = vmatprep.subr.bf16.mxu0 %v3128
    %4844 = vmatpush1.bf16.msra.mxu0 %v3127
    %4845 = vmatprep.subr.bf16.mxu0 %v3118
    %4846 = vmatpush1.bf16.msra.mxu0 %v3117
    %4847 = vmatprep.subr.bf16.mxu0 %v3108
    %4848 = vmatpush1.bf16.msra.mxu0 %v3107
    %4849 = vmatprep.subr.bf16.mxu0 %v3258
    %4850 = vmatpush2.bf16.msra.mxu0 %v3257
    %4851 = vmatprep.subr.bf16.mxu0 %v3248
    %4852 = vmatpush2.bf16.msra.mxu0 %v3247
    %4853 = vmatprep.subr.bf16.mxu0 %v3238
    %4854 = vmatpush2.bf16.msra.mxu0 %v3237
    %4855 = vmatprep.subr.bf16.mxu0 %v3228
    %4856 = vmatpush2.bf16.msra.mxu0 %v3227
    %4857 = vmatprep.subr.bf16.mxu0 %v3218
    %4858 = vmatpush2.bf16.msra.mxu0 %v3217
    %4859 = vmatprep.subr.bf16.mxu0 %v3208
    %4860 = vmatpush2.bf16.msra.mxu0 %v3207
    %4861 = vmatprep.subr.bf16.mxu0 %v3198
    %4862 = vmatpush2.bf16.msra.mxu0 %v3197
    %4863 = vmatprep.subr.bf16.mxu0 %v3188
    %4864 = vmatpush2.bf16.msra.mxu0 %v3187
    %4865 = vmatprep.mubr.bf16.mxu0 %v848
    %4866 = vmatmul.mubr.bf16.gmra.mxu0 %v847
    %v4867 = vpop.f32.mrf.mxu0
    %v4868 = vadd.f32 %v4825, %v4867
    %v4869 = vpop.f32.mrf.mxu0
    %v4870 = vadd.f32 %v4827, %v4869
    %v4871 = vpop.f32.mrf.mxu0
    %v4872 = vadd.f32 %v4829, %v4871
    %v4873 = vpop.f32.mrf.mxu0
    %v4874 = vadd.f32 %v4831, %v4873
    %4875 = vdwg.mxu0
    %4876 = vmatprep.subr.bf16.mxu0 %v3338
    %4877 = vmatpush1.bf16.msra.mxu0 %v3337
    %4878 = vmatprep.subr.bf16.mxu0 %v3328
    %4879 = vmatpush1.bf16.msra.mxu0 %v3327
    %4880 = vmatprep.subr.bf16.mxu0 %v3318
    %4881 = vmatpush1.bf16.msra.mxu0 %v3317
    %4882 = vmatprep.subr.bf16.mxu0 %v3308
    %4883 = vmatpush1.bf16.msra.mxu0 %v3307
    %4884 = vmatprep.subr.bf16.mxu0 %v3298
    %4885 = vmatpush1.bf16.msra.mxu0 %v3297
    %4886 = vmatprep.subr.bf16.mxu0 %v3288
    %4887 = vmatpush1.bf16.msra.mxu0 %v3287
    %4888 = vmatprep.subr.bf16.mxu0 %v3278
    %4889 = vmatpush1.bf16.msra.mxu0 %v3277
    %4890 = vmatprep.subr.bf16.mxu0 %v3268
    %4891 = vmatpush1.bf16.msra.mxu0 %v3267
    %4892 = vmatprep.subr.bf16.mxu0 %v3418
    %4893 = vmatpush2.bf16.msra.mxu0 %v3417
    %4894 = vmatprep.subr.bf16.mxu0 %v3408
    %4895 = vmatpush2.bf16.msra.mxu0 %v3407
    %4896 = vmatprep.subr.bf16.mxu0 %v3398
    %4897 = vmatpush2.bf16.msra.mxu0 %v3397
    %4898 = vmatprep.subr.bf16.mxu0 %v3388
    %4899 = vmatpush2.bf16.msra.mxu0 %v3387
    %4900 = vmatprep.subr.bf16.mxu0 %v3378
    %4901 = vmatpush2.bf16.msra.mxu0 %v3377
    %4902 = vmatprep.subr.bf16.mxu0 %v3368
    %4903 = vmatpush2.bf16.msra.mxu0 %v3367
    %4904 = vmatprep.subr.bf16.mxu0 %v3358
    %4905 = vmatpush2.bf16.msra.mxu0 %v3357
    %4906 = vmatprep.subr.bf16.mxu0 %v3348
    %4907 = vmatpush2.bf16.msra.mxu0 %v3347
    %4908 = vmatprep.mubr.bf16.mxu0 %v850
    %4909 = vmatmul.mubr.bf16.gmra.mxu0 %v849
    %v4910 = vpop.f32.mrf.mxu0
    %v4911 = vadd.f32 %v4868, %v4910
    %v4912 = vpop.f32.mrf.mxu0
    %v4913 = vadd.f32 %v4870, %v4912
    %v4914 = vpop.f32.mrf.mxu0
    %v4915 = vadd.f32 %v4872, %v4914
    %v4916 = vpop.f32.mrf.mxu0
    %v4917 = vadd.f32 %v4874, %v4916
    %4918 = vdwg.mxu0
    %v4919 = vmax.f32 %v4223, 0.0
    %v4920 = vmax.f32 %v4225, 0.0
    %v4921 = vmax.f32 %v4395, 0.0
    %v4922 = vmax.f32 %v4397, 0.0
    %v4923 = vmax.f32 %v4567, 0.0
    %v4924 = vmax.f32 %v4569, 0.0
    %v4925 = vmax.f32 %v4739, 0.0
    %v4926 = vmax.f32 %v4741, 0.0
    %v4927 = vmax.f32 %v4911, 0.0
    %v4928 = vmax.f32 %v4913, 0.0
    %v4929 = vmax.f32 %v4227, 0.0
    %v4930 = vmax.f32 %v4229, 0.0
    %v4931 = vmax.f32 %v4399, 0.0
    %v4932 = vmax.f32 %v4401, 0.0
    %v4933 = vmax.f32 %v4571, 0.0
    %v4934 = vmax.f32 %v4573, 0.0
    %v4935 = vmax.f32 %v4743, 0.0
    %v4936 = vmax.f32 %v4745, 0.0
    %v4937 = vmax.f32 %v4915, 0.0
    %v4938 = vmax.f32 %v4917, 0.0
    %v4939 = vpack.c.bf16 %v4929, %v4919
    %v4940 = vpack.c.bf16 %v4930, %v4920
    %v4941 = vld [vmem:[#allocation8] sm:$0xf]
    %v4942 = vld [vmem:[#allocation8 + $0x4] sm:$0xf]
    %v4943 = vld [vmem:[#allocation8 + $0x8] sm:$0xf]
    %v4944 = vld [vmem:[#allocation8 + $0xc] sm:$0xf]
    %v4945 = vld [vmem:[#allocation8 + $0x10] sm:$0xf]
    %v4946 = vld [vmem:[#allocation8 + $0x14] sm:$0xf]
    %v4947 = vld [vmem:[#allocation8 + $0x18] sm:$0xf]
    %v4948 = vld [vmem:[#allocation8 + $0x1c] sm:$0xf]
    %v4949 = vld [vmem:[#allocation8 + $0x20] sm:$0xf]
    %v4950 = vld [vmem:[#allocation8 + $0x24] sm:$0xf]
    %v4951 = vld [vmem:[#allocation8 + $0x28] sm:$0xf]
    %v4952 = vld [vmem:[#allocation8 + $0x2c] sm:$0xf]
    %v4953 = vld [vmem:[#allocation8 + $0x30] sm:$0xf]
    %v4954 = vld [vmem:[#allocation8 + $0x34] sm:$0xf]
    %v4955 = vld [vmem:[#allocation8 + $0x38] sm:$0xf]
    %v4956 = vld [vmem:[#allocation8 + $0x3c] sm:$0xf]
    %v4957 = vld [vmem:[#allocation8 + $0x40] sm:$0xf]
    %v4958 = vld [vmem:[#allocation8 + $0x44] sm:$0xf]
    %v4959 = vld [vmem:[#allocation8 + $0x48] sm:$0xf]
    %v4960 = vld [vmem:[#allocation8 + $0x4c] sm:$0xf]
    %v4961 = vld [vmem:[#allocation8 + $0x50] sm:$0xf]
    %v4962 = vld [vmem:[#allocation8 + $0x54] sm:$0xf]
    %v4963 = vld [vmem:[#allocation8 + $0x58] sm:$0xf]
    %v4964 = vld [vmem:[#allocation8 + $0x5c] sm:$0xf]
    %v4965 = vld [vmem:[#allocation8 + $0x60] sm:$0xf]
    %v4966 = vld [vmem:[#allocation8 + $0x64] sm:$0xf]
    %v4967 = vld [vmem:[#allocation8 + $0x68] sm:$0xf]
    %v4968 = vld [vmem:[#allocation8 + $0x6c] sm:$0xf]
    %v4969 = vld [vmem:[#allocation8 + $0x70] sm:$0xf]
    %v4970 = vld [vmem:[#allocation8 + $0x74] sm:$0xf]
    %v4971 = vld [vmem:[#allocation8 + $0x78] sm:$0xf]
    %v4972 = vld [vmem:[#allocation8 + $0x7c] sm:$0xf]
    %v5005 = vunpack.c.l.b16 %v4941
    %v5006 = vunpack.c.l.b16 %v4942
    %v5007 = vunpack.c.l.b16 %v4943
    %v5008 = vunpack.c.l.b16 %v4944
    %v5009 = vunpack.c.l.b16 %v4945
    %v5010 = vunpack.c.l.b16 %v4946
    %v5011 = vunpack.c.l.b16 %v4947
    %v5012 = vunpack.c.l.b16 %v4948
    %v5013 = vunpack.c.l.b16 %v4949
    %v5014 = vunpack.c.l.b16 %v4950
    %v5015 = vunpack.c.l.b16 %v4951
    %v5016 = vunpack.c.l.b16 %v4952
    %v5017 = vunpack.c.l.b16 %v4953
    %v5018 = vunpack.c.l.b16 %v4954
    %v5019 = vunpack.c.l.b16 %v4955
    %v5020 = vunpack.c.l.b16 %v4956
    %v5021 = vunpack.c.l.b16 %v4957
    %v5022 = vunpack.c.l.b16 %v4958
    %v5023 = vunpack.c.l.b16 %v4959
    %v5024 = vunpack.c.l.b16 %v4960
    %v5025 = vunpack.c.l.b16 %v4961
    %v5026 = vunpack.c.l.b16 %v4962
    %v5027 = vunpack.c.l.b16 %v4963
    %v5028 = vunpack.c.l.b16 %v4964
    %v5029 = vunpack.c.l.b16 %v4965
    %v5030 = vunpack.c.l.b16 %v4966
    %v5031 = vunpack.c.l.b16 %v4967
    %v5032 = vunpack.c.l.b16 %v4968
    %v5033 = vunpack.c.l.b16 %v4969
    %v5034 = vunpack.c.l.b16 %v4970
    %v5035 = vunpack.c.l.b16 %v4971
    %v5036 = vunpack.c.l.b16 %v4972
    %v5037 = vpack.c.b16 %v5006, %v5005
    %v5038 = vpack.c.b16 %v5008, %v5007
    %v5039 = vpack.c.b16 %v5010, %v5009
    %v5040 = vpack.c.b16 %v5012, %v5011
    %v5041 = vpack.c.b16 %v5014, %v5013
    %v5042 = vpack.c.b16 %v5016, %v5015
    %v5043 = vpack.c.b16 %v5018, %v5017
    %v5044 = vpack.c.b16 %v5020, %v5019
    %v5045 = vpack.c.b16 %v5022, %v5021
    %v5046 = vpack.c.b16 %v5024, %v5023
    %v5047 = vpack.c.b16 %v5026, %v5025
    %v5048 = vpack.c.b16 %v5028, %v5027
    %v5049 = vpack.c.b16 %v5030, %v5029
    %v5050 = vpack.c.b16 %v5032, %v5031
    %v5051 = vpack.c.b16 %v5034, %v5033
    %v5052 = vpack.c.b16 %v5036, %v5035
    %5069 = vmatprep.subr.bf16.mxu0 0
    %5070 = vmatpush1.bf16.msra.mxu0 %v5044
    %5071 = vmatprep.subr.bf16.mxu0 0
    %5072 = vmatpush1.bf16.msra.mxu0 %v5043
    %5073 = vmatprep.subr.bf16.mxu0 0
    %5074 = vmatpush1.bf16.msra.mxu0 %v5042
    %5075 = vmatprep.subr.bf16.mxu0 0
    %5076 = vmatpush1.bf16.msra.mxu0 %v5041
    %5077 = vmatprep.subr.bf16.mxu0 0
    %5078 = vmatpush1.bf16.msra.mxu0 %v5040
    %5079 = vmatprep.subr.bf16.mxu0 0
    %5080 = vmatpush1.bf16.msra.mxu0 %v5039
    %5081 = vmatprep.subr.bf16.mxu0 0
    %5082 = vmatpush1.bf16.msra.mxu0 %v5038
    %5083 = vmatprep.subr.bf16.mxu0 0
    %5084 = vmatpush1.bf16.msra.mxu0 %v5037
    %5085 = vmatprep.subr.bf16.mxu0 0
    %5086 = vmatpush2.bf16.msra.mxu0 %v5052
    %5087 = vmatprep.subr.bf16.mxu0 0
    %5088 = vmatpush2.bf16.msra.mxu0 %v5051
    %5089 = vmatprep.subr.bf16.mxu0 0
    %5090 = vmatpush2.bf16.msra.mxu0 %v5050
    %5091 = vmatprep.subr.bf16.mxu0 0
    %5092 = vmatpush2.bf16.msra.mxu0 %v5049
    %5093 = vmatprep.subr.bf16.mxu0 0
    %5094 = vmatpush2.bf16.msra.mxu0 %v5048
    %5095 = vmatprep.subr.bf16.mxu0 0
    %5096 = vmatpush2.bf16.msra.mxu0 %v5047
    %5097 = vmatprep.subr.bf16.mxu0 0
    %5098 = vmatpush2.bf16.msra.mxu0 %v5046
    %5099 = vmatprep.subr.bf16.mxu0 0
    %5100 = vmatpush2.bf16.msra.mxu0 %v5045
    %5101 = vmatprep.mubr.bf16.mxu0 %v4940
    %5102 = vmatmul.mubr.bf16.gmra.mxu0 %v4939
    %v5103 = vpop.f32.mrf.mxu0
    %v5104 = vadd.f32 0.0, %v5103
    %v5105 = vpop.f32.mrf.mxu0
    %v5106 = vpop.f32.mrf.mxu0
    %v5107 = vadd.f32 0.0, %v5106
    %v5108 = vpop.f32.mrf.mxu0
    %5109 = vdwg.mxu0
    %v5110 = vpack.c.bf16 %v4931, %v4921
    %v5111 = vpack.c.bf16 %v4932, %v4922
    %s5112 = scalar_lea.vmem [#allocation8], 128
    %v5113 = vld [vmem:[%s5112] sm:$0xf]
    %v5114 = vld [vmem:[%s5112 + $0x4] sm:$0xf]
    %v5115 = vld [vmem:[%s5112 + $0x8] sm:$0xf]
    %v5116 = vld [vmem:[%s5112 + $0xc] sm:$0xf]
    %v5117 = vld [vmem:[%s5112 + $0x10] sm:$0xf]
    %v5118 = vld [vmem:[%s5112 + $0x14] sm:$0xf]
    %v5119 = vld [vmem:[%s5112 + $0x18] sm:$0xf]
    %v5120 = vld [vmem:[%s5112 + $0x1c] sm:$0xf]
    %v5121 = vld [vmem:[%s5112 + $0x20] sm:$0xf]
    %v5122 = vld [vmem:[%s5112 + $0x24] sm:$0xf]
    %v5123 = vld [vmem:[%s5112 + $0x28] sm:$0xf]
    %v5124 = vld [vmem:[%s5112 + $0x2c] sm:$0xf]
    %v5125 = vld [vmem:[%s5112 + $0x30] sm:$0xf]
    %v5126 = vld [vmem:[%s5112 + $0x34] sm:$0xf]
    %v5127 = vld [vmem:[%s5112 + $0x38] sm:$0xf]
    %v5128 = vld [vmem:[%s5112 + $0x3c] sm:$0xf]
    %v5129 = vld [vmem:[%s5112 + $0x40] sm:$0xf]
    %v5130 = vld [vmem:[%s5112 + $0x44] sm:$0xf]
    %v5131 = vld [vmem:[%s5112 + $0x48] sm:$0xf]
    %v5132 = vld [vmem:[%s5112 + $0x4c] sm:$0xf]
    %v5133 = vld [vmem:[%s5112 + $0x50] sm:$0xf]
    %v5134 = vld [vmem:[%s5112 + $0x54] sm:$0xf]
    %v5135 = vld [vmem:[%s5112 + $0x58] sm:$0xf]
    %v5136 = vld [vmem:[%s5112 + $0x5c] sm:$0xf]
    %v5137 = vld [vmem:[%s5112 + $0x60] sm:$0xf]
    %v5138 = vld [vmem:[%s5112 + $0x64] sm:$0xf]
    %v5139 = vld [vmem:[%s5112 + $0x68] sm:$0xf]
    %v5140 = vld [vmem:[%s5112 + $0x6c] sm:$0xf]
    %v5141 = vld [vmem:[%s5112 + $0x70] sm:$0xf]
    %v5142 = vld [vmem:[%s5112 + $0x74] sm:$0xf]
    %v5143 = vld [vmem:[%s5112 + $0x78] sm:$0xf]
    %v5144 = vld [vmem:[%s5112 + $0x7c] sm:$0xf]
    %v5177 = vunpack.c.l.b16 %v5113
    %v5178 = vunpack.c.l.b16 %v5114
    %v5179 = vunpack.c.l.b16 %v5115
    %v5180 = vunpack.c.l.b16 %v5116
    %v5181 = vunpack.c.l.b16 %v5117
    %v5182 = vunpack.c.l.b16 %v5118
    %v5183 = vunpack.c.l.b16 %v5119
    %v5184 = vunpack.c.l.b16 %v5120
    %v5185 = vunpack.c.l.b16 %v5121
    %v5186 = vunpack.c.l.b16 %v5122
    %v5187 = vunpack.c.l.b16 %v5123
    %v5188 = vunpack.c.l.b16 %v5124
    %v5189 = vunpack.c.l.b16 %v5125
    %v5190 = vunpack.c.l.b16 %v5126
    %v5191 = vunpack.c.l.b16 %v5127
    %v5192 = vunpack.c.l.b16 %v5128
    %v5193 = vunpack.c.l.b16 %v5129
    %v5194 = vunpack.c.l.b16 %v5130
    %v5195 = vunpack.c.l.b16 %v5131
    %v5196 = vunpack.c.l.b16 %v5132
    %v5197 = vunpack.c.l.b16 %v5133
    %v5198 = vunpack.c.l.b16 %v5134
    %v5199 = vunpack.c.l.b16 %v5135
    %v5200 = vunpack.c.l.b16 %v5136
    %v5201 = vunpack.c.l.b16 %v5137
    %v5202 = vunpack.c.l.b16 %v5138
    %v5203 = vunpack.c.l.b16 %v5139
    %v5204 = vunpack.c.l.b16 %v5140
    %v5205 = vunpack.c.l.b16 %v5141
    %v5206 = vunpack.c.l.b16 %v5142
    %v5207 = vunpack.c.l.b16 %v5143
    %v5208 = vunpack.c.l.b16 %v5144
    %v5209 = vpack.c.b16 %v5178, %v5177
    %v5210 = vpack.c.b16 %v5180, %v5179
    %v5211 = vpack.c.b16 %v5182, %v5181
    %v5212 = vpack.c.b16 %v5184, %v5183
    %v5213 = vpack.c.b16 %v5186, %v5185
    %v5214 = vpack.c.b16 %v5188, %v5187
    %v5215 = vpack.c.b16 %v5190, %v5189
    %v5216 = vpack.c.b16 %v5192, %v5191
    %v5217 = vpack.c.b16 %v5194, %v5193
    %v5218 = vpack.c.b16 %v5196, %v5195
    %v5219 = vpack.c.b16 %v5198, %v5197
    %v5220 = vpack.c.b16 %v5200, %v5199
    %v5221 = vpack.c.b16 %v5202, %v5201
    %v5222 = vpack.c.b16 %v5204, %v5203
    %v5223 = vpack.c.b16 %v5206, %v5205
    %v5224 = vpack.c.b16 %v5208, %v5207
    %5241 = vmatprep.subr.bf16.mxu0 0
    %5242 = vmatpush1.bf16.msra.mxu0 %v5216
    %5243 = vmatprep.subr.bf16.mxu0 0
    %5244 = vmatpush1.bf16.msra.mxu0 %v5215
    %5245 = vmatprep.subr.bf16.mxu0 0
    %5246 = vmatpush1.bf16.msra.mxu0 %v5214
    %5247 = vmatprep.subr.bf16.mxu0 0
    %5248 = vmatpush1.bf16.msra.mxu0 %v5213
    %5249 = vmatprep.subr.bf16.mxu0 0
    %5250 = vmatpush1.bf16.msra.mxu0 %v5212
    %5251 = vmatprep.subr.bf16.mxu0 0
    %5252 = vmatpush1.bf16.msra.mxu0 %v5211
    %5253 = vmatprep.subr.bf16.mxu0 0
    %5254 = vmatpush1.bf16.msra.mxu0 %v5210
    %5255 = vmatprep.subr.bf16.mxu0 0
    %5256 = vmatpush1.bf16.msra.mxu0 %v5209
    %5257 = vmatprep.subr.bf16.mxu0 0
    %5258 = vmatpush2.bf16.msra.mxu0 %v5224
    %5259 = vmatprep.subr.bf16.mxu0 0
    %5260 = vmatpush2.bf16.msra.mxu0 %v5223
    %5261 = vmatprep.subr.bf16.mxu0 0
    %5262 = vmatpush2.bf16.msra.mxu0 %v5222
    %5263 = vmatprep.subr.bf16.mxu0 0
    %5264 = vmatpush2.bf16.msra.mxu0 %v5221
    %5265 = vmatprep.subr.bf16.mxu0 0
    %5266 = vmatpush2.bf16.msra.mxu0 %v5220
    %5267 = vmatprep.subr.bf16.mxu0 0
    %5268 = vmatpush2.bf16.msra.mxu0 %v5219
    %5269 = vmatprep.subr.bf16.mxu0 0
    %5270 = vmatpush2.bf16.msra.mxu0 %v5218
    %5271 = vmatprep.subr.bf16.mxu0 0
    %5272 = vmatpush2.bf16.msra.mxu0 %v5217
    %5273 = vmatprep.mubr.bf16.mxu0 %v5111
    %5274 = vmatmul.mubr.bf16.gmra.mxu0 %v5110
    %v5275 = vpop.f32.mrf.mxu0
    %v5276 = vadd.f32 0.0, %v5275
    %v5277 = vpop.f32.mrf.mxu0
    %v5278 = vpop.f32.mrf.mxu0
    %v5279 = vadd.f32 0.0, %v5278
    %v5280 = vpop.f32.mrf.mxu0
    %5281 = vdwg.mxu0
    %v5282 = vpack.c.bf16 %v4933, %v4923
    %v5283 = vpack.c.bf16 %v4934, %v4924
    %s5284 = scalar_lea.vmem [#allocation8], 256
    %v5285 = vld [vmem:[%s5284] sm:$0xf]
    %v5286 = vld [vmem:[%s5284 + $0x4] sm:$0xf]
    %v5287 = vld [vmem:[%s5284 + $0x8] sm:$0xf]
    %v5288 = vld [vmem:[%s5284 + $0xc] sm:$0xf]
    %v5289 = vld [vmem:[%s5284 + $0x10] sm:$0xf]
    %v5290 = vld [vmem:[%s5284 + $0x14] sm:$0xf]
    %v5291 = vld [vmem:[%s5284 + $0x18] sm:$0xf]
    %v5292 = vld [vmem:[%s5284 + $0x1c] sm:$0xf]
    %v5293 = vld [vmem:[%s5284 + $0x20] sm:$0xf]
    %v5294 = vld [vmem:[%s5284 + $0x24] sm:$0xf]
    %v5295 = vld [vmem:[%s5284 + $0x28] sm:$0xf]
    %v5296 = vld [vmem:[%s5284 + $0x2c] sm:$0xf]
    %v5297 = vld [vmem:[%s5284 + $0x30] sm:$0xf]
    %v5298 = vld [vmem:[%s5284 + $0x34] sm:$0xf]
    %v5299 = vld [vmem:[%s5284 + $0x38] sm:$0xf]
    %v5300 = vld [vmem:[%s5284 + $0x3c] sm:$0xf]
    %v5301 = vld [vmem:[%s5284 + $0x40] sm:$0xf]
    %v5302 = vld [vmem:[%s5284 + $0x44] sm:$0xf]
    %v5303 = vld [vmem:[%s5284 + $0x48] sm:$0xf]
    %v5304 = vld [vmem:[%s5284 + $0x4c] sm:$0xf]
    %v5305 = vld [vmem:[%s5284 + $0x50] sm:$0xf]
    %v5306 = vld [vmem:[%s5284 + $0x54] sm:$0xf]
    %v5307 = vld [vmem:[%s5284 + $0x58] sm:$0xf]
    %v5308 = vld [vmem:[%s5284 + $0x5c] sm:$0xf]
    %v5309 = vld [vmem:[%s5284 + $0x60] sm:$0xf]
    %v5310 = vld [vmem:[%s5284 + $0x64] sm:$0xf]
    %v5311 = vld [vmem:[%s5284 + $0x68] sm:$0xf]
    %v5312 = vld [vmem:[%s5284 + $0x6c] sm:$0xf]
    %v5313 = vld [vmem:[%s5284 + $0x70] sm:$0xf]
    %v5314 = vld [vmem:[%s5284 + $0x74] sm:$0xf]
    %v5315 = vld [vmem:[%s5284 + $0x78] sm:$0xf]
    %v5316 = vld [vmem:[%s5284 + $0x7c] sm:$0xf]
    %v5349 = vunpack.c.l.b16 %v5285
    %v5350 = vunpack.c.l.b16 %v5286
    %v5351 = vunpack.c.l.b16 %v5287
    %v5352 = vunpack.c.l.b16 %v5288
    %v5353 = vunpack.c.l.b16 %v5289
    %v5354 = vunpack.c.l.b16 %v5290
    %v5355 = vunpack.c.l.b16 %v5291
    %v5356 = vunpack.c.l.b16 %v5292
    %v5357 = vunpack.c.l.b16 %v5293
    %v5358 = vunpack.c.l.b16 %v5294
    %v5359 = vunpack.c.l.b16 %v5295
    %v5360 = vunpack.c.l.b16 %v5296
    %v5361 = vunpack.c.l.b16 %v5297
    %v5362 = vunpack.c.l.b16 %v5298
    %v5363 = vunpack.c.l.b16 %v5299
    %v5364 = vunpack.c.l.b16 %v5300
    %v5365 = vunpack.c.l.b16 %v5301
    %v5366 = vunpack.c.l.b16 %v5302
    %v5367 = vunpack.c.l.b16 %v5303
    %v5368 = vunpack.c.l.b16 %v5304
    %v5369 = vunpack.c.l.b16 %v5305
    %v5370 = vunpack.c.l.b16 %v5306
    %v5371 = vunpack.c.l.b16 %v5307
    %v5372 = vunpack.c.l.b16 %v5308
    %v5373 = vunpack.c.l.b16 %v5309
    %v5374 = vunpack.c.l.b16 %v5310
    %v5375 = vunpack.c.l.b16 %v5311
    %v5376 = vunpack.c.l.b16 %v5312
    %v5377 = vunpack.c.l.b16 %v5313
    %v5378 = vunpack.c.l.b16 %v5314
    %v5379 = vunpack.c.l.b16 %v5315
    %v5380 = vunpack.c.l.b16 %v5316
    %v5381 = vpack.c.b16 %v5350, %v5349
    %v5382 = vpack.c.b16 %v5352, %v5351
    %v5383 = vpack.c.b16 %v5354, %v5353
    %v5384 = vpack.c.b16 %v5356, %v5355
    %v5385 = vpack.c.b16 %v5358, %v5357
    %v5386 = vpack.c.b16 %v5360, %v5359
    %v5387 = vpack.c.b16 %v5362, %v5361
    %v5388 = vpack.c.b16 %v5364, %v5363
    %v5389 = vpack.c.b16 %v5366, %v5365
    %v5390 = vpack.c.b16 %v5368, %v5367
    %v5391 = vpack.c.b16 %v5370, %v5369
    %v5392 = vpack.c.b16 %v5372, %v5371
    %v5393 = vpack.c.b16 %v5374, %v5373
    %v5394 = vpack.c.b16 %v5376, %v5375
    %v5395 = vpack.c.b16 %v5378, %v5377
    %v5396 = vpack.c.b16 %v5380, %v5379
    %5413 = vmatprep.subr.bf16.mxu0 0
    %5414 = vmatpush1.bf16.msra.mxu0 %v5388
    %5415 = vmatprep.subr.bf16.mxu0 0
    %5416 = vmatpush1.bf16.msra.mxu0 %v5387
    %5417 = vmatprep.subr.bf16.mxu0 0
    %5418 = vmatpush1.bf16.msra.mxu0 %v5386
    %5419 = vmatprep.subr.bf16.mxu0 0
    %5420 = vmatpush1.bf16.msra.mxu0 %v5385
    %5421 = vmatprep.subr.bf16.mxu0 0
    %5422 = vmatpush1.bf16.msra.mxu0 %v5384
    %5423 = vmatprep.subr.bf16.mxu0 0
    %5424 = vmatpush1.bf16.msra.mxu0 %v5383
    %5425 = vmatprep.subr.bf16.mxu0 0
    %5426 = vmatpush1.bf16.msra.mxu0 %v5382
    %5427 = vmatprep.subr.bf16.mxu0 0
    %5428 = vmatpush1.bf16.msra.mxu0 %v5381
    %5429 = vmatprep.subr.bf16.mxu0 0
    %5430 = vmatpush2.bf16.msra.mxu0 %v5396
    %5431 = vmatprep.subr.bf16.mxu0 0
    %5432 = vmatpush2.bf16.msra.mxu0 %v5395
    %5433 = vmatprep.subr.bf16.mxu0 0
    %5434 = vmatpush2.bf16.msra.mxu0 %v5394
    %5435 = vmatprep.subr.bf16.mxu0 0
    %5436 = vmatpush2.bf16.msra.mxu0 %v5393
    %5437 = vmatprep.subr.bf16.mxu0 0
    %5438 = vmatpush2.bf16.msra.mxu0 %v5392
    %5439 = vmatprep.subr.bf16.mxu0 0
    %5440 = vmatpush2.bf16.msra.mxu0 %v5391
    %5441 = vmatprep.subr.bf16.mxu0 0
    %5442 = vmatpush2.bf16.msra.mxu0 %v5390
    %5443 = vmatprep.subr.bf16.mxu0 0
    %5444 = vmatpush2.bf16.msra.mxu0 %v5389
    %5445 = vmatprep.mubr.bf16.mxu0 %v5283
    %5446 = vmatmul.mubr.bf16.gmra.mxu0 %v5282
    %v5447 = vpop.f32.mrf.mxu0
    %v5448 = vadd.f32 0.0, %v5447
    %v5449 = vpop.f32.mrf.mxu0
    %v5450 = vpop.f32.mrf.mxu0
    %v5451 = vadd.f32 0.0, %v5450
    %v5452 = vpop.f32.mrf.mxu0
    %5453 = vdwg.mxu0
    %v5454 = vpack.c.bf16 %v4935, %v4925
    %v5455 = vpack.c.bf16 %v4936, %v4926
    %s5456 = scalar_lea.vmem [#allocation8], 384
    %v5457 = vld [vmem:[%s5456] sm:$0xf]
    %v5458 = vld [vmem:[%s5456 + $0x4] sm:$0xf]
    %v5459 = vld [vmem:[%s5456 + $0x8] sm:$0xf]
    %v5460 = vld [vmem:[%s5456 + $0xc] sm:$0xf]
    %v5461 = vld [vmem:[%s5456 + $0x10] sm:$0xf]
    %v5462 = vld [vmem:[%s5456 + $0x14] sm:$0xf]
    %v5463 = vld [vmem:[%s5456 + $0x18] sm:$0xf]
    %v5464 = vld [vmem:[%s5456 + $0x1c] sm:$0xf]
    %v5465 = vld [vmem:[%s5456 + $0x20] sm:$0xf]
    %v5466 = vld [vmem:[%s5456 + $0x24] sm:$0xf]
    %v5467 = vld [vmem:[%s5456 + $0x28] sm:$0xf]
    %v5468 = vld [vmem:[%s5456 + $0x2c] sm:$0xf]
    %v5469 = vld [vmem:[%s5456 + $0x30] sm:$0xf]
    %v5470 = vld [vmem:[%s5456 + $0x34] sm:$0xf]
    %v5471 = vld [vmem:[%s5456 + $0x38] sm:$0xf]
    %v5472 = vld [vmem:[%s5456 + $0x3c] sm:$0xf]
    %v5473 = vld [vmem:[%s5456 + $0x40] sm:$0xf]
    %v5474 = vld [vmem:[%s5456 + $0x44] sm:$0xf]
    %v5475 = vld [vmem:[%s5456 + $0x48] sm:$0xf]
    %v5476 = vld [vmem:[%s5456 + $0x4c] sm:$0xf]
    %v5477 = vld [vmem:[%s5456 + $0x50] sm:$0xf]
    %v5478 = vld [vmem:[%s5456 + $0x54] sm:$0xf]
    %v5479 = vld [vmem:[%s5456 + $0x58] sm:$0xf]
    %v5480 = vld [vmem:[%s5456 + $0x5c] sm:$0xf]
    %v5481 = vld [vmem:[%s5456 + $0x60] sm:$0xf]
    %v5482 = vld [vmem:[%s5456 + $0x64] sm:$0xf]
    %v5483 = vld [vmem:[%s5456 + $0x68] sm:$0xf]
    %v5484 = vld [vmem:[%s5456 + $0x6c] sm:$0xf]
    %v5485 = vld [vmem:[%s5456 + $0x70] sm:$0xf]
    %v5486 = vld [vmem:[%s5456 + $0x74] sm:$0xf]
    %v5487 = vld [vmem:[%s5456 + $0x78] sm:$0xf]
    %v5488 = vld [vmem:[%s5456 + $0x7c] sm:$0xf]
    %v5521 = vunpack.c.l.b16 %v5457
    %v5522 = vunpack.c.l.b16 %v5458
    %v5523 = vunpack.c.l.b16 %v5459
    %v5524 = vunpack.c.l.b16 %v5460
    %v5525 = vunpack.c.l.b16 %v5461
    %v5526 = vunpack.c.l.b16 %v5462
    %v5527 = vunpack.c.l.b16 %v5463
    %v5528 = vunpack.c.l.b16 %v5464
    %v5529 = vunpack.c.l.b16 %v5465
    %v5530 = vunpack.c.l.b16 %v5466
    %v5531 = vunpack.c.l.b16 %v5467
    %v5532 = vunpack.c.l.b16 %v5468
    %v5533 = vunpack.c.l.b16 %v5469
    %v5534 = vunpack.c.l.b16 %v5470
    %v5535 = vunpack.c.l.b16 %v5471
    %v5536 = vunpack.c.l.b16 %v5472
    %v5537 = vunpack.c.l.b16 %v5473
    %v5538 = vunpack.c.l.b16 %v5474
    %v5539 = vunpack.c.l.b16 %v5475
    %v5540 = vunpack.c.l.b16 %v5476
    %v5541 = vunpack.c.l.b16 %v5477
    %v5542 = vunpack.c.l.b16 %v5478
    %v5543 = vunpack.c.l.b16 %v5479
    %v5544 = vunpack.c.l.b16 %v5480
    %v5545 = vunpack.c.l.b16 %v5481
    %v5546 = vunpack.c.l.b16 %v5482
    %v5547 = vunpack.c.l.b16 %v5483
    %v5548 = vunpack.c.l.b16 %v5484
    %v5549 = vunpack.c.l.b16 %v5485
    %v5550 = vunpack.c.l.b16 %v5486
    %v5551 = vunpack.c.l.b16 %v5487
    %v5552 = vunpack.c.l.b16 %v5488
    %v5553 = vpack.c.b16 %v5522, %v5521
    %v5554 = vpack.c.b16 %v5524, %v5523
    %v5555 = vpack.c.b16 %v5526, %v5525
    %v5556 = vpack.c.b16 %v5528, %v5527
    %v5557 = vpack.c.b16 %v5530, %v5529
    %v5558 = vpack.c.b16 %v5532, %v5531
    %v5559 = vpack.c.b16 %v5534, %v5533
    %v5560 = vpack.c.b16 %v5536, %v5535
    %v5561 = vpack.c.b16 %v5538, %v5537
    %v5562 = vpack.c.b16 %v5540, %v5539
    %v5563 = vpack.c.b16 %v5542, %v5541
    %v5564 = vpack.c.b16 %v5544, %v5543
    %v5565 = vpack.c.b16 %v5546, %v5545
    %v5566 = vpack.c.b16 %v5548, %v5547
    %v5567 = vpack.c.b16 %v5550, %v5549
    %v5568 = vpack.c.b16 %v5552, %v5551
    %5585 = vmatprep.subr.bf16.mxu0 0
    %5586 = vmatpush1.bf16.msra.mxu0 %v5560
    %5587 = vmatprep.subr.bf16.mxu0 0
    %5588 = vmatpush1.bf16.msra.mxu0 %v5559
    %5589 = vmatprep.subr.bf16.mxu0 0
    %5590 = vmatpush1.bf16.msra.mxu0 %v5558
    %5591 = vmatprep.subr.bf16.mxu0 0
    %5592 = vmatpush1.bf16.msra.mxu0 %v5557
    %5593 = vmatprep.subr.bf16.mxu0 0
    %5594 = vmatpush1.bf16.msra.mxu0 %v5556
    %5595 = vmatprep.subr.bf16.mxu0 0
    %5596 = vmatpush1.bf16.msra.mxu0 %v5555
    %5597 = vmatprep.subr.bf16.mxu0 0
    %5598 = vmatpush1.bf16.msra.mxu0 %v5554
    %5599 = vmatprep.subr.bf16.mxu0 0
    %5600 = vmatpush1.bf16.msra.mxu0 %v5553
    %5601 = vmatprep.subr.bf16.mxu0 0
    %5602 = vmatpush2.bf16.msra.mxu0 %v5568
    %5603 = vmatprep.subr.bf16.mxu0 0
    %5604 = vmatpush2.bf16.msra.mxu0 %v5567
    %5605 = vmatprep.subr.bf16.mxu0 0
    %5606 = vmatpush2.bf16.msra.mxu0 %v5566
    %5607 = vmatprep.subr.bf16.mxu0 0
    %5608 = vmatpush2.bf16.msra.mxu0 %v5565
    %5609 = vmatprep.subr.bf16.mxu0 0
    %5610 = vmatpush2.bf16.msra.mxu0 %v5564
    %5611 = vmatprep.subr.bf16.mxu0 0
    %5612 = vmatpush2.bf16.msra.mxu0 %v5563
    %5613 = vmatprep.subr.bf16.mxu0 0
    %5614 = vmatpush2.bf16.msra.mxu0 %v5562
    %5615 = vmatprep.subr.bf16.mxu0 0
    %5616 = vmatpush2.bf16.msra.mxu0 %v5561
    %5617 = vmatprep.mubr.bf16.mxu0 %v5455
    %5618 = vmatmul.mubr.bf16.gmra.mxu0 %v5454
    %v5619 = vpop.f32.mrf.mxu0
    %v5620 = vadd.f32 0.0, %v5619
    %v5621 = vpop.f32.mrf.mxu0
    %v5622 = vpop.f32.mrf.mxu0
    %v5623 = vadd.f32 0.0, %v5622
    %v5624 = vpop.f32.mrf.mxu0
    %5625 = vdwg.mxu0
    %v5626 = vpack.c.bf16 %v4937, %v4927
    %v5627 = vpack.c.bf16 %v4938, %v4928
    %s5628 = scalar_lea.vmem [#allocation8], 512
    %v5629 = vld [vmem:[%s5628] sm:$0xf]
    %v5630 = vld [vmem:[%s5628 + $0x4] sm:$0xf]
    %v5631 = vld [vmem:[%s5628 + $0x8] sm:$0xf]
    %v5632 = vld [vmem:[%s5628 + $0xc] sm:$0xf]
    %v5633 = vld [vmem:[%s5628 + $0x10] sm:$0xf]
    %v5634 = vld [vmem:[%s5628 + $0x14] sm:$0xf]
    %v5635 = vld [vmem:[%s5628 + $0x18] sm:$0xf]
    %v5636 = vld [vmem:[%s5628 + $0x1c] sm:$0xf]
    %v5637 = vld [vmem:[%s5628 + $0x20] sm:$0xf]
    %v5638 = vld [vmem:[%s5628 + $0x24] sm:$0xf]
    %v5639 = vld [vmem:[%s5628 + $0x28] sm:$0xf]
    %v5640 = vld [vmem:[%s5628 + $0x2c] sm:$0xf]
    %v5641 = vld [vmem:[%s5628 + $0x30] sm:$0xf]
    %v5642 = vld [vmem:[%s5628 + $0x34] sm:$0xf]
    %v5643 = vld [vmem:[%s5628 + $0x38] sm:$0xf]
    %v5644 = vld [vmem:[%s5628 + $0x3c] sm:$0xf]
    %v5645 = vld [vmem:[%s5628 + $0x40] sm:$0xf]
    %v5646 = vld [vmem:[%s5628 + $0x44] sm:$0xf]
    %v5647 = vld [vmem:[%s5628 + $0x48] sm:$0xf]
    %v5648 = vld [vmem:[%s5628 + $0x4c] sm:$0xf]
    %v5649 = vld [vmem:[%s5628 + $0x50] sm:$0xf]
    %v5650 = vld [vmem:[%s5628 + $0x54] sm:$0xf]
    %v5651 = vld [vmem:[%s5628 + $0x58] sm:$0xf]
    %v5652 = vld [vmem:[%s5628 + $0x5c] sm:$0xf]
    %v5653 = vld [vmem:[%s5628 + $0x60] sm:$0xf]
    %v5654 = vld [vmem:[%s5628 + $0x64] sm:$0xf]
    %v5655 = vld [vmem:[%s5628 + $0x68] sm:$0xf]
    %v5656 = vld [vmem:[%s5628 + $0x6c] sm:$0xf]
    %v5657 = vld [vmem:[%s5628 + $0x70] sm:$0xf]
    %v5658 = vld [vmem:[%s5628 + $0x74] sm:$0xf]
    %v5659 = vld [vmem:[%s5628 + $0x78] sm:$0xf]
    %v5660 = vld [vmem:[%s5628 + $0x7c] sm:$0xf]
    %v5693 = vunpack.c.l.b16 %v5629
    %v5694 = vunpack.c.l.b16 %v5630
    %v5695 = vunpack.c.l.b16 %v5631
    %v5696 = vunpack.c.l.b16 %v5632
    %v5697 = vunpack.c.l.b16 %v5633
    %v5698 = vunpack.c.l.b16 %v5634
    %v5699 = vunpack.c.l.b16 %v5635
    %v5700 = vunpack.c.l.b16 %v5636
    %v5701 = vunpack.c.l.b16 %v5637
    %v5702 = vunpack.c.l.b16 %v5638
    %v5703 = vunpack.c.l.b16 %v5639
    %v5704 = vunpack.c.l.b16 %v5640
    %v5705 = vunpack.c.l.b16 %v5641
    %v5706 = vunpack.c.l.b16 %v5642
    %v5707 = vunpack.c.l.b16 %v5643
    %v5708 = vunpack.c.l.b16 %v5644
    %v5709 = vunpack.c.l.b16 %v5645
    %v5710 = vunpack.c.l.b16 %v5646
    %v5711 = vunpack.c.l.b16 %v5647
    %v5712 = vunpack.c.l.b16 %v5648
    %v5713 = vunpack.c.l.b16 %v5649
    %v5714 = vunpack.c.l.b16 %v5650
    %v5715 = vunpack.c.l.b16 %v5651
    %v5716 = vunpack.c.l.b16 %v5652
    %v5717 = vunpack.c.l.b16 %v5653
    %v5718 = vunpack.c.l.b16 %v5654
    %v5719 = vunpack.c.l.b16 %v5655
    %v5720 = vunpack.c.l.b16 %v5656
    %v5721 = vunpack.c.l.b16 %v5657
    %v5722 = vunpack.c.l.b16 %v5658
    %v5723 = vunpack.c.l.b16 %v5659
    %v5724 = vunpack.c.l.b16 %v5660
    %v5725 = vpack.c.b16 %v5694, %v5693
    %v5726 = vpack.c.b16 %v5696, %v5695
    %v5727 = vpack.c.b16 %v5698, %v5697
    %v5728 = vpack.c.b16 %v5700, %v5699
    %v5729 = vpack.c.b16 %v5702, %v5701
    %v5730 = vpack.c.b16 %v5704, %v5703
    %v5731 = vpack.c.b16 %v5706, %v5705
    %v5732 = vpack.c.b16 %v5708, %v5707
    %v5733 = vpack.c.b16 %v5710, %v5709
    %v5734 = vpack.c.b16 %v5712, %v5711
    %v5735 = vpack.c.b16 %v5714, %v5713
    %v5736 = vpack.c.b16 %v5716, %v5715
    %v5737 = vpack.c.b16 %v5718, %v5717
    %v5738 = vpack.c.b16 %v5720, %v5719
    %v5739 = vpack.c.b16 %v5722, %v5721
    %v5740 = vpack.c.b16 %v5724, %v5723
    %5757 = vmatprep.subr.bf16.mxu0 0
    %5758 = vmatpush1.bf16.msra.mxu0 %v5732
    %5759 = vmatprep.subr.bf16.mxu0 0
    %5760 = vmatpush1.bf16.msra.mxu0 %v5731
    %5761 = vmatprep.subr.bf16.mxu0 0
    %5762 = vmatpush1.bf16.msra.mxu0 %v5730
    %5763 = vmatprep.subr.bf16.mxu0 0
    %5764 = vmatpush1.bf16.msra.mxu0 %v5729
    %5765 = vmatprep.subr.bf16.mxu0 0
    %5766 = vmatpush1.bf16.msra.mxu0 %v5728
    %5767 = vmatprep.subr.bf16.mxu0 0
    %5768 = vmatpush1.bf16.msra.mxu0 %v5727
    %5769 = vmatprep.subr.bf16.mxu0 0
    %5770 = vmatpush1.bf16.msra.mxu0 %v5726
    %5771 = vmatprep.subr.bf16.mxu0 0
    %5772 = vmatpush1.bf16.msra.mxu0 %v5725
    %5773 = vmatprep.subr.bf16.mxu0 0
    %5774 = vmatpush2.bf16.msra.mxu0 %v5740
    %5775 = vmatprep.subr.bf16.mxu0 0
    %5776 = vmatpush2.bf16.msra.mxu0 %v5739
    %5777 = vmatprep.subr.bf16.mxu0 0
    %5778 = vmatpush2.bf16.msra.mxu0 %v5738
    %5779 = vmatprep.subr.bf16.mxu0 0
    %5780 = vmatpush2.bf16.msra.mxu0 %v5737
    %5781 = vmatprep.subr.bf16.mxu0 0
    %5782 = vmatpush2.bf16.msra.mxu0 %v5736
    %5783 = vmatprep.subr.bf16.mxu0 0
    %5784 = vmatpush2.bf16.msra.mxu0 %v5735
    %5785 = vmatprep.subr.bf16.mxu0 0
    %5786 = vmatpush2.bf16.msra.mxu0 %v5734
    %5787 = vmatprep.subr.bf16.mxu0 0
    %5788 = vmatpush2.bf16.msra.mxu0 %v5733
    %5789 = vmatprep.mubr.bf16.mxu0 %v5627
    %5790 = vmatmul.mubr.bf16.gmra.mxu0 %v5626
    %v5791 = vpop.f32.mrf.mxu0
    %v5792 = vadd.f32 0.0, %v5791
    %v5793 = vpop.f32.mrf.mxu0
    %v5794 = vpop.f32.mrf.mxu0
    %v5795 = vadd.f32 0.0, %v5794
    %v5796 = vpop.f32.mrf.mxu0
    %5797 = vdwg.mxu0
    %v5798 = vld [vmem:[#allocation10] sm:$0x1f]
    %v5800 = vlaneseq
    %v5801 = vshrl.u32 %v5800, 7
    %v5802 = vsub.s32 0, %v5801
    %v5803 = vrot.slane %v5798, %v5802
    %v5804 = vlaneseq
    %v5805 = vshrl.u32 %v5804, 7
    %v5806 = vsub.s32 1, %v5805
    %v5807 = vrot.slane %v5798, %v5806
    %v5808 = vlaneseq
    %v5809 = vshrl.u32 %v5808, 7
    %v5810 = vsub.s32 2, %v5809
    %v5811 = vrot.slane %v5798, %v5810
    %v5812 = vlaneseq
    %v5813 = vshrl.u32 %v5812, 7
    %v5814 = vsub.s32 3, %v5813
    %v5815 = vrot.slane %v5798, %v5814
    %v5816 = vlaneseq
    %v5817 = vshrl.u32 %v5816, 7
    %v5818 = vsub.s32 4, %v5817
    %v5819 = vrot.slane %v5798, %v5818
    %v5825 = vadd.f32 %v5104, %v5803
    %v5826 = vadd.f32 %v5276, %v5807
    %v5827 = vadd.f32 %v5448, %v5811
    %v5828 = vadd.f32 %v5620, %v5815
    %v5829 = vadd.f32 %v5792, %v5819
    %v5830 = vadd.f32 %v5107, %v5803
    %v5831 = vadd.f32 %v5279, %v5807
    %v5832 = vadd.f32 %v5451, %v5811
    %v5833 = vadd.f32 %v5623, %v5815
    %v5834 = vadd.f32 %v5795, %v5819
    %v5835 = vmax.f32 %v5825, 0.0
    %v5836 = vmax.f32 %v5826, 0.0
    %v5837 = vmax.f32 %v5827, 0.0
    %v5838 = vmax.f32 %v5828, 0.0
    %v5839 = vmax.f32 %v5829, 0.0
    %v5840 = vmax.f32 %v5830, 0.0
    %v5841 = vmax.f32 %v5831, 0.0
    %v5842 = vmax.f32 %v5832, 0.0
    %v5843 = vmax.f32 %v5833, 0.0
    %v5844 = vmax.f32 %v5834, 0.0
    %v5845 = vpack.c.bf16 %v5840, %v5835
    %v5846 = vpack.c.bf16 %v5841, %v5836
    %v5847 = vpack.c.bf16 %v5842, %v5837
    %v5848 = vpack.c.bf16 %v5843, %v5838
    %v5849 = vpack.c.bf16 %v5844, %v5839
    %v5850 = vld [vmem:[#allocation11] sm:$0xf]
    %v5851 = vld [vmem:[#allocation11 + $0x4] sm:$0xf]
    %v5852 = vld [vmem:[#allocation11 + $0x8] sm:$0xf]
    %v5853 = vld [vmem:[#allocation11 + $0xc] sm:$0xf]
    %v5854 = vld [vmem:[#allocation11 + $0x10] sm:$0xf]
    %v5855 = vld [vmem:[#allocation11 + $0x14] sm:$0xf]
    %v5856 = vld [vmem:[#allocation11 + $0x18] sm:$0xf]
    %v5857 = vld [vmem:[#allocation11 + $0x1c] sm:$0xf]
    %v5858 = vld [vmem:[#allocation11 + $0x20] sm:$0xf]
    %v5859 = vld [vmem:[#allocation11 + $0x24] sm:$0xf]
    %v5860 = vld [vmem:[#allocation11 + $0x28] sm:$0xf]
    %v5861 = vld [vmem:[#allocation11 + $0x2c] sm:$0xf]
    %v5862 = vld [vmem:[#allocation11 + $0x30] sm:$0xf]
    %v5863 = vld [vmem:[#allocation11 + $0x34] sm:$0xf]
    %v5864 = vld [vmem:[#allocation11 + $0x38] sm:$0xf]
    %v5865 = vld [vmem:[#allocation11 + $0x3c] sm:$0xf]
    %v5866 = vld [vmem:[#allocation11 + $0x40] sm:$0xf]
    %v5867 = vld [vmem:[#allocation11 + $0x44] sm:$0xf]
    %v5868 = vld [vmem:[#allocation11 + $0x48] sm:$0xf]
    %v5869 = vld [vmem:[#allocation11 + $0x4c] sm:$0xf]
    %v5870 = vld [vmem:[#allocation11 + $0x50] sm:$0xf]
    %v5871 = vld [vmem:[#allocation11 + $0x54] sm:$0xf]
    %v5872 = vld [vmem:[#allocation11 + $0x58] sm:$0xf]
    %v5873 = vld [vmem:[#allocation11 + $0x5c] sm:$0xf]
    %v5874 = vld [vmem:[#allocation11 + $0x60] sm:$0xf]
    %v5875 = vld [vmem:[#allocation11 + $0x64] sm:$0xf]
    %v5876 = vld [vmem:[#allocation11 + $0x68] sm:$0xf]
    %v5877 = vld [vmem:[#allocation11 + $0x6c] sm:$0xf]
    %v5878 = vld [vmem:[#allocation11 + $0x70] sm:$0xf]
    %v5879 = vld [vmem:[#allocation11 + $0x74] sm:$0xf]
    %v5880 = vld [vmem:[#allocation11 + $0x78] sm:$0xf]
    %v5881 = vld [vmem:[#allocation11 + $0x7c] sm:$0xf]
    %v5882 = vld [vmem:[#allocation11 + $0x80] sm:$0xf]
    %v5883 = vld [vmem:[#allocation11 + $0x84] sm:$0xf]
    %v5884 = vld [vmem:[#allocation11 + $0x88] sm:$0xf]
    %v5885 = vld [vmem:[#allocation11 + $0x8c] sm:$0xf]
    %v5886 = vld [vmem:[#allocation11 + $0x90] sm:$0xf]
    %v5887 = vld [vmem:[#allocation11 + $0x94] sm:$0xf]
    %v5888 = vld [vmem:[#allocation11 + $0x98] sm:$0xf]
    %v5889 = vld [vmem:[#allocation11 + $0x9c] sm:$0xf]
    %v5890 = vld [vmem:[#allocation11 + $0xa0] sm:$0xf]
    %v5891 = vld [vmem:[#allocation11 + $0xa4] sm:$0xf]
    %v5892 = vld [vmem:[#allocation11 + $0xa8] sm:$0xf]
    %v5893 = vld [vmem:[#allocation11 + $0xac] sm:$0xf]
    %v5894 = vld [vmem:[#allocation11 + $0xb0] sm:$0xf]
    %v5895 = vld [vmem:[#allocation11 + $0xb4] sm:$0xf]
    %v5896 = vld [vmem:[#allocation11 + $0xb8] sm:$0xf]
    %v5897 = vld [vmem:[#allocation11 + $0xbc] sm:$0xf]
    %v5898 = vld [vmem:[#allocation11 + $0xc0] sm:$0xf]
    %v5899 = vld [vmem:[#allocation11 + $0xc4] sm:$0xf]
    %v5900 = vld [vmem:[#allocation11 + $0xc8] sm:$0xf]
    %v5901 = vld [vmem:[#allocation11 + $0xcc] sm:$0xf]
    %v5902 = vld [vmem:[#allocation11 + $0xd0] sm:$0xf]
    %v5903 = vld [vmem:[#allocation11 + $0xd4] sm:$0xf]
    %v5904 = vld [vmem:[#allocation11 + $0xd8] sm:$0xf]
    %v5905 = vld [vmem:[#allocation11 + $0xdc] sm:$0xf]
    %v5906 = vld [vmem:[#allocation11 + $0xe0] sm:$0xf]
    %v5907 = vld [vmem:[#allocation11 + $0xe4] sm:$0xf]
    %v5908 = vld [vmem:[#allocation11 + $0xe8] sm:$0xf]
    %v5909 = vld [vmem:[#allocation11 + $0xec] sm:$0xf]
    %v5910 = vld [vmem:[#allocation11 + $0xf0] sm:$0xf]
    %v5911 = vld [vmem:[#allocation11 + $0xf4] sm:$0xf]
    %v5912 = vld [vmem:[#allocation11 + $0xf8] sm:$0xf]
    %v5913 = vld [vmem:[#allocation11 + $0xfc] sm:$0xf]
    %v5914 = vld [vmem:[#allocation11 + $0x100] sm:$0xf]
    %v5915 = vld [vmem:[#allocation11 + $0x104] sm:$0xf]
    %v5916 = vld [vmem:[#allocation11 + $0x108] sm:$0xf]
    %v5917 = vld [vmem:[#allocation11 + $0x10c] sm:$0xf]
    %v5918 = vld [vmem:[#allocation11 + $0x110] sm:$0xf]
    %v5919 = vld [vmem:[#allocation11 + $0x114] sm:$0xf]
    %v5920 = vld [vmem:[#allocation11 + $0x118] sm:$0xf]
    %v5921 = vld [vmem:[#allocation11 + $0x11c] sm:$0xf]
    %v5922 = vld [vmem:[#allocation11 + $0x120] sm:$0xf]
    %v5923 = vld [vmem:[#allocation11 + $0x124] sm:$0xf]
    %v5924 = vld [vmem:[#allocation11 + $0x128] sm:$0xf]
    %v5925 = vld [vmem:[#allocation11 + $0x12c] sm:$0xf]
    %v5926 = vld [vmem:[#allocation11 + $0x130] sm:$0xf]
    %v5927 = vld [vmem:[#allocation11 + $0x134] sm:$0xf]
    %v5928 = vld [vmem:[#allocation11 + $0x138] sm:$0xf]
    %v5929 = vld [vmem:[#allocation11 + $0x13c] sm:$0xf]
    %v5930 = vld [vmem:[#allocation13] sm:$0x1]
    %v5932 = vlaneseq
    %v5933 = vshrl.u32 %v5932, 7
    %v5934 = vsub.s32 0, %v5933
    %v5935 = vrot.slane %v5930, %v5934
    %v6017 = vunpack.c.l.b16 %v5850
    %v6018 = vunpack.c.l.b16 %v5851
    %v6019 = vunpack.c.l.b16 %v5852
    %v6020 = vunpack.c.l.b16 %v5853
    %v6021 = vunpack.c.l.b16 %v5854
    %v6022 = vunpack.c.l.b16 %v5855
    %v6023 = vunpack.c.l.b16 %v5856
    %v6024 = vunpack.c.l.b16 %v5857
    %v6025 = vunpack.c.l.b16 %v5858
    %v6026 = vunpack.c.l.b16 %v5859
    %v6027 = vunpack.c.l.b16 %v5860
    %v6028 = vunpack.c.l.b16 %v5861
    %v6029 = vunpack.c.l.b16 %v5862
    %v6030 = vunpack.c.l.b16 %v5863
    %v6031 = vunpack.c.l.b16 %v5864
    %v6032 = vunpack.c.l.b16 %v5865
    %v6033 = vunpack.c.l.b16 %v5866
    %v6034 = vunpack.c.l.b16 %v5867
    %v6035 = vunpack.c.l.b16 %v5868
    %v6036 = vunpack.c.l.b16 %v5869
    %v6037 = vunpack.c.l.b16 %v5870
    %v6038 = vunpack.c.l.b16 %v5871
    %v6039 = vunpack.c.l.b16 %v5872
    %v6040 = vunpack.c.l.b16 %v5873
    %v6041 = vunpack.c.l.b16 %v5874
    %v6042 = vunpack.c.l.b16 %v5875
    %v6043 = vunpack.c.l.b16 %v5876
    %v6044 = vunpack.c.l.b16 %v5877
    %v6045 = vunpack.c.l.b16 %v5878
    %v6046 = vunpack.c.l.b16 %v5879
    %v6047 = vunpack.c.l.b16 %v5880
    %v6048 = vunpack.c.l.b16 %v5881
    %v6049 = vunpack.c.l.b16 %v5882
    %v6050 = vunpack.c.l.b16 %v5883
    %v6051 = vunpack.c.l.b16 %v5884
    %v6052 = vunpack.c.l.b16 %v5885
    %v6053 = vunpack.c.l.b16 %v5886
    %v6054 = vunpack.c.l.b16 %v5887
    %v6055 = vunpack.c.l.b16 %v5888
    %v6056 = vunpack.c.l.b16 %v5889
    %v6057 = vunpack.c.l.b16 %v5890
    %v6058 = vunpack.c.l.b16 %v5891
    %v6059 = vunpack.c.l.b16 %v5892
    %v6060 = vunpack.c.l.b16 %v5893
    %v6061 = vunpack.c.l.b16 %v5894
    %v6062 = vunpack.c.l.b16 %v5895
    %v6063 = vunpack.c.l.b16 %v5896
    %v6064 = vunpack.c.l.b16 %v5897
    %v6065 = vunpack.c.l.b16 %v5898
    %v6066 = vunpack.c.l.b16 %v5899
    %v6067 = vunpack.c.l.b16 %v5900
    %v6068 = vunpack.c.l.b16 %v5901
    %v6069 = vunpack.c.l.b16 %v5902
    %v6070 = vunpack.c.l.b16 %v5903
    %v6071 = vunpack.c.l.b16 %v5904
    %v6072 = vunpack.c.l.b16 %v5905
    %v6073 = vunpack.c.l.b16 %v5906
    %v6074 = vunpack.c.l.b16 %v5907
    %v6075 = vunpack.c.l.b16 %v5908
    %v6076 = vunpack.c.l.b16 %v5909
    %v6077 = vunpack.c.l.b16 %v5910
    %v6078 = vunpack.c.l.b16 %v5911
    %v6079 = vunpack.c.l.b16 %v5912
    %v6080 = vunpack.c.l.b16 %v5913
    %v6081 = vunpack.c.l.b16 %v5914
    %v6082 = vunpack.c.l.b16 %v5915
    %v6083 = vunpack.c.l.b16 %v5916
    %v6084 = vunpack.c.l.b16 %v5917
    %v6085 = vunpack.c.l.b16 %v5918
    %v6086 = vunpack.c.l.b16 %v5919
    %v6087 = vunpack.c.l.b16 %v5920
    %v6088 = vunpack.c.l.b16 %v5921
    %v6089 = vunpack.c.l.b16 %v5922
    %v6090 = vunpack.c.l.b16 %v5923
    %v6091 = vunpack.c.l.b16 %v5924
    %v6092 = vunpack.c.l.b16 %v5925
    %v6093 = vunpack.c.l.b16 %v5926
    %v6094 = vunpack.c.l.b16 %v5927
    %v6095 = vunpack.c.l.b16 %v5928
    %v6096 = vunpack.c.l.b16 %v5929
    %v6097 = vpack.c.b16 %v6018, %v6017
    %v6098 = vpack.c.b16 %v6020, %v6019
    %v6099 = vpack.c.b16 %v6022, %v6021
    %v6100 = vpack.c.b16 %v6024, %v6023
    %v6101 = vpack.c.b16 %v6026, %v6025
    %v6102 = vpack.c.b16 %v6028, %v6027
    %v6103 = vpack.c.b16 %v6030, %v6029
    %v6104 = vpack.c.b16 %v6032, %v6031
    %v6105 = vpack.c.b16 %v6034, %v6033
    %v6106 = vpack.c.b16 %v6036, %v6035
    %v6107 = vpack.c.b16 %v6038, %v6037
    %v6108 = vpack.c.b16 %v6040, %v6039
    %v6109 = vpack.c.b16 %v6042, %v6041
    %v6110 = vpack.c.b16 %v6044, %v6043
    %v6111 = vpack.c.b16 %v6046, %v6045
    %v6112 = vpack.c.b16 %v6048, %v6047
    %v6113 = vpack.c.b16 %v6050, %v6049
    %v6114 = vpack.c.b16 %v6052, %v6051
    %v6115 = vpack.c.b16 %v6054, %v6053
    %v6116 = vpack.c.b16 %v6056, %v6055
    %v6117 = vpack.c.b16 %v6058, %v6057
    %v6118 = vpack.c.b16 %v6060, %v6059
    %v6119 = vpack.c.b16 %v6062, %v6061
    %v6120 = vpack.c.b16 %v6064, %v6063
    %v6121 = vpack.c.b16 %v6066, %v6065
    %v6122 = vpack.c.b16 %v6068, %v6067
    %v6123 = vpack.c.b16 %v6070, %v6069
    %v6124 = vpack.c.b16 %v6072, %v6071
    %v6125 = vpack.c.b16 %v6074, %v6073
    %v6126 = vpack.c.b16 %v6076, %v6075
    %v6127 = vpack.c.b16 %v6078, %v6077
    %v6128 = vpack.c.b16 %v6080, %v6079
    %v6129 = vpack.c.b16 %v6082, %v6081
    %v6130 = vpack.c.b16 %v6084, %v6083
    %v6131 = vpack.c.b16 %v6086, %v6085
    %v6132 = vpack.c.b16 %v6088, %v6087
    %v6133 = vpack.c.b16 %v6090, %v6089
    %v6134 = vpack.c.b16 %v6092, %v6091
    %v6135 = vpack.c.b16 %v6094, %v6093
    %v6136 = vpack.c.b16 %v6096, %v6095
    %6177 = vmatprep.subr.bf16.mxu0 0
    %6178 = vmatpush1.bf16.msra.mxu0 %v6104
    %6179 = vmatprep.subr.bf16.mxu0 0
    %6180 = vmatpush1.bf16.msra.mxu0 %v6103
    %6181 = vmatprep.subr.bf16.mxu0 0
    %6182 = vmatpush1.bf16.msra.mxu0 %v6102
    %6183 = vmatprep.subr.bf16.mxu0 0
    %6184 = vmatpush1.bf16.msra.mxu0 %v6101
    %6185 = vmatprep.subr.bf16.mxu0 0
    %6186 = vmatpush1.bf16.msra.mxu0 %v6100
    %6187 = vmatprep.subr.bf16.mxu0 0
    %6188 = vmatpush1.bf16.msra.mxu0 %v6099
    %6189 = vmatprep.subr.bf16.mxu0 0
    %6190 = vmatpush1.bf16.msra.mxu0 %v6098
    %6191 = vmatprep.subr.bf16.mxu0 0
    %6192 = vmatpush1.bf16.msra.mxu0 %v6097
    %6193 = vmatprep.subr.bf16.mxu0 0
    %6194 = vmatpush2.bf16.msra.mxu0 %v6112
    %6195 = vmatprep.subr.bf16.mxu0 0
    %6196 = vmatpush2.bf16.msra.mxu0 %v6111
    %6197 = vmatprep.subr.bf16.mxu0 0
    %6198 = vmatpush2.bf16.msra.mxu0 %v6110
    %6199 = vmatprep.subr.bf16.mxu0 0
    %6200 = vmatpush2.bf16.msra.mxu0 %v6109
    %6201 = vmatprep.subr.bf16.mxu0 0
    %6202 = vmatpush2.bf16.msra.mxu0 %v6108
    %6203 = vmatprep.subr.bf16.mxu0 0
    %6204 = vmatpush2.bf16.msra.mxu0 %v6107
    %6205 = vmatprep.subr.bf16.mxu0 0
    %6206 = vmatpush2.bf16.msra.mxu0 %v6106
    %6207 = vmatprep.subr.bf16.mxu0 0
    %6208 = vmatpush2.bf16.msra.mxu0 %v6105
    %6209 = vmatprep.mubr.bf16.mxu0 %v5846
    %6210 = vmatmul.mubr.bf16.gmra.mxu0 %v5845
    %v6211 = vpop.f32.mrf.mxu0
    %v6212 = vadd.f32 %v5935, %v6211
    %v6213 = vpop.f32.mrf.mxu0
    %v6214 = vpop.f32.mrf.mxu0
    %v6215 = vadd.f32 %v5935, %v6214
    %v6216 = vpop.f32.mrf.mxu0
    %6217 = vdwg.mxu0
    %6218 = vmatprep.subr.bf16.mxu0 0
    %6219 = vmatpush1.bf16.msra.mxu0 %v6120
    %6220 = vmatprep.subr.bf16.mxu0 0
    %6221 = vmatpush1.bf16.msra.mxu0 %v6119
    %6222 = vmatprep.subr.bf16.mxu0 0
    %6223 = vmatpush1.bf16.msra.mxu0 %v6118
    %6224 = vmatprep.subr.bf16.mxu0 0
    %6225 = vmatpush1.bf16.msra.mxu0 %v6117
    %6226 = vmatprep.subr.bf16.mxu0 0
    %6227 = vmatpush1.bf16.msra.mxu0 %v6116
    %6228 = vmatprep.subr.bf16.mxu0 0
    %6229 = vmatpush1.bf16.msra.mxu0 %v6115
    %6230 = vmatprep.subr.bf16.mxu0 0
    %6231 = vmatpush1.bf16.msra.mxu0 %v6114
    %6232 = vmatprep.subr.bf16.mxu0 0
    %6233 = vmatpush1.bf16.msra.mxu0 %v6113
    %6234 = vmatprep.subr.bf16.mxu0 0
    %6235 = vmatpush2.bf16.msra.mxu0 %v6128
    %6236 = vmatprep.subr.bf16.mxu0 0
    %6237 = vmatpush2.bf16.msra.mxu0 %v6127
    %6238 = vmatprep.subr.bf16.mxu0 0
    %6239 = vmatpush2.bf16.msra.mxu0 %v6126
    %6240 = vmatprep.subr.bf16.mxu0 0
    %6241 = vmatpush2.bf16.msra.mxu0 %v6125
    %6242 = vmatprep.subr.bf16.mxu0 0
    %6243 = vmatpush2.bf16.msra.mxu0 %v6124
    %6244 = vmatprep.subr.bf16.mxu0 0
    %6245 = vmatpush2.bf16.msra.mxu0 %v6123
    %6246 = vmatprep.subr.bf16.mxu0 0
    %6247 = vmatpush2.bf16.msra.mxu0 %v6122
    %6248 = vmatprep.subr.bf16.mxu0 0
    %6249 = vmatpush2.bf16.msra.mxu0 %v6121
    %6250 = vmatprep.mubr.bf16.mxu0 %v5848
    %6251 = vmatmul.mubr.bf16.gmra.mxu0 %v5847
    %v6252 = vpop.f32.mrf.mxu0
    %v6253 = vadd.f32 %v6212, %v6252
    %v6254 = vpop.f32.mrf.mxu0
    %v6255 = vpop.f32.mrf.mxu0
    %v6256 = vadd.f32 %v6215, %v6255
    %v6257 = vpop.f32.mrf.mxu0
    %6258 = vdwg.mxu0
    %6259 = vmatprep.subr.bf16.mxu0 0
    %6260 = vmatpush1.bf16.msra.mxu0 %v6136
    %6261 = vmatprep.subr.bf16.mxu0 0
    %6262 = vmatpush1.bf16.msra.mxu0 %v6135
    %6263 = vmatprep.subr.bf16.mxu0 0
    %6264 = vmatpush1.bf16.msra.mxu0 %v6134
    %6265 = vmatprep.subr.bf16.mxu0 0
    %6266 = vmatpush1.bf16.msra.mxu0 %v6133
    %6267 = vmatprep.subr.bf16.mxu0 0
    %6268 = vmatpush1.bf16.msra.mxu0 %v6132
    %6269 = vmatprep.subr.bf16.mxu0 0
    %6270 = vmatpush1.bf16.msra.mxu0 %v6131
    %6271 = vmatprep.subr.bf16.mxu0 0
    %6272 = vmatpush1.bf16.msra.mxu0 %v6130
    %6273 = vmatprep.subr.bf16.mxu0 0
    %6274 = vmatpush1.bf16.msra.mxu0 %v6129
    %6275 = vmatprep.subr.bf16.mxu0 0
    %6276 = vmatpush2.bf16.msra.mxu0 0
    %6277 = vmatprep.subr.bf16.mxu0 0
    %6278 = vmatpush2.bf16.msra.mxu0 0
    %6279 = vmatprep.subr.bf16.mxu0 0
    %6280 = vmatpush2.bf16.msra.mxu0 0
    %6281 = vmatprep.subr.bf16.mxu0 0
    %6282 = vmatpush2.bf16.msra.mxu0 0
    %6283 = vmatprep.subr.bf16.mxu0 0
    %6284 = vmatpush2.bf16.msra.mxu0 0
    %6285 = vmatprep.subr.bf16.mxu0 0
    %6286 = vmatpush2.bf16.msra.mxu0 0
    %6287 = vmatprep.subr.bf16.mxu0 0
    %6288 = vmatpush2.bf16.msra.mxu0 0
    %6289 = vmatprep.subr.bf16.mxu0 0
    %6290 = vmatpush2.bf16.msra.mxu0 0
    %6291 = vmatprep.mubr.bf16.mxu0 0
    %6292 = vmatmul.mubr.bf16.gmra.mxu0 %v5849
    %v6293 = vpop.f32.mrf.mxu0
    %v6294 = vadd.f32 %v6253, %v6293
    %v6295 = vpop.f32.mrf.mxu0
    %v6296 = vpop.f32.mrf.mxu0
    %v6297 = vadd.f32 %v6256, %v6296
    %v6298 = vpop.f32.mrf.mxu0
    %6299 = vdwg.mxu0
    %6300 = vst [vmem:[#allocation14] sm:$0xff] %v6294
    %6301 = vst [vmem:[#allocation14 + $0x8] sm:$0xff] %v6297
    // Predicated region
    $region58: #{run_heads.1} parent=1 // pred_check
      _
    $region59: #{run_heads.1} parent=1 // pred_check_branch
      %6303 = sbr.rel (0) target = $region61
    $region60: #{run_heads.1} parent=1 // pred_region
      %s6305 = ssub.s32 256, 256
      %6306 = vsyncadd [#allocation4], %s6305
      %s6307 = sshll.u32 [#allocation14], 4
      %s6308 = int_to_ptr.vmem [resolvable:$true] %s6307
      %6313 = dma.vmem_to_hbm [thread:$0]  %s6308, 256, %s7, [#allocation4], 128, 128, 8
    $region61: #{run_heads.1} parent=1 // pred_fallthru
      _
    // Predicated region
    $region62: #{run_heads.1} parent=1 // pred_check
      _
    $region63: #{run_heads.1} parent=1 // pred_check_branch
      %6315 = sbr.rel (0) target = $region65
    $region64: #{run_heads.1} parent=1 // pred_region
      %6316 = dma.done [#allocation4], 256
    $region65: #{run_heads.1} parent=1 // pred_fallthru
      _
    %6317 = vsyncpa [#allocation3], 1
    %6318 = vsyncpa [#allocation6], 1
    %6319 = vsyncpa [#allocation9], 1
    %6320 = vsyncpa [#allocation12], 1
    %6321 = vsyncpa [#allocation4], 1

</llo_original>
